<compile_context>
chip_gen: v7x
topology: tpu7x:2x2x1
jax: 0.10.0
libtpu: 0.0.40
codegen_flags: <defaults>
</compile_context>

<pallas_src>
import functools

import jax
import jax.numpy as jnp
from jax.experimental import pallas as pl
from jax.experimental.pallas import tpu as pltpu

K = 4            # Conv3d kernel size
PAD = 1          # Conv3d padding
NEG_SLOPE = 0.2  # LeakyReLU negative slope
BN_EPS = 1e-5    # PyTorch BatchNorm default eps


def _round_up(x, m):
    return (x + m - 1) // m * m


def _full_spec(shape):
    n = len(shape)
    return pl.BlockSpec(shape, lambda *_: (0,) * n)


def _num_tensorcores():
    """Best-effort TensorCores-per-device (v7x/v4/v5p: 2; v5e/v6e: 1)."""
    try:
        kind = jax.devices()[0].device_kind.lower()
    except Exception:
        return 1
    return 2 if any(t in kind for t in ("v4", "v5p", "7x", "v7")) else 1


# ---------------------------------------------------------------------------
# Kernel 1: fused conv3d (single im2col GEMM) + folded BatchNorm3d +
# LeakyReLU(0.2) + MaxPool3d.  x_ref holds P^3*TM rows ordered (tap, row);
# one bf16 GEMM produces (P^3*TM, Co), the P^3 window is max-reduced with
# aligned static slices, and only the pooled (TM, Co) tile is written (bf16).
# ---------------------------------------------------------------------------
def conv_bn_lrelu_pool_kernel(x_ref, w_ref, scale_ref, bias_ref, o_ref, *,
                              p3, monotone):
    y = jnp.dot(x_ref[...], w_ref[...], preferred_element_type=jnp.float32)
    tm = o_ref.shape[0]
    if not monotone:
        # General path: BN affine + LeakyReLU before pooling (torch order).
        y = y * scale_ref[...] + bias_ref[...]
        y = jnp.maximum(y, NEG_SLOPE * y)
    acc = y[:tm]
    for p in range(1, p3):                       # MaxPool3d window (VPU max)
        acc = jnp.maximum(acc, y[p * tm:(p + 1) * tm])
    if monotone:
        # scale >= 0 per channel (checked at param prep) => epilogue is
        # monotone, so pooling first is exact and 8x cheaper.
        acc = acc * scale_ref[...] + bias_ref[...]
        acc = jnp.maximum(acc, NEG_SLOPE * acc)  # LeakyReLU(0.2)
    o_ref[...] = acc.astype(o_ref.dtype)


# ---------------------------------------------------------------------------
# Kernel 2: last conv block fused with the MLP head.  Pooled rows are ordered
# (dhw, n); fc1's weight arrives pre-permuted as (DHW, Co, 128) so flatten is
# just contiguous (N, Co) ref slices of the VMEM-staged pooled tile.
# ---------------------------------------------------------------------------
def final_conv_mlp_kernel(x_ref, w_ref, scale_ref, bias_ref,
                          w1_ref, b1_ref, w2_ref, b2_ref, w3_ref, b3_ref,
                          o_ref, pool_ref, *, p3, n_batch, monotone):
    y = jnp.dot(x_ref[...], w_ref[...], preferred_element_type=jnp.float32)
    mp = y.shape[0] // p3
    if not monotone:
        y = y * scale_ref[...] + bias_ref[...]
        y = jnp.maximum(y, NEG_SLOPE * y)
    pooled = y[:mp]
    for p in range(1, p3):
        pooled = jnp.maximum(pooled, y[p * mp:(p + 1) * mp])
    if monotone:
        pooled = pooled * scale_ref[...] + bias_ref[...]
        pooled = jnp.maximum(pooled, NEG_SLOPE * pooled)

    # Stage pooled activations in VMEM scratch (rows = (dhw, n)); fc1 consumes
    # per-voxel (N, Co) chunks with plain static ref slices.
    pool_ref[...] = pooled
    dhw = w1_ref.shape[0]
    h = jnp.zeros((n_batch, b1_ref.shape[-1]), jnp.float32)
    for j in range(dhw):
        chunk = pool_ref[j * n_batch:(j + 1) * n_batch, :].astype(jnp.bfloat16)
        h = h + jnp.dot(chunk, w1_ref[j], preferred_element_type=jnp.float32)
    h = jnp.maximum(h + b1_ref[...], 0.0)                       # relu(fc1(x))
    h = jnp.dot(h.astype(jnp.bfloat16), w2_ref[...],
                preferred_element_type=jnp.float32) + b2_ref[...]
    h = jnp.maximum(h, 0.0)                                     # relu(fc2(x))
    # fc3 (64 -> 1): lane reduction instead of a degenerate N=1 matmul.
    o_ref[...] = jnp.sum(h * w3_ref[...], axis=-1, keepdims=True) + b3_ref[...]


# ---------------------------------------------------------------------------
# Wrappers (XLA glue: pad / im2col / regroup; all in bf16).
# ---------------------------------------------------------------------------
def _im2col_pool_major(x, pool, batch_minor):
    """Pool-window-major im2col. Returns (P^3, Mp, KC) slab; cols ordered
    (kd, kh, kw, ci); rows ordered (n, dp, hp, wp) or (dp, hp, wp, n)."""
    n, d, h, w, ci = x.shape
    do, ho, wo = d + 2 * PAD - K + 1, h + 2 * PAD - K + 1, w + 2 * PAD - K + 1
    p = pool
    dp, hp, wp = do // p, ho // p, wo // p          # MaxPool3d floor behavior
    kc = K ** 3 * ci
    xp = jnp.pad(x, ((0, 0), (PAD, PAD), (PAD, PAD), (PAD, PAD), (0, 0)))
    patches = [xp[:, kd:kd + do, kh:kh + ho, kw:kw + wo, :]
               for kd in range(K) for kh in range(K) for kw in range(K)]
    slab = jnp.stack(patches, axis=-2).reshape(n, do, ho, wo, kc)
    slab = slab[:, :dp * p, :hp * p, :wp * p, :]    # pool floor crop
    slab = slab.reshape(n, dp, p, hp, p, wp, p, kc)
    if batch_minor:   # rows (dp, hp, wp, n) -- used by the fused final block
        slab = jnp.transpose(slab, (2, 4, 6, 1, 3, 5, 0, 7))
    else:             # rows (n, dp, hp, wp)
        slab = jnp.transpose(slab, (2, 4, 6, 0, 1, 3, 5, 7))
    return slab.reshape(p ** 3, n * dp * hp * wp, kc), (n, dp, hp, wp)


def conv_block(x, w2d, scale, bias, pool, monotone):
    """Non-final LegNet2 block: Conv3d(k=4,s=1,p=1) + BN + LeakyReLU + MaxPool."""
    slab, (n, dp, hp, wp) = _im2col_pool_major(x, pool, batch_minor=False)
    p3, mp, kc = slab.shape
    co = w2d.shape[1]
    # Two "parallel" tiles when the chip has 2 TensorCores (v7x / megacore);
    # a single grid step otherwise (each extra step ~0.35us of overhead).
    if _num_tensorcores() >= 2 and mp > 128:
        tm = 128
    else:
        tm = min(_round_up(mp, 8), 512)
    mp_pad = _round_up(mp, tm)
    if mp_pad != mp:
        slab = jnp.pad(slab, ((0, 0), (0, mp_pad - mp), (0, 0)))
    t = mp_pad // tm
    # Regroup so each grid step reads one contiguous (P^3*TM, KC) 2-D block:
    # single GEMM per step, no in-kernel reshape.
    slab = slab.reshape(p3, t, tm, kc).transpose(1, 0, 2, 3).reshape(t * p3 * tm, kc)
    # TODO(synk): on v5e specifically, zero-padding KC 64->128 for the first
    # block would fill the 128-deep MXU; skipped (doubles im2col HBM bytes).
    out = pl.pallas_call(
        functools.partial(conv_bn_lrelu_pool_kernel, p3=p3, monotone=monotone),
        out_shape=jax.ShapeDtypeStruct((mp_pad, co), jnp.bfloat16),
        grid=(t,),
        in_specs=[
            pl.BlockSpec((p3 * tm, kc), lambda i: (i, 0)),
            pl.BlockSpec((kc, co), lambda i: (0, 0)),
            pl.BlockSpec((1, co), lambda i: (0, 0)),
            pl.BlockSpec((1, co), lambda i: (0, 0)),
        ],
        out_specs=pl.BlockSpec((tm, co), lambda i: (i, 0)),
        compiler_params=pltpu.CompilerParams(dimension_semantics=("parallel",)),
    )(slab, w2d, scale, bias)
    # Rows are (n, dp, hp, wp); drop pad rows, restore channels-last 5-D layout.
    return out[:mp].reshape(n, dp, hp, wp, co)


def final_block_with_mlp(x, w2d, scale, bias, pool, monotone, fc):
    """Last conv block + MaxPool fused with fc1/relu/fc2/relu/fc3."""
    w1_3d, b1, w2, b2, w3_row, b3 = fc
    slab, (n, dp, hp, wp) = _im2col_pool_major(x, pool, batch_minor=True)
    p3, mp, kc = slab.shape
    co = w2d.shape[1]
    slab = slab.reshape(p3 * mp, kc)          # rows already (tap, dhw, n)
    args = (slab, w2d, scale, bias, w1_3d, b1, w2, b2, w3_row, b3)
    return pl.pallas_call(
        functools.partial(final_conv_mlp_kernel, p3=p3, n_batch=n,
                          monotone=monotone),
        out_shape=jax.ShapeDtypeStruct((n, 1), jnp.float32),
        grid=(1,),
        in_specs=[_full_spec(a.shape) for a in args],
        out_specs=_full_spec((n, 1)),
        scratch_shapes=[pltpu.VMEM((mp, co), jnp.float32)],
    )(*args)


def legnet2_forward(x_ncdhw, params):
    # PyTorch layout is NCDHW; go channels-last once and do all im2col glue,
    # slabs and matmul operands in bf16 (f32 accumulation / epilogues).
    x = jnp.transpose(x_ncdhw, (0, 2, 3, 4, 1)).astype(jnp.bfloat16)
    convs = params["convs"]
    for (w2d, scale, bias, pool, monotone) in convs[:-1]:
        x = conv_block(x, w2d, scale, bias, pool, monotone)
    w2d, scale, bias, pool, monotone = convs[-1]
    return final_block_with_mlp(x, w2d, scale, bias, pool, monotone, params["fc"])


def make_params(key, in_channels=1, dim=12, layers=2, out_conv_channels=32,
                extra_pool=0):
    conv_channels = [in_channels] + [out_conv_channels // 2 ** k
                                     for k in range(layers - 1, -1, -1)]
    pools = [2] * (layers - 1) + [2 ** (extra_pool + 1)]   # MaxPool3d / final_pool
    convs = []
    for i in range(layers):
        ci, co = conv_channels[i], conv_channels[i + 1]
        key, kw, kg, kb, km, kv = jax.random.split(key, 6)
        w = 0.05 * jax.random.normal(kw, (co, ci, K, K, K), jnp.float32)
        gamma = 1.0 + 0.1 * jax.random.normal(kg, (co,), jnp.float32)
        beta = 0.1 * jax.random.normal(kb, (co,), jnp.float32)
        r_mean = 0.1 * jax.random.normal(km, (co,), jnp.float32)
        r_var = 1.0 + 0.1 * jax.random.uniform(kv, (co,), jnp.float32)
        # TODO(synk): BatchNorm3d is folded with running statistics (eval mode);
        # training-mode batch statistics are not reproduced.
        scale = gamma / jnp.sqrt(r_var + BN_EPS)
        bias = beta - r_mean * scale
        # Pool-before-epilogue is only exact when the folded scale is
        # non-negative per channel; gate it here (true for this init).
        monotone = bool(jnp.all(scale >= 0.0))
        # im2col weight matrix: rows ordered (kd, kh, kw, ci); bf16 for the MXU.
        w2d = jnp.transpose(w, (2, 3, 4, 1, 0)).reshape(K ** 3 * ci, co)
        convs.append((w2d.astype(jnp.bfloat16), scale.reshape(1, co),
                      bias.reshape(1, co), pools[i], monotone))

    # out_dim exactly as the module computes it.
    out_dim = dim
    for _ in range(layers):
        out_dim = (out_dim - 1) // 2
    out_dim = out_dim // 2 ** extra_pool
    dhw = out_dim ** 3
    feat = out_conv_channels * dhw

    def linear(k, fan_in, fan_out):
        kw_, kb_ = jax.random.split(k)
        w_ = 0.05 * jax.random.normal(kw_, (fan_in, fan_out), jnp.float32)
        b_ = 0.05 * jax.random.normal(kb_, (1, fan_out), jnp.float32)
        return w_, b_

    key, k1, k2, k3 = jax.random.split(key, 4)
    w1, b1 = linear(k1, feat, 128)   # rows in torch's (c, d, h, w) flatten order
    w2, b2 = linear(k2, 128, 64)
    w3, b3 = linear(k3, 64, 1)
    # Pre-permute fc1 from torch's (c, d, h, w) flatten order to (dhw, c, 128)
    # so the fused kernel needs no activation transpose or flatten.
    w1_3d = (w1.reshape(out_conv_channels, dhw, 128)
             .transpose(1, 0, 2).astype(jnp.bfloat16))
    fc = (w1_3d, b1, w2.astype(jnp.bfloat16), b2,
          w3.reshape(1, 64).astype(jnp.float32), b3)
    return {"convs": convs, "fc": fc}


if __name__ == "__main__":
    key = jax.random.PRNGKey(0)
    kx, kp = jax.random.split(key)
    N, CIN, DIM = 2, 1, 12
    params = make_params(kp, in_channels=CIN, dim=DIM, layers=2,
                         out_conv_channels=32, extra_pool=0)
    x = jax.random.normal(kx, (N, CIN, DIM, DIM, DIM), jnp.float32)  # NCDHW
    fwd = jax.jit(lambda v: legnet2_forward(v, params))
    out = jax.block_until_ready(fwd(x))
    assert out.shape == (N, 1) and out.dtype == jnp.float32
    print("KERNEL_OK")
</pallas_src>

<mosaic_0001>
module attributes {stable_mosaic.version = 11 : i64} {
  func.func @conv_bn_lrelu_pool_kernel(%arg0: i32, %arg1: memref<2048x64xbf16, #tpu.memory_space<vmem>>, %arg2: memref<64x16xbf16, #tpu.memory_space<vmem>>, %arg3: memref<1x16xf32, #tpu.memory_space<vmem>>, %arg4: memref<1x16xf32, #tpu.memory_space<vmem>>, %arg5: memref<256x16xbf16, #tpu.memory_space<vmem>>) attributes {dimension_semantics = [#tpu.dimension_semantics<parallel>], iteration_bounds = array<i64: 1>, scalar_prefetch = 0 : i64, scratch_operands = 0 : i64, tpu.core_type = #tpu.core_type<tc>, window_params = [{transform_indices = @transform_0, window_bounds = array<i64: 2048, 64>}, {pipeline_mode = #tpu.pipeline_mode<synchronous>, transform_indices = @transform_1, window_bounds = array<i64: 64, 16>}, {pipeline_mode = #tpu.pipeline_mode<synchronous>, transform_indices = @transform_2, window_bounds = array<i64: 1, 16>}, {pipeline_mode = #tpu.pipeline_mode<synchronous>, transform_indices = @transform_3, window_bounds = array<i64: 1, 16>}, {transform_indices = @transform_4, window_bounds = array<i64: 256, 16>}]} {
    %c0 = arith.constant 0 : index
    %c0_0 = arith.constant 0 : index
    %0 = vector.load %arg1[%c0, %c0_0] : memref<2048x64xbf16, #tpu.memory_space<vmem>>, vector<2048x64xbf16>
    %c0_1 = arith.constant 0 : index
    %c0_2 = arith.constant 0 : index
    %1 = vector.load %arg2[%c0_1, %c0_2] : memref<64x16xbf16, #tpu.memory_space<vmem>>, vector<64x16xbf16>
    %cst = arith.constant dense<0.000000e+00> : vector<2048x16xf32>
    %2 = tpu.matmul %0, %1, %cst {dimension_numbers = #tpu.dot_dimension_numbers<[1], [0], [0], [1], [0, 0, 1, 1], [], []>} : vector<2048x64xbf16>, vector<64x16xbf16>, vector<2048x16xf32> -> vector<2048x16xf32>
    %3 = vector.extract_strided_slice %2 {offsets = [0, 0], sizes = [256, 16], strides = [1, 1]} : vector<2048x16xf32> to vector<256x16xf32>
    %4 = vector.extract_strided_slice %2 {offsets = [256, 0], sizes = [256, 16], strides = [1, 1]} : vector<2048x16xf32> to vector<256x16xf32>
    %5 = arith.maximumf %3, %4 : vector<256x16xf32>
    %6 = vector.extract_strided_slice %2 {offsets = [512, 0], sizes = [256, 16], strides = [1, 1]} : vector<2048x16xf32> to vector<256x16xf32>
    %7 = arith.maximumf %5, %6 : vector<256x16xf32>
    %8 = vector.extract_strided_slice %2 {offsets = [768, 0], sizes = [256, 16], strides = [1, 1]} : vector<2048x16xf32> to vector<256x16xf32>
    %9 = arith.maximumf %7, %8 : vector<256x16xf32>
    %10 = vector.extract_strided_slice %2 {offsets = [1024, 0], sizes = [256, 16], strides = [1, 1]} : vector<2048x16xf32> to vector<256x16xf32>
    %11 = arith.maximumf %9, %10 : vector<256x16xf32>
    %12 = vector.extract_strided_slice %2 {offsets = [1280, 0], sizes = [256, 16], strides = [1, 1]} : vector<2048x16xf32> to vector<256x16xf32>
    %13 = arith.maximumf %11, %12 : vector<256x16xf32>
    %14 = vector.extract_strided_slice %2 {offsets = [1536, 0], sizes = [256, 16], strides = [1, 1]} : vector<2048x16xf32> to vector<256x16xf32>
    %15 = arith.maximumf %13, %14 : vector<256x16xf32>
    %16 = vector.extract_strided_slice %2 {offsets = [1792, 0], sizes = [256, 16], strides = [1, 1]} : vector<2048x16xf32> to vector<256x16xf32>
    %17 = arith.maximumf %15, %16 : vector<256x16xf32>
    %c0_3 = arith.constant 0 : index
    %c0_4 = arith.constant 0 : index
    %18 = vector.load %arg3[%c0_3, %c0_4] : memref<1x16xf32, #tpu.memory_space<vmem>>, vector<1x16xf32>
    %19 = vector.broadcast %18 : vector<1x16xf32> to vector<256x16xf32>
    %20 = arith.mulf %17, %19 : vector<256x16xf32>
    %c0_5 = arith.constant 0 : index
    %c0_6 = arith.constant 0 : index
    %21 = vector.load %arg4[%c0_5, %c0_6] : memref<1x16xf32, #tpu.memory_space<vmem>>, vector<1x16xf32>
    %22 = vector.broadcast %21 : vector<1x16xf32> to vector<256x16xf32>
    %23 = arith.addf %20, %22 : vector<256x16xf32>
    %cst_7 = arith.constant 2.000000e-01 : f32
    %24 = vector.broadcast %cst_7 : f32 to vector<256x16xf32>
    %25 = arith.mulf %24, %23 : vector<256x16xf32>
    %26 = arith.maximumf %23, %25 : vector<256x16xf32>
    %27 = arith.truncf %26 : vector<256x16xf32> to vector<256x16xbf16>
    %c0_8 = arith.constant 0 : index
    %c0_9 = arith.constant 0 : index
    %28 = vector.load %arg5[%c0_8, %c0_9] : memref<256x16xbf16, #tpu.memory_space<vmem>>, vector<256x16xbf16>
    tpu.vector_store %arg5[%c0_8, %c0_9], %27 {strides = array<i32>} : memref<256x16xbf16, #tpu.memory_space<vmem>>, vector<256x16xbf16>,
    return
  }
  func.func @transform_0(%arg0: i32) -> (i32, i32) {
    %c0_i32 = arith.constant 0 : i32
    %c0_i32_0 = arith.constant 0 : i32
    return %arg0, %c0_i32 : i32, i32
  }
  func.func @transform_1(%arg0: i32) -> (i32, i32) {
    %c0_i32 = arith.constant 0 : i32
    %c0_i32_0 = arith.constant 0 : i32
    %c0_i32_1 = arith.constant 0 : i32
    return %c0_i32, %c0_i32_0 : i32, i32
  }
  func.func @transform_2(%arg0: i32) -> (i32, i32) {
    %c0_i32 = arith.constant 0 : i32
    %c0_i32_0 = arith.constant 0 : i32
    %c0_i32_1 = arith.constant 0 : i32
    return %c0_i32, %c0_i32_0 : i32, i32
  }
  func.func @transform_3(%arg0: i32) -> (i32, i32) {
    %c0_i32 = arith.constant 0 : i32
    %c0_i32_0 = arith.constant 0 : i32
    %c0_i32_1 = arith.constant 0 : i32
    return %c0_i32, %c0_i32_0 : i32, i32
  }
  func.func @transform_4(%arg0: i32) -> (i32, i32) {
    %c0_i32 = arith.constant 0 : i32
    %c0_i32_0 = arith.constant 0 : i32
    return %arg0, %c0_i32 : i32, i32
  }
}

module attributes {stable_mosaic.version = 11 : i64} {
  func.func @final_conv_mlp_kernel(%arg0: i32, %arg1: memref<128x1024xbf16, #tpu.memory_space<vmem>>, %arg2: memref<1024x32xbf16, #tpu.memory_space<vmem>>, %arg3: memref<1x32xf32, #tpu.memory_space<vmem>>, %arg4: memref<1x32xf32, #tpu.memory_space<vmem>>, %arg5: memref<8x32x128xbf16, #tpu.memory_space<vmem>>, %arg6: memref<1x128xf32, #tpu.memory_space<vmem>>, %arg7: memref<128x64xbf16, #tpu.memory_space<vmem>>, %arg8: memref<1x64xf32, #tpu.memory_space<vmem>>, %arg9: memref<1x64xf32, #tpu.memory_space<vmem>>, %arg10: memref<1x1xf32, #tpu.memory_space<vmem>>, %arg11: memref<2x1xf32, #tpu.memory_space<vmem>>, %arg12: memref<16x32xf32, #tpu.memory_space<vmem>>) attributes {dimension_semantics = [#tpu.dimension_semantics<arbitrary>], iteration_bounds = array<i64: 1>, scalar_prefetch = 0 : i64, scratch_operands = 1 : i64, tpu.core_type = #tpu.core_type<tc>, window_params = [{pipeline_mode = #tpu.pipeline_mode<synchronous>, transform_indices = @transform_0, window_bounds = array<i64: 128, 1024>}, {pipeline_mode = #tpu.pipeline_mode<synchronous>, transform_indices = @transform_1, window_bounds = array<i64: 1024, 32>}, {pipeline_mode = #tpu.pipeline_mode<synchronous>, transform_indices = @transform_2, window_bounds = array<i64: 1, 32>}, {pipeline_mode = #tpu.pipeline_mode<synchronous>, transform_indices = @transform_3, window_bounds = array<i64: 1, 32>}, {pipeline_mode = #tpu.pipeline_mode<synchronous>, transform_indices = @transform_4, window_bounds = array<i64: 8, 32, 128>}, {pipeline_mode = #tpu.pipeline_mode<synchronous>, transform_indices = @transform_5, window_bounds = array<i64: 1, 128>}, {pipeline_mode = #tpu.pipeline_mode<synchronous>, transform_indices = @transform_6, window_bounds = array<i64: 128, 64>}, {pipeline_mode = #tpu.pipeline_mode<synchronous>, transform_indices = @transform_7, window_bounds = array<i64: 1, 64>}, {pipeline_mode = #tpu.pipeline_mode<synchronous>, transform_indices = @transform_8, window_bounds = array<i64: 1, 64>}, {pipeline_mode = #tpu.pipeline_mode<synchronous>, transform_indices = @transform_9, window_bounds = array<i64: 1, 1>}, {pipeline_mode = #tpu.pipeline_mode<synchronous>, transform_indices = @transform_10, window_bounds = array<i64: 2, 1>}]} {
    %c0 = arith.constant 0 : index
    %c0_0 = arith.constant 0 : index
    %0 = vector.load %arg1[%c0, %c0_0] : memref<128x1024xbf16, #tpu.memory_space<vmem>>, vector<128x1024xbf16>
    %c0_1 = arith.constant 0 : index
    %c0_2 = arith.constant 0 : index
    %1 = vector.load %arg2[%c0_1, %c0_2] : memref<1024x32xbf16, #tpu.memory_space<vmem>>, vector<1024x32xbf16>
    %cst = arith.constant dense<0.000000e+00> : vector<128x32xf32>
    %2 = tpu.matmul %0, %1, %cst {dimension_numbers = #tpu.dot_dimension_numbers<[1], [0], [0], [1], [0, 0, 1, 1], [], []>} : vector<128x1024xbf16>, vector<1024x32xbf16>, vector<128x32xf32> -> vector<128x32xf32>
    %3 = vector.extract_strided_slice %2 {offsets = [0, 0], sizes = [16, 32], strides = [1, 1]} : vector<128x32xf32> to vector<16x32xf32>
    %4 = vector.extract_strided_slice %2 {offsets = [16, 0], sizes = [16, 32], strides = [1, 1]} : vector<128x32xf32> to vector<16x32xf32>
    %5 = arith.maximumf %3, %4 : vector<16x32xf32>
    %6 = vector.extract_strided_slice %2 {offsets = [32, 0], sizes = [16, 32], strides = [1, 1]} : vector<128x32xf32> to vector<16x32xf32>
    %7 = arith.maximumf %5, %6 : vector<16x32xf32>
    %8 = vector.extract_strided_slice %2 {offsets = [48, 0], sizes = [16, 32], strides = [1, 1]} : vector<128x32xf32> to vector<16x32xf32>
    %9 = arith.maximumf %7, %8 : vector<16x32xf32>
    %10 = vector.extract_strided_slice %2 {offsets = [64, 0], sizes = [16, 32], strides = [1, 1]} : vector<128x32xf32> to vector<16x32xf32>
    %11 = arith.maximumf %9, %10 : vector<16x32xf32>
    %12 = vector.extract_strided_slice %2 {offsets = [80, 0], sizes = [16, 32], strides = [1, 1]} : vector<128x32xf32> to vector<16x32xf32>
    %13 = arith.maximumf %11, %12 : vector<16x32xf32>
    %14 = vector.extract_strided_slice %2 {offsets = [96, 0], sizes = [16, 32], strides = [1, 1]} : vector<128x32xf32> to vector<16x32xf32>
    %15 = arith.maximumf %13, %14 : vector<16x32xf32>
    %16 = vector.extract_strided_slice %2 {offsets = [112, 0], sizes = [16, 32], strides = [1, 1]} : vector<128x32xf32> to vector<16x32xf32>
    %17 = arith.maximumf %15, %16 : vector<16x32xf32>
    %c0_3 = arith.constant 0 : index
    %c0_4 = arith.constant 0 : index
    %18 = vector.load %arg3[%c0_3, %c0_4] : memref<1x32xf32, #tpu.memory_space<vmem>>, vector<1x32xf32>
    %19 = vector.broadcast %18 : vector<1x32xf32> to vector<16x32xf32>
    %20 = arith.mulf %17, %19 : vector<16x32xf32>
    %c0_5 = arith.constant 0 : index
    %c0_6 = arith.constant 0 : index
    %21 = vector.load %arg4[%c0_5, %c0_6] : memref<1x32xf32, #tpu.memory_space<vmem>>, vector<1x32xf32>
    %22 = vector.broadcast %21 : vector<1x32xf32> to vector<16x32xf32>
    %23 = arith.addf %20, %22 : vector<16x32xf32>
    %cst_7 = arith.constant 2.000000e-01 : f32
    %24 = vector.broadcast %cst_7 : f32 to vector<16x32xf32>
    %25 = arith.mulf %24, %23 : vector<16x32xf32>
    %26 = arith.maximumf %23, %25 : vector<16x32xf32>
    %c0_8 = arith.constant 0 : index
    %c0_9 = arith.constant 0 : index
    %27 = vector.load %arg12[%c0_8, %c0_9] : memref<16x32xf32, #tpu.memory_space<vmem>>, vector<16x32xf32>
    tpu.vector_store %arg12[%c0_8, %c0_9], %26 {strides = array<i32>} : memref<16x32xf32, #tpu.memory_space<vmem>>, vector<16x32xf32>,
    %cst_10 = arith.constant 0.000000e+00 : f32
    %28 = vector.broadcast %cst_10 : f32 to vector<2x128xf32>
    %c0_11 = arith.constant 0 : index
    %c0_12 = arith.constant 0 : index
    %29 = vector.load %arg12[%c0_11, %c0_12] : memref<16x32xf32, #tpu.memory_space<vmem>>, vector<2x32xf32>
    %30 = arith.truncf %29 : vector<2x32xf32> to vector<2x32xbf16>
    %c0_13 = arith.constant 0 : index
    %c0_14 = arith.constant 0 : index
    %c0_15 = arith.constant 0 : index
    %31 = vector.load %arg5[%c0_13, %c0_14, %c0_15] : memref<8x32x128xbf16, #tpu.memory_space<vmem>>, vector<1x32x128xbf16>
    %32 = vector.shape_cast %31 : vector<1x32x128xbf16> to vector<32x128xbf16>
    %cst_16 = arith.constant dense<0.000000e+00> : vector<2x128xf32>
    %33 = tpu.matmul %30, %32, %cst_16 {dimension_numbers = #tpu.dot_dimension_numbers<[1], [0], [0], [1], [0, 0, 1, 1], [], []>} : vector<2x32xbf16>, vector<32x128xbf16>, vector<2x128xf32> -> vector<2x128xf32>
    %34 = arith.addf %28, %33 : vector<2x128xf32>
    %c2 = arith.constant 2 : index
    %c0_17 = arith.constant 0 : index
    %35 = vector.load %arg12[%c2, %c0_17] : memref<16x32xf32, #tpu.memory_space<vmem>>, vector<2x32xf32>
    %36 = arith.truncf %35 : vector<2x32xf32> to vector<2x32xbf16>
    %c1 = arith.constant 1 : index
    %c0_18 = arith.constant 0 : index
    %c0_19 = arith.constant 0 : index
    %37 = vector.load %arg5[%c1, %c0_18, %c0_19] : memref<8x32x128xbf16, #tpu.memory_space<vmem>>, vector<1x32x128xbf16>
    %38 = vector.shape_cast %37 : vector<1x32x128xbf16> to vector<32x128xbf16>
    %cst_20 = arith.constant dense<0.000000e+00> : vector<2x128xf32>
    %39 = tpu.matmul %36, %38, %cst_20 {dimension_numbers = #tpu.dot_dimension_numbers<[1], [0], [0], [1], [0, 0, 1, 1], [], []>} : vector<2x32xbf16>, vector<32x128xbf16>, vector<2x128xf32> -> vector<2x128xf32>
    %40 = arith.addf %34, %39 : vector<2x128xf32>
    %c4 = arith.constant 4 : index
    %c0_21 = arith.constant 0 : index
    %41 = vector.load %arg12[%c4, %c0_21] : memref<16x32xf32, #tpu.memory_space<vmem>>, vector<2x32xf32>
    %42 = arith.truncf %41 : vector<2x32xf32> to vector<2x32xbf16>
    %c2_22 = arith.constant 2 : index
    %c0_23 = arith.constant 0 : index
    %c0_24 = arith.constant 0 : index
    %43 = vector.load %arg5[%c2_22, %c0_23, %c0_24] : memref<8x32x128xbf16, #tpu.memory_space<vmem>>, vector<1x32x128xbf16>
    %44 = vector.shape_cast %43 : vector<1x32x128xbf16> to vector<32x128xbf16>
    %cst_25 = arith.constant dense<0.000000e+00> : vector<2x128xf32>
    %45 = tpu.matmul %42, %44, %cst_25 {dimension_numbers = #tpu.dot_dimension_numbers<[1], [0], [0], [1], [0, 0, 1, 1], [], []>} : vector<2x32xbf16>, vector<32x128xbf16>, vector<2x128xf32> -> vector<2x128xf32>
    %46 = arith.addf %40, %45 : vector<2x128xf32>
    %c6 = arith.constant 6 : index
    %c0_26 = arith.constant 0 : index
    %47 = vector.load %arg12[%c6, %c0_26] : memref<16x32xf32, #tpu.memory_space<vmem>>, vector<2x32xf32>
    %48 = arith.truncf %47 : vector<2x32xf32> to vector<2x32xbf16>
    %c3 = arith.constant 3 : index
    %c0_27 = arith.constant 0 : index
    %c0_28 = arith.constant 0 : index
    %49 = vector.load %arg5[%c3, %c0_27, %c0_28] : memref<8x32x128xbf16, #tpu.memory_space<vmem>>, vector<1x32x128xbf16>
    %50 = vector.shape_cast %49 : vector<1x32x128xbf16> to vector<32x128xbf16>
    %cst_29 = arith.constant dense<0.000000e+00> : vector<2x128xf32>
    %51 = tpu.matmul %48, %50, %cst_29 {dimension_numbers = #tpu.dot_dimension_numbers<[1], [0], [0], [1], [0, 0, 1, 1], [], []>} : vector<2x32xbf16>, vector<32x128xbf16>, vector<2x128xf32> -> vector<2x128xf32>
    %52 = arith.addf %46, %51 : vector<2x128xf32>
    %c8 = arith.constant 8 : index
    %c0_30 = arith.constant 0 : index
    %53 = vector.load %arg12[%c8, %c0_30] : memref<16x32xf32, #tpu.memory_space<vmem>>, vector<2x32xf32>
    %54 = arith.truncf %53 : vector<2x32xf32> to vector<2x32xbf16>
    %c4_31 = arith.constant 4 : index
    %c0_32 = arith.constant 0 : index
    %c0_33 = arith.constant 0 : index
    %55 = vector.load %arg5[%c4_31, %c0_32, %c0_33] : memref<8x32x128xbf16, #tpu.memory_space<vmem>>, vector<1x32x128xbf16>
    %56 = vector.shape_cast %55 : vector<1x32x128xbf16> to vector<32x128xbf16>
    %cst_34 = arith.constant dense<0.000000e+00> : vector<2x128xf32>
    %57 = tpu.matmul %54, %56, %cst_34 {dimension_numbers = #tpu.dot_dimension_numbers<[1], [0], [0], [1], [0, 0, 1, 1], [], []>} : vector<2x32xbf16>, vector<32x128xbf16>, vector<2x128xf32> -> vector<2x128xf32>
    %58 = arith.addf %52, %57 : vector<2x128xf32>
    %c10 = arith.constant 10 : index
    %c0_35 = arith.constant 0 : index
    %59 = vector.load %arg12[%c10, %c0_35] : memref<16x32xf32, #tpu.memory_space<vmem>>, vector<2x32xf32>
    %60 = arith.truncf %59 : vector<2x32xf32> to vector<2x32xbf16>
    %c5 = arith.constant 5 : index
    %c0_36 = arith.constant 0 : index
    %c0_37 = arith.constant 0 : index
    %61 = vector.load %arg5[%c5, %c0_36, %c0_37] : memref<8x32x128xbf16, #tpu.memory_space<vmem>>, vector<1x32x128xbf16>
    %62 = vector.shape_cast %61 : vector<1x32x128xbf16> to vector<32x128xbf16>
    %cst_38 = arith.constant dense<0.000000e+00> : vector<2x128xf32>
    %63 = tpu.matmul %60, %62, %cst_38 {dimension_numbers = #tpu.dot_dimension_numbers<[1], [0], [0], [1], [0, 0, 1, 1], [], []>} : vector<2x32xbf16>, vector<32x128xbf16>, vector<2x128xf32> -> vector<2x128xf32>
    %64 = arith.addf %58, %63 : vector<2x128xf32>
    %c12 = arith.constant 12 : index
    %c0_39 = arith.constant 0 : index
    %65 = vector.load %arg12[%c12, %c0_39] : memref<16x32xf32, #tpu.memory_space<vmem>>, vector<2x32xf32>
    %66 = arith.truncf %65 : vector<2x32xf32> to vector<2x32xbf16>
    %c6_40 = arith.constant 6 : index
    %c0_41 = arith.constant 0 : index
    %c0_42 = arith.constant 0 : index
    %67 = vector.load %arg5[%c6_40, %c0_41, %c0_42] : memref<8x32x128xbf16, #tpu.memory_space<vmem>>, vector<1x32x128xbf16>
    %68 = vector.shape_cast %67 : vector<1x32x128xbf16> to vector<32x128xbf16>
    %cst_43 = arith.constant dense<0.000000e+00> : vector<2x128xf32>
    %69 = tpu.matmul %66, %68, %cst_43 {dimension_numbers = #tpu.dot_dimension_numbers<[1], [0], [0], [1], [0, 0, 1, 1], [], []>} : vector<2x32xbf16>, vector<32x128xbf16>, vector<2x128xf32> -> vector<2x128xf32>
    %70 = arith.addf %64, %69 : vector<2x128xf32>
    %c14 = arith.constant 14 : index
    %c0_44 = arith.constant 0 : index
    %71 = vector.load %arg12[%c14, %c0_44] : memref<16x32xf32, #tpu.memory_space<vmem>>, vector<2x32xf32>
    %72 = arith.truncf %71 : vector<2x32xf32> to vector<2x32xbf16>
    %c7 = arith.constant 7 : index
    %c0_45 = arith.constant 0 : index
    %c0_46 = arith.constant 0 : index
    %73 = vector.load %arg5[%c7, %c0_45, %c0_46] : memref<8x32x128xbf16, #tpu.memory_space<vmem>>, vector<1x32x128xbf16>
    %74 = vector.shape_cast %73 : vector<1x32x128xbf16> to vector<32x128xbf16>
    %cst_47 = arith.constant dense<0.000000e+00> : vector<2x128xf32>
    %75 = tpu.matmul %72, %74, %cst_47 {dimension_numbers = #tpu.dot_dimension_numbers<[1], [0], [0], [1], [0, 0, 1, 1], [], []>} : vector<2x32xbf16>, vector<32x128xbf16>, vector<2x128xf32> -> vector<2x128xf32>
    %76 = arith.addf %70, %75 : vector<2x128xf32>
    %c0_48 = arith.constant 0 : index
    %c0_49 = arith.constant 0 : index
    %77 = vector.load %arg6[%c0_48, %c0_49] : memref<1x128xf32, #tpu.memory_space<vmem>>, vector<1x128xf32>
    %78 = vector.broadcast %77 : vector<1x128xf32> to vector<2x128xf32>
    %79 = arith.addf %76, %78 : vector<2x128xf32>
    %cst_50 = arith.constant 0.000000e+00 : f32
    %80 = vector.broadcast %cst_50 : f32 to vector<2x128xf32>
    %81 = arith.maximumf %79, %80 : vector<2x128xf32>
    %82 = arith.truncf %81 : vector<2x128xf32> to vector<2x128xbf16>
    %c0_51 = arith.constant 0 : index
    %c0_52 = arith.constant 0 : index
    %83 = vector.load %arg7[%c0_51, %c0_52] : memref<128x64xbf16, #tpu.memory_space<vmem>>, vector<128x64xbf16>
    %cst_53 = arith.constant dense<0.000000e+00> : vector<2x64xf32>
    %84 = tpu.matmul %82, %83, %cst_53 {dimension_numbers = #tpu.dot_dimension_numbers<[1], [0], [0], [1], [0, 0, 1, 1], [], []>} : vector<2x128xbf16>, vector<128x64xbf16>, vector<2x64xf32> -> vector<2x64xf32>
    %c0_54 = arith.constant 0 : index
    %c0_55 = arith.constant 0 : index
    %85 = vector.load %arg8[%c0_54, %c0_55] : memref<1x64xf32, #tpu.memory_space<vmem>>, vector<1x64xf32>
    %86 = vector.broadcast %85 : vector<1x64xf32> to vector<2x64xf32>
    %87 = arith.addf %84, %86 : vector<2x64xf32>
    %cst_56 = arith.constant 0.000000e+00 : f32
    %88 = vector.broadcast %cst_56 : f32 to vector<2x64xf32>
    %89 = arith.maximumf %87, %88 : vector<2x64xf32>
    %c0_57 = arith.constant 0 : index
    %c0_58 = arith.constant 0 : index
    %90 = vector.load %arg9[%c0_57, %c0_58] : memref<1x64xf32, #tpu.memory_space<vmem>>, vector<1x64xf32>
    %91 = vector.broadcast %90 : vector<1x64xf32> to vector<2x64xf32>
    %92 = arith.mulf %89, %91 : vector<2x64xf32>
    %cst_59 = arith.constant dense<0.000000e+00> : vector<2xf32>
    %93 = vector.multi_reduction <add>, %92, %cst_59 [1] : vector<2x64xf32> to vector<2xf32>
    %94 = vector.shape_cast %93 : vector<2xf32> to vector<2x1xf32>
    %c0_60 = arith.constant 0 : index
    %c0_61 = arith.constant 0 : index
    %95 = vector.load %arg10[%c0_60, %c0_61] : memref<1x1xf32, #tpu.memory_space<vmem>>, vector<1x1xf32>
    %96 = vector.broadcast %95 : vector<1x1xf32> to vector<2x1xf32>
    %97 = arith.addf %94, %96 : vector<2x1xf32>
    %c0_62 = arith.constant 0 : index
    %c0_63 = arith.constant 0 : index
    %98 = vector.load %arg11[%c0_62, %c0_63] : memref<2x1xf32, #tpu.memory_space<vmem>>, vector<2x1xf32>
    tpu.vector_store %arg11[%c0_62, %c0_63], %97 {strides = array<i32>} : memref<2x1xf32, #tpu.memory_space<vmem>>, vector<2x1xf32>,
    return
  }
  func.func @transform_0(%arg0: i32) -> (i32, i32) {
    %c0_i32 = arith.constant 0 : i32
    %c0_i32_0 = arith.constant 0 : i32
    %c0_i32_1 = arith.constant 0 : i32
    return %c0_i32, %c0_i32_0 : i32, i32
  }
  func.func @transform_1(%arg0: i32) -> (i32, i32) {
    %c0_i32 = arith.constant 0 : i32
    %c0_i32_0 = arith.constant 0 : i32
    %c0_i32_1 = arith.constant 0 : i32
    return %c0_i32, %c0_i32_0 : i32, i32
  }
  func.func @transform_2(%arg0: i32) -> (i32, i32) {
    %c0_i32 = arith.constant 0 : i32
    %c0_i32_0 = arith.constant 0 : i32
    %c0_i32_1 = arith.constant 0 : i32
    return %c0_i32, %c0_i32_0 : i32, i32
  }
  func.func @transform_3(%arg0: i32) -> (i32, i32) {
    %c0_i32 = arith.constant 0 : i32
    %c0_i32_0 = arith.constant 0 : i32
    %c0_i32_1 = arith.constant 0 : i32
    return %c0_i32, %c0_i32_0 : i32, i32
  }
  func.func @transform_4(%arg0: i32) -> (i32, i32, i32) {
    %c0_i32 = arith.constant 0 : i32
    %c0_i32_0 = arith.constant 0 : i32
    %c0_i32_1 = arith.constant 0 : i32
    %c0_i32_2 = arith.constant 0 : i32
    return %c0_i32, %c0_i32_0, %c0_i32_1 : i32, i32, i32
  }
  func.func @transform_5(%arg0: i32) -> (i32, i32) {
    %c0_i32 = arith.constant 0 : i32
    %c0_i32_0 = arith.constant 0 : i32
    %c0_i32_1 = arith.constant 0 : i32
    return %c0_i32, %c0_i32_0 : i32, i32
  }
  func.func @transform_6(%arg0: i32) -> (i32, i32) {
    %c0_i32 = arith.constant 0 : i32
    %c0_i32_0 = arith.constant 0 : i32
    %c0_i32_1 = arith.constant 0 : i32
    return %c0_i32, %c0_i32_0 : i32, i32
  }
  func.func @transform_7(%arg0: i32) -> (i32, i32) {
    %c0_i32 = arith.constant 0 : i32
    %c0_i32_0 = arith.constant 0 : i32
    %c0_i32_1 = arith.constant 0 : i32
    return %c0_i32, %c0_i32_0 : i32, i32
  }
  func.func @transform_8(%arg0: i32) -> (i32, i32) {
    %c0_i32 = arith.constant 0 : i32
    %c0_i32_0 = arith.constant 0 : i32
    %c0_i32_1 = arith.constant 0 : i32
    return %c0_i32, %c0_i32_0 : i32, i32
  }
  func.func @transform_9(%arg0: i32) -> (i32, i32) {
    %c0_i32 = arith.constant 0 : i32
    %c0_i32_0 = arith.constant 0 : i32
    %c0_i32_1 = arith.constant 0 : i32
    return %c0_i32, %c0_i32_0 : i32, i32
  }
  func.func @transform_10(%arg0: i32) -> (i32, i32) {
    %c0_i32 = arith.constant 0 : i32
    %c0_i32_0 = arith.constant 0 : i32
    %c0_i32_1 = arith.constant 0 : i32
    return %c0_i32, %c0_i32_0 : i32, i32
  }
}

</mosaic_0001>

<llo_original>
// kernel: _lambda_.2
$region0: #{_lambda_.2}
  #allocation0 [shape = 'u32[]', space=smem, size = 0x4, offset = 0x4, fixed_abs, tag = 'smem constant byte address 0x4 - core index']
  #allocation1 [shape = 'u32[144,128]{1,0:T(1,128)}', space=vmem, size = 0x12000, scoped, tag = 'internal scratch']
  %s0 = inlined_call_operand.vmem [shape: bf16[2048,64], index: 0, kind: input, shape index: {}]
  %s1 = inlined_call_operand.vmem [shape: bf16[64,16], index: 1, kind: input, shape index: {}]
  %s2 = inlined_call_operand.vmem [shape: f32[1,16], index: 2, kind: input, shape index: {}]
  %s3 = inlined_call_operand.vmem [shape: f32[1,16], index: 3, kind: input, shape index: {}]
  %s4 = inlined_call_operand.vmem [shape: bf16[256,16], index: 4, kind: output, shape index: {}]
  %s5 = sld [smem:[#allocation0]]
  $region26: #{_lambda_.2} parent=0
    _
  %s7 = ssub.s32 1, %s5
  %s8 = scalar_select 0, %s7, %s5
  // Predicated region
  $region2: #{_lambda_.2} parent=0 // pred_check
    _
  $region3: #{_lambda_.2} parent=0 // pred_check_branch
    %10 = sbr.rel (0) target = $region5
  $region4: #{_lambda_.2} parent=0 // pred_region
    _
  $region5: #{_lambda_.2} parent=0 // pred_fallthru
    _
  // Predicated region
  $region6: #{_lambda_.2} parent=0 // pred_check
    _
  $region7: #{_lambda_.2} parent=0 // pred_check_branch
    %12 = sbr.rel (0) target = $region9
  $region8: #{_lambda_.2} parent=0 // pred_region
    _
  $region9: #{_lambda_.2} parent=0 // pred_fallthru
    _
  // Predicated region
  $region10: #{_lambda_.2} parent=0 // pred_check
    _
  $region11: #{_lambda_.2} parent=0 // pred_check_branch
    %14 = sbr.rel (0) target = $region13
  $region12: #{_lambda_.2} parent=0 // pred_region
    _
  $region13: #{_lambda_.2} parent=0 // pred_fallthru
    _
  // Predicated region
  $region14: #{_lambda_.2} parent=0 // pred_check
    _
  $region15: #{_lambda_.2} parent=0 // pred_check_branch
    %16 = sbr.rel (0) target = $region17
  $region16: #{_lambda_.2} parent=0 // pred_region
    _
  $region17: #{_lambda_.2} parent=0 // pred_fallthru
    _
  %v18 = vld [vmem:[%s0] sm:$0xf]
  %v19 = vld [vmem:[%s0 + $0x4] sm:$0xf]
  %v20 = vld [vmem:[%s0 + $0x8] sm:$0xf]
  %v21 = vld [vmem:[%s0 + $0xc] sm:$0xf]
  %v22 = vld [vmem:[%s0 + $0x10] sm:$0xf]
  %v23 = vld [vmem:[%s0 + $0x14] sm:$0xf]
  %v24 = vld [vmem:[%s0 + $0x18] sm:$0xf]
  %v25 = vld [vmem:[%s0 + $0x1c] sm:$0xf]
  %v26 = vld [vmem:[%s0 + $0x20] sm:$0xf]
  %v27 = vld [vmem:[%s0 + $0x24] sm:$0xf]
  %v28 = vld [vmem:[%s0 + $0x28] sm:$0xf]
  %v29 = vld [vmem:[%s0 + $0x2c] sm:$0xf]
  %v30 = vld [vmem:[%s0 + $0x30] sm:$0xf]
  %v31 = vld [vmem:[%s0 + $0x34] sm:$0xf]
  %v32 = vld [vmem:[%s0 + $0x38] sm:$0xf]
  %v33 = vld [vmem:[%s0 + $0x3c] sm:$0xf]
  %v34 = vld [vmem:[%s0 + $0x40] sm:$0xf]
  %v35 = vld [vmem:[%s0 + $0x44] sm:$0xf]
  %v36 = vld [vmem:[%s0 + $0x48] sm:$0xf]
  %v37 = vld [vmem:[%s0 + $0x4c] sm:$0xf]
  %v38 = vld [vmem:[%s0 + $0x50] sm:$0xf]
  %v39 = vld [vmem:[%s0 + $0x54] sm:$0xf]
  %v40 = vld [vmem:[%s0 + $0x58] sm:$0xf]
  %v41 = vld [vmem:[%s0 + $0x5c] sm:$0xf]
  %v42 = vld [vmem:[%s0 + $0x60] sm:$0xf]
  %v43 = vld [vmem:[%s0 + $0x64] sm:$0xf]
  %v44 = vld [vmem:[%s0 + $0x68] sm:$0xf]
  %v45 = vld [vmem:[%s0 + $0x6c] sm:$0xf]
  %v46 = vld [vmem:[%s0 + $0x70] sm:$0xf]
  %v47 = vld [vmem:[%s0 + $0x74] sm:$0xf]
  %v48 = vld [vmem:[%s0 + $0x78] sm:$0xf]
  %v49 = vld [vmem:[%s0 + $0x7c] sm:$0xf]
  %v50 = vld [vmem:[%s0 + $0x80] sm:$0xf]
  %v51 = vld [vmem:[%s0 + $0x84] sm:$0xf]
  %v52 = vld [vmem:[%s0 + $0x88] sm:$0xf]
  %v53 = vld [vmem:[%s0 + $0x8c] sm:$0xf]
  %v54 = vld [vmem:[%s0 + $0x90] sm:$0xf]
  %v55 = vld [vmem:[%s0 + $0x94] sm:$0xf]
  %v56 = vld [vmem:[%s0 + $0x98] sm:$0xf]
  %v57 = vld [vmem:[%s0 + $0x9c] sm:$0xf]
  %v58 = vld [vmem:[%s0 + $0xa0] sm:$0xf]
  %v59 = vld [vmem:[%s0 + $0xa4] sm:$0xf]
  %v60 = vld [vmem:[%s0 + $0xa8] sm:$0xf]
  %v61 = vld [vmem:[%s0 + $0xac] sm:$0xf]
  %v62 = vld [vmem:[%s0 + $0xb0] sm:$0xf]
  %v63 = vld [vmem:[%s0 + $0xb4] sm:$0xf]
  %v64 = vld [vmem:[%s0 + $0xb8] sm:$0xf]
  %v65 = vld [vmem:[%s0 + $0xbc] sm:$0xf]
  %v66 = vld [vmem:[%s0 + $0xc0] sm:$0xf]
  %v67 = vld [vmem:[%s0 + $0xc4] sm:$0xf]
  %v68 = vld [vmem:[%s0 + $0xc8] sm:$0xf]
  %v69 = vld [vmem:[%s0 + $0xcc] sm:$0xf]
  %v70 = vld [vmem:[%s0 + $0xd0] sm:$0xf]
  %v71 = vld [vmem:[%s0 + $0xd4] sm:$0xf]
  %v72 = vld [vmem:[%s0 + $0xd8] sm:$0xf]
  %v73 = vld [vmem:[%s0 + $0xdc] sm:$0xf]
  %v74 = vld [vmem:[%s0 + $0xe0] sm:$0xf]
  %v75 = vld [vmem:[%s0 + $0xe4] sm:$0xf]
  %v76 = vld [vmem:[%s0 + $0xe8] sm:$0xf]
  %v77 = vld [vmem:[%s0 + $0xec] sm:$0xf]
  %v78 = vld [vmem:[%s0 + $0xf0] sm:$0xf]
  %v79 = vld [vmem:[%s0 + $0xf4] sm:$0xf]
  %v80 = vld [vmem:[%s0 + $0xf8] sm:$0xf]
  %v81 = vld [vmem:[%s0 + $0xfc] sm:$0xf]
  %v82 = vld [vmem:[%s0 + $0x100] sm:$0xf]
  %v83 = vld [vmem:[%s0 + $0x104] sm:$0xf]
  %v84 = vld [vmem:[%s0 + $0x108] sm:$0xf]
  %v85 = vld [vmem:[%s0 + $0x10c] sm:$0xf]
  %v86 = vld [vmem:[%s0 + $0x110] sm:$0xf]
  %v87 = vld [vmem:[%s0 + $0x114] sm:$0xf]
  %v88 = vld [vmem:[%s0 + $0x118] sm:$0xf]
  %v89 = vld [vmem:[%s0 + $0x11c] sm:$0xf]
  %v90 = vld [vmem:[%s0 + $0x120] sm:$0xf]
  %v91 = vld [vmem:[%s0 + $0x124] sm:$0xf]
  %v92 = vld [vmem:[%s0 + $0x128] sm:$0xf]
  %v93 = vld [vmem:[%s0 + $0x12c] sm:$0xf]
  %v94 = vld [vmem:[%s0 + $0x130] sm:$0xf]
  %v95 = vld [vmem:[%s0 + $0x134] sm:$0xf]
  %v96 = vld [vmem:[%s0 + $0x138] sm:$0xf]
  %v97 = vld [vmem:[%s0 + $0x13c] sm:$0xf]
  %v98 = vld [vmem:[%s0 + $0x140] sm:$0xf]
  %v99 = vld [vmem:[%s0 + $0x144] sm:$0xf]
  %v100 = vld [vmem:[%s0 + $0x148] sm:$0xf]
  %v101 = vld [vmem:[%s0 + $0x14c] sm:$0xf]
  %v102 = vld [vmem:[%s0 + $0x150] sm:$0xf]
  %v103 = vld [vmem:[%s0 + $0x154] sm:$0xf]
  %v104 = vld [vmem:[%s0 + $0x158] sm:$0xf]
  %v105 = vld [vmem:[%s0 + $0x15c] sm:$0xf]
  %v106 = vld [vmem:[%s0 + $0x160] sm:$0xf]
  %v107 = vld [vmem:[%s0 + $0x164] sm:$0xf]
  %v108 = vld [vmem:[%s0 + $0x168] sm:$0xf]
  %v109 = vld [vmem:[%s0 + $0x16c] sm:$0xf]
  %v110 = vld [vmem:[%s0 + $0x170] sm:$0xf]
  %v111 = vld [vmem:[%s0 + $0x174] sm:$0xf]
  %v112 = vld [vmem:[%s0 + $0x178] sm:$0xf]
  %v113 = vld [vmem:[%s0 + $0x17c] sm:$0xf]
  %v114 = vld [vmem:[%s0 + $0x180] sm:$0xf]
  %v115 = vld [vmem:[%s0 + $0x184] sm:$0xf]
  %v116 = vld [vmem:[%s0 + $0x188] sm:$0xf]
  %v117 = vld [vmem:[%s0 + $0x18c] sm:$0xf]
  %v118 = vld [vmem:[%s0 + $0x190] sm:$0xf]
  %v119 = vld [vmem:[%s0 + $0x194] sm:$0xf]
  %v120 = vld [vmem:[%s0 + $0x198] sm:$0xf]
  %v121 = vld [vmem:[%s0 + $0x19c] sm:$0xf]
  %v122 = vld [vmem:[%s0 + $0x1a0] sm:$0xf]
  %v123 = vld [vmem:[%s0 + $0x1a4] sm:$0xf]
  %v124 = vld [vmem:[%s0 + $0x1a8] sm:$0xf]
  %v125 = vld [vmem:[%s0 + $0x1ac] sm:$0xf]
  %v126 = vld [vmem:[%s0 + $0x1b0] sm:$0xf]
  %v127 = vld [vmem:[%s0 + $0x1b4] sm:$0xf]
  %v128 = vld [vmem:[%s0 + $0x1b8] sm:$0xf]
  %v129 = vld [vmem:[%s0 + $0x1bc] sm:$0xf]
  %v130 = vld [vmem:[%s0 + $0x1c0] sm:$0xf]
  %v131 = vld [vmem:[%s0 + $0x1c4] sm:$0xf]
  %v132 = vld [vmem:[%s0 + $0x1c8] sm:$0xf]
  %v133 = vld [vmem:[%s0 + $0x1cc] sm:$0xf]
  %v134 = vld [vmem:[%s0 + $0x1d0] sm:$0xf]
  %v135 = vld [vmem:[%s0 + $0x1d4] sm:$0xf]
  %v136 = vld [vmem:[%s0 + $0x1d8] sm:$0xf]
  %v137 = vld [vmem:[%s0 + $0x1dc] sm:$0xf]
  %v138 = vld [vmem:[%s0 + $0x1e0] sm:$0xf]
  %v139 = vld [vmem:[%s0 + $0x1e4] sm:$0xf]
  %v140 = vld [vmem:[%s0 + $0x1e8] sm:$0xf]
  %v141 = vld [vmem:[%s0 + $0x1ec] sm:$0xf]
  %v142 = vld [vmem:[%s0 + $0x1f0] sm:$0xf]
  %v143 = vld [vmem:[%s0 + $0x1f4] sm:$0xf]
  %v144 = vld [vmem:[%s0 + $0x1f8] sm:$0xf]
  %v145 = vld [vmem:[%s0 + $0x1fc] sm:$0xf]
  %v146 = vld [vmem:[%s0 + $0x200] sm:$0xf]
  %v147 = vld [vmem:[%s0 + $0x204] sm:$0xf]
  %v148 = vld [vmem:[%s0 + $0x208] sm:$0xf]
  %v149 = vld [vmem:[%s0 + $0x20c] sm:$0xf]
  %v150 = vld [vmem:[%s0 + $0x210] sm:$0xf]
  %v151 = vld [vmem:[%s0 + $0x214] sm:$0xf]
  %v152 = vld [vmem:[%s0 + $0x218] sm:$0xf]
  %v153 = vld [vmem:[%s0 + $0x21c] sm:$0xf]
  %v154 = vld [vmem:[%s0 + $0x220] sm:$0xf]
  %v155 = vld [vmem:[%s0 + $0x224] sm:$0xf]
  %v156 = vld [vmem:[%s0 + $0x228] sm:$0xf]
  %v157 = vld [vmem:[%s0 + $0x22c] sm:$0xf]
  %v158 = vld [vmem:[%s0 + $0x230] sm:$0xf]
  %v159 = vld [vmem:[%s0 + $0x234] sm:$0xf]
  %v160 = vld [vmem:[%s0 + $0x238] sm:$0xf]
  %v161 = vld [vmem:[%s0 + $0x23c] sm:$0xf]
  %v162 = vld [vmem:[%s0 + $0x240] sm:$0xf]
  %v163 = vld [vmem:[%s0 + $0x244] sm:$0xf]
  %v164 = vld [vmem:[%s0 + $0x248] sm:$0xf]
  %v165 = vld [vmem:[%s0 + $0x24c] sm:$0xf]
  %v166 = vld [vmem:[%s0 + $0x250] sm:$0xf]
  %v167 = vld [vmem:[%s0 + $0x254] sm:$0xf]
  %v168 = vld [vmem:[%s0 + $0x258] sm:$0xf]
  %v169 = vld [vmem:[%s0 + $0x25c] sm:$0xf]
  %v170 = vld [vmem:[%s0 + $0x260] sm:$0xf]
  %v171 = vld [vmem:[%s0 + $0x264] sm:$0xf]
  %v172 = vld [vmem:[%s0 + $0x268] sm:$0xf]
  %v173 = vld [vmem:[%s0 + $0x26c] sm:$0xf]
  %v174 = vld [vmem:[%s0 + $0x270] sm:$0xf]
  %v175 = vld [vmem:[%s0 + $0x274] sm:$0xf]
  %v176 = vld [vmem:[%s0 + $0x278] sm:$0xf]
  %v177 = vld [vmem:[%s0 + $0x27c] sm:$0xf]
  %v178 = vld [vmem:[%s0 + $0x280] sm:$0xf]
  %v179 = vld [vmem:[%s0 + $0x284] sm:$0xf]
  %v180 = vld [vmem:[%s0 + $0x288] sm:$0xf]
  %v181 = vld [vmem:[%s0 + $0x28c] sm:$0xf]
  %v182 = vld [vmem:[%s0 + $0x290] sm:$0xf]
  %v183 = vld [vmem:[%s0 + $0x294] sm:$0xf]
  %v184 = vld [vmem:[%s0 + $0x298] sm:$0xf]
  %v185 = vld [vmem:[%s0 + $0x29c] sm:$0xf]
  %v186 = vld [vmem:[%s0 + $0x2a0] sm:$0xf]
  %v187 = vld [vmem:[%s0 + $0x2a4] sm:$0xf]
  %v188 = vld [vmem:[%s0 + $0x2a8] sm:$0xf]
  %v189 = vld [vmem:[%s0 + $0x2ac] sm:$0xf]
  %v190 = vld [vmem:[%s0 + $0x2b0] sm:$0xf]
  %v191 = vld [vmem:[%s0 + $0x2b4] sm:$0xf]
  %v192 = vld [vmem:[%s0 + $0x2b8] sm:$0xf]
  %v193 = vld [vmem:[%s0 + $0x2bc] sm:$0xf]
  %v194 = vld [vmem:[%s0 + $0x2c0] sm:$0xf]
  %v195 = vld [vmem:[%s0 + $0x2c4] sm:$0xf]
  %v196 = vld [vmem:[%s0 + $0x2c8] sm:$0xf]
  %v197 = vld [vmem:[%s0 + $0x2cc] sm:$0xf]
  %v198 = vld [vmem:[%s0 + $0x2d0] sm:$0xf]
  %v199 = vld [vmem:[%s0 + $0x2d4] sm:$0xf]
  %v200 = vld [vmem:[%s0 + $0x2d8] sm:$0xf]
  %v201 = vld [vmem:[%s0 + $0x2dc] sm:$0xf]
  %v202 = vld [vmem:[%s0 + $0x2e0] sm:$0xf]
  %v203 = vld [vmem:[%s0 + $0x2e4] sm:$0xf]
  %v204 = vld [vmem:[%s0 + $0x2e8] sm:$0xf]
  %v205 = vld [vmem:[%s0 + $0x2ec] sm:$0xf]
  %v206 = vld [vmem:[%s0 + $0x2f0] sm:$0xf]
  %v207 = vld [vmem:[%s0 + $0x2f4] sm:$0xf]
  %v208 = vld [vmem:[%s0 + $0x2f8] sm:$0xf]
  %v209 = vld [vmem:[%s0 + $0x2fc] sm:$0xf]
  %v210 = vld [vmem:[%s0 + $0x300] sm:$0xf]
  %v211 = vld [vmem:[%s0 + $0x304] sm:$0xf]
  %v212 = vld [vmem:[%s0 + $0x308] sm:$0xf]
  %v213 = vld [vmem:[%s0 + $0x30c] sm:$0xf]
  %v214 = vld [vmem:[%s0 + $0x310] sm:$0xf]
  %v215 = vld [vmem:[%s0 + $0x314] sm:$0xf]
  %v216 = vld [vmem:[%s0 + $0x318] sm:$0xf]
  %v217 = vld [vmem:[%s0 + $0x31c] sm:$0xf]
  %v218 = vld [vmem:[%s0 + $0x320] sm:$0xf]
  %v219 = vld [vmem:[%s0 + $0x324] sm:$0xf]
  %v220 = vld [vmem:[%s0 + $0x328] sm:$0xf]
  %v221 = vld [vmem:[%s0 + $0x32c] sm:$0xf]
  %v222 = vld [vmem:[%s0 + $0x330] sm:$0xf]
  %v223 = vld [vmem:[%s0 + $0x334] sm:$0xf]
  %v224 = vld [vmem:[%s0 + $0x338] sm:$0xf]
  %v225 = vld [vmem:[%s0 + $0x33c] sm:$0xf]
  %v226 = vld [vmem:[%s0 + $0x340] sm:$0xf]
  %v227 = vld [vmem:[%s0 + $0x344] sm:$0xf]
  %v228 = vld [vmem:[%s0 + $0x348] sm:$0xf]
  %v229 = vld [vmem:[%s0 + $0x34c] sm:$0xf]
  %v230 = vld [vmem:[%s0 + $0x350] sm:$0xf]
  %v231 = vld [vmem:[%s0 + $0x354] sm:$0xf]
  %v232 = vld [vmem:[%s0 + $0x358] sm:$0xf]
  %v233 = vld [vmem:[%s0 + $0x35c] sm:$0xf]
  %v234 = vld [vmem:[%s0 + $0x360] sm:$0xf]
  %v235 = vld [vmem:[%s0 + $0x364] sm:$0xf]
  %v236 = vld [vmem:[%s0 + $0x368] sm:$0xf]
  %v237 = vld [vmem:[%s0 + $0x36c] sm:$0xf]
  %v238 = vld [vmem:[%s0 + $0x370] sm:$0xf]
  %v239 = vld [vmem:[%s0 + $0x374] sm:$0xf]
  %v240 = vld [vmem:[%s0 + $0x378] sm:$0xf]
  %v241 = vld [vmem:[%s0 + $0x37c] sm:$0xf]
  %v242 = vld [vmem:[%s0 + $0x380] sm:$0xf]
  %v243 = vld [vmem:[%s0 + $0x384] sm:$0xf]
  %v244 = vld [vmem:[%s0 + $0x388] sm:$0xf]
  %v245 = vld [vmem:[%s0 + $0x38c] sm:$0xf]
  %v246 = vld [vmem:[%s0 + $0x390] sm:$0xf]
  %v247 = vld [vmem:[%s0 + $0x394] sm:$0xf]
  %v248 = vld [vmem:[%s0 + $0x398] sm:$0xf]
  %v249 = vld [vmem:[%s0 + $0x39c] sm:$0xf]
  %v250 = vld [vmem:[%s0 + $0x3a0] sm:$0xf]
  %v251 = vld [vmem:[%s0 + $0x3a4] sm:$0xf]
  %v252 = vld [vmem:[%s0 + $0x3a8] sm:$0xf]
  %v253 = vld [vmem:[%s0 + $0x3ac] sm:$0xf]
  %v254 = vld [vmem:[%s0 + $0x3b0] sm:$0xf]
  %v255 = vld [vmem:[%s0 + $0x3b4] sm:$0xf]
  %v256 = vld [vmem:[%s0 + $0x3b8] sm:$0xf]
  %v257 = vld [vmem:[%s0 + $0x3bc] sm:$0xf]
  %v258 = vld [vmem:[%s0 + $0x3c0] sm:$0xf]
  %v259 = vld [vmem:[%s0 + $0x3c4] sm:$0xf]
  %v260 = vld [vmem:[%s0 + $0x3c8] sm:$0xf]
  %v261 = vld [vmem:[%s0 + $0x3cc] sm:$0xf]
  %v262 = vld [vmem:[%s0 + $0x3d0] sm:$0xf]
  %v263 = vld [vmem:[%s0 + $0x3d4] sm:$0xf]
  %v264 = vld [vmem:[%s0 + $0x3d8] sm:$0xf]
  %v265 = vld [vmem:[%s0 + $0x3dc] sm:$0xf]
  %v266 = vld [vmem:[%s0 + $0x3e0] sm:$0xf]
  %v267 = vld [vmem:[%s0 + $0x3e4] sm:$0xf]
  %v268 = vld [vmem:[%s0 + $0x3e8] sm:$0xf]
  %v269 = vld [vmem:[%s0 + $0x3ec] sm:$0xf]
  %v270 = vld [vmem:[%s0 + $0x3f0] sm:$0xf]
  %v271 = vld [vmem:[%s0 + $0x3f4] sm:$0xf]
  %v272 = vld [vmem:[%s0 + $0x3f8] sm:$0xf]
  %v273 = vld [vmem:[%s0 + $0x3fc] sm:$0xf]
  %v274 = vld [vmem:[%s1] sm:$0xf]
  %v275 = vld [vmem:[%s1 + $0x4] sm:$0xf]
  %v276 = vld [vmem:[%s1 + $0x8] sm:$0xf]
  %v277 = vld [vmem:[%s1 + $0xc] sm:$0xf]
  %v278 = vld [vmem:[%s1 + $0x10] sm:$0xf]
  %v279 = vld [vmem:[%s1 + $0x14] sm:$0xf]
  %v280 = vld [vmem:[%s1 + $0x18] sm:$0xf]
  %v281 = vld [vmem:[%s1 + $0x1c] sm:$0xf]
  %v538 = vunpack.c.l.b16 %v18
  %v539 = vunpack.c.l.b16 %v19
  %v540 = vunpack.c.l.b16 %v20
  %v541 = vunpack.c.l.b16 %v21
  %v542 = vunpack.c.l.b16 %v22
  %v543 = vunpack.c.l.b16 %v23
  %v544 = vunpack.c.l.b16 %v24
  %v545 = vunpack.c.l.b16 %v25
  %v546 = vunpack.c.l.b16 %v26
  %v547 = vunpack.c.l.b16 %v27
  %v548 = vunpack.c.l.b16 %v28
  %v549 = vunpack.c.l.b16 %v29
  %v550 = vunpack.c.l.b16 %v30
  %v551 = vunpack.c.l.b16 %v31
  %v552 = vunpack.c.l.b16 %v32
  %v553 = vunpack.c.l.b16 %v33
  %v554 = vunpack.c.l.b16 %v34
  %v555 = vunpack.c.l.b16 %v35
  %v556 = vunpack.c.l.b16 %v36
  %v557 = vunpack.c.l.b16 %v37
  %v558 = vunpack.c.l.b16 %v38
  %v559 = vunpack.c.l.b16 %v39
  %v560 = vunpack.c.l.b16 %v40
  %v561 = vunpack.c.l.b16 %v41
  %v562 = vunpack.c.l.b16 %v42
  %v563 = vunpack.c.l.b16 %v43
  %v564 = vunpack.c.l.b16 %v44
  %v565 = vunpack.c.l.b16 %v45
  %v566 = vunpack.c.l.b16 %v46
  %v567 = vunpack.c.l.b16 %v47
  %v568 = vunpack.c.l.b16 %v48
  %v569 = vunpack.c.l.b16 %v49
  %v570 = vunpack.c.l.b16 %v50
  %v571 = vunpack.c.l.b16 %v51
  %v572 = vunpack.c.l.b16 %v52
  %v573 = vunpack.c.l.b16 %v53
  %v574 = vunpack.c.l.b16 %v54
  %v575 = vunpack.c.l.b16 %v55
  %v576 = vunpack.c.l.b16 %v56
  %v577 = vunpack.c.l.b16 %v57
  %v578 = vunpack.c.l.b16 %v58
  %v579 = vunpack.c.l.b16 %v59
  %v580 = vunpack.c.l.b16 %v60
  %v581 = vunpack.c.l.b16 %v61
  %v582 = vunpack.c.l.b16 %v62
  %v583 = vunpack.c.l.b16 %v63
  %v584 = vunpack.c.l.b16 %v64
  %v585 = vunpack.c.l.b16 %v65
  %v586 = vunpack.c.l.b16 %v66
  %v587 = vunpack.c.l.b16 %v67
  %v588 = vunpack.c.l.b16 %v68
  %v589 = vunpack.c.l.b16 %v69
  %v590 = vunpack.c.l.b16 %v70
  %v591 = vunpack.c.l.b16 %v71
  %v592 = vunpack.c.l.b16 %v72
  %v593 = vunpack.c.l.b16 %v73
  %v594 = vunpack.c.l.b16 %v74
  %v595 = vunpack.c.l.b16 %v75
  %v596 = vunpack.c.l.b16 %v76
  %v597 = vunpack.c.l.b16 %v77
  %v598 = vunpack.c.l.b16 %v78
  %v599 = vunpack.c.l.b16 %v79
  %v600 = vunpack.c.l.b16 %v80
  %v601 = vunpack.c.l.b16 %v81
  %v602 = vunpack.c.l.b16 %v82
  %v603 = vunpack.c.l.b16 %v83
  %v604 = vunpack.c.l.b16 %v84
  %v605 = vunpack.c.l.b16 %v85
  %v606 = vunpack.c.l.b16 %v86
  %v607 = vunpack.c.l.b16 %v87
  %v608 = vunpack.c.l.b16 %v88
  %v609 = vunpack.c.l.b16 %v89
  %v610 = vunpack.c.l.b16 %v90
  %v611 = vunpack.c.l.b16 %v91
  %v612 = vunpack.c.l.b16 %v92
  %v613 = vunpack.c.l.b16 %v93
  %v614 = vunpack.c.l.b16 %v94
  %v615 = vunpack.c.l.b16 %v95
  %v616 = vunpack.c.l.b16 %v96
  %v617 = vunpack.c.l.b16 %v97
  %v618 = vunpack.c.l.b16 %v98
  %v619 = vunpack.c.l.b16 %v99
  %v620 = vunpack.c.l.b16 %v100
  %v621 = vunpack.c.l.b16 %v101
  %v622 = vunpack.c.l.b16 %v102
  %v623 = vunpack.c.l.b16 %v103
  %v624 = vunpack.c.l.b16 %v104
  %v625 = vunpack.c.l.b16 %v105
  %v626 = vunpack.c.l.b16 %v106
  %v627 = vunpack.c.l.b16 %v107
  %v628 = vunpack.c.l.b16 %v108
  %v629 = vunpack.c.l.b16 %v109
  %v630 = vunpack.c.l.b16 %v110
  %v631 = vunpack.c.l.b16 %v111
  %v632 = vunpack.c.l.b16 %v112
  %v633 = vunpack.c.l.b16 %v113
  %v634 = vunpack.c.l.b16 %v114
  %v635 = vunpack.c.l.b16 %v115
  %v636 = vunpack.c.l.b16 %v116
  %v637 = vunpack.c.l.b16 %v117
  %v638 = vunpack.c.l.b16 %v118
  %v639 = vunpack.c.l.b16 %v119
  %v640 = vunpack.c.l.b16 %v120
  %v641 = vunpack.c.l.b16 %v121
  %v642 = vunpack.c.l.b16 %v122
  %v643 = vunpack.c.l.b16 %v123
  %v644 = vunpack.c.l.b16 %v124
  %v645 = vunpack.c.l.b16 %v125
  %v646 = vunpack.c.l.b16 %v126
  %v647 = vunpack.c.l.b16 %v127
  %v648 = vunpack.c.l.b16 %v128
  %v649 = vunpack.c.l.b16 %v129
  %v650 = vunpack.c.l.b16 %v130
  %v651 = vunpack.c.l.b16 %v131
  %v652 = vunpack.c.l.b16 %v132
  %v653 = vunpack.c.l.b16 %v133
  %v654 = vunpack.c.l.b16 %v134
  %v655 = vunpack.c.l.b16 %v135
  %v656 = vunpack.c.l.b16 %v136
  %v657 = vunpack.c.l.b16 %v137
  %v658 = vunpack.c.l.b16 %v138
  %v659 = vunpack.c.l.b16 %v139
  %v660 = vunpack.c.l.b16 %v140
  %v661 = vunpack.c.l.b16 %v141
  %v662 = vunpack.c.l.b16 %v142
  %v663 = vunpack.c.l.b16 %v143
  %v664 = vunpack.c.l.b16 %v144
  %v665 = vunpack.c.l.b16 %v145
  %v666 = vunpack.c.l.b16 %v146
  %v667 = vunpack.c.l.b16 %v147
  %v668 = vunpack.c.l.b16 %v148
  %v669 = vunpack.c.l.b16 %v149
  %v670 = vunpack.c.l.b16 %v150
  %v671 = vunpack.c.l.b16 %v151
  %v672 = vunpack.c.l.b16 %v152
  %v673 = vunpack.c.l.b16 %v153
  %v674 = vunpack.c.l.b16 %v154
  %v675 = vunpack.c.l.b16 %v155
  %v676 = vunpack.c.l.b16 %v156
  %v677 = vunpack.c.l.b16 %v157
  %v678 = vunpack.c.l.b16 %v158
  %v679 = vunpack.c.l.b16 %v159
  %v680 = vunpack.c.l.b16 %v160
  %v681 = vunpack.c.l.b16 %v161
  %v682 = vunpack.c.l.b16 %v162
  %v683 = vunpack.c.l.b16 %v163
  %v684 = vunpack.c.l.b16 %v164
  %v685 = vunpack.c.l.b16 %v165
  %v686 = vunpack.c.l.b16 %v166
  %v687 = vunpack.c.l.b16 %v167
  %v688 = vunpack.c.l.b16 %v168
  %v689 = vunpack.c.l.b16 %v169
  %v690 = vunpack.c.l.b16 %v170
  %v691 = vunpack.c.l.b16 %v171
  %v692 = vunpack.c.l.b16 %v172
  %v693 = vunpack.c.l.b16 %v173
  %v694 = vunpack.c.l.b16 %v174
  %v695 = vunpack.c.l.b16 %v175
  %v696 = vunpack.c.l.b16 %v176
  %v697 = vunpack.c.l.b16 %v177
  %v698 = vunpack.c.l.b16 %v178
  %v699 = vunpack.c.l.b16 %v179
  %v700 = vunpack.c.l.b16 %v180
  %v701 = vunpack.c.l.b16 %v181
  %v702 = vunpack.c.l.b16 %v182
  %v703 = vunpack.c.l.b16 %v183
  %v704 = vunpack.c.l.b16 %v184
  %v705 = vunpack.c.l.b16 %v185
  %v706 = vunpack.c.l.b16 %v186
  %v707 = vunpack.c.l.b16 %v187
  %v708 = vunpack.c.l.b16 %v188
  %v709 = vunpack.c.l.b16 %v189
  %v710 = vunpack.c.l.b16 %v190
  %v711 = vunpack.c.l.b16 %v191
  %v712 = vunpack.c.l.b16 %v192
  %v713 = vunpack.c.l.b16 %v193
  %v714 = vunpack.c.l.b16 %v194
  %v715 = vunpack.c.l.b16 %v195
  %v716 = vunpack.c.l.b16 %v196
  %v717 = vunpack.c.l.b16 %v197
  %v718 = vunpack.c.l.b16 %v198
  %v719 = vunpack.c.l.b16 %v199
  %v720 = vunpack.c.l.b16 %v200
  %v721 = vunpack.c.l.b16 %v201
  %v722 = vunpack.c.l.b16 %v202
  %v723 = vunpack.c.l.b16 %v203
  %v724 = vunpack.c.l.b16 %v204
  %v725 = vunpack.c.l.b16 %v205
  %v726 = vunpack.c.l.b16 %v206
  %v727 = vunpack.c.l.b16 %v207
  %v728 = vunpack.c.l.b16 %v208
  %v729 = vunpack.c.l.b16 %v209
  %v730 = vunpack.c.l.b16 %v210
  %v731 = vunpack.c.l.b16 %v211
  %v732 = vunpack.c.l.b16 %v212
  %v733 = vunpack.c.l.b16 %v213
  %v734 = vunpack.c.l.b16 %v214
  %v735 = vunpack.c.l.b16 %v215
  %v736 = vunpack.c.l.b16 %v216
  %v737 = vunpack.c.l.b16 %v217
  %v738 = vunpack.c.l.b16 %v218
  %v739 = vunpack.c.l.b16 %v219
  %v740 = vunpack.c.l.b16 %v220
  %v741 = vunpack.c.l.b16 %v221
  %v742 = vunpack.c.l.b16 %v222
  %v743 = vunpack.c.l.b16 %v223
  %v744 = vunpack.c.l.b16 %v224
  %v745 = vunpack.c.l.b16 %v225
  %v746 = vunpack.c.l.b16 %v226
  %v747 = vunpack.c.l.b16 %v227
  %v748 = vunpack.c.l.b16 %v228
  %v749 = vunpack.c.l.b16 %v229
  %v750 = vunpack.c.l.b16 %v230
  %v751 = vunpack.c.l.b16 %v231
  %v752 = vunpack.c.l.b16 %v232
  %v753 = vunpack.c.l.b16 %v233
  %v754 = vunpack.c.l.b16 %v234
  %v755 = vunpack.c.l.b16 %v235
  %v756 = vunpack.c.l.b16 %v236
  %v757 = vunpack.c.l.b16 %v237
  %v758 = vunpack.c.l.b16 %v238
  %v759 = vunpack.c.l.b16 %v239
  %v760 = vunpack.c.l.b16 %v240
  %v761 = vunpack.c.l.b16 %v241
  %v762 = vunpack.c.l.b16 %v242
  %v763 = vunpack.c.l.b16 %v243
  %v764 = vunpack.c.l.b16 %v244
  %v765 = vunpack.c.l.b16 %v245
  %v766 = vunpack.c.l.b16 %v246
  %v767 = vunpack.c.l.b16 %v247
  %v768 = vunpack.c.l.b16 %v248
  %v769 = vunpack.c.l.b16 %v249
  %v770 = vunpack.c.l.b16 %v250
  %v771 = vunpack.c.l.b16 %v251
  %v772 = vunpack.c.l.b16 %v252
  %v773 = vunpack.c.l.b16 %v253
  %v774 = vunpack.c.l.b16 %v254
  %v775 = vunpack.c.l.b16 %v255
  %v776 = vunpack.c.l.b16 %v256
  %v777 = vunpack.c.l.b16 %v257
  %v778 = vunpack.c.l.b16 %v258
  %v779 = vunpack.c.l.b16 %v259
  %v780 = vunpack.c.l.b16 %v260
  %v781 = vunpack.c.l.b16 %v261
  %v782 = vunpack.c.l.b16 %v262
  %v783 = vunpack.c.l.b16 %v263
  %v784 = vunpack.c.l.b16 %v264
  %v785 = vunpack.c.l.b16 %v265
  %v786 = vunpack.c.l.b16 %v266
  %v787 = vunpack.c.l.b16 %v267
  %v788 = vunpack.c.l.b16 %v268
  %v789 = vunpack.c.l.b16 %v269
  %v790 = vunpack.c.l.b16 %v270
  %v791 = vunpack.c.l.b16 %v271
  %v792 = vunpack.c.l.b16 %v272
  %v793 = vunpack.c.l.b16 %v273
  %v794 = vpack.c.b16 %v539, %v538
  %v795 = vpack.c.b16 %v541, %v540
  %v796 = vpack.c.b16 %v543, %v542
  %v797 = vpack.c.b16 %v545, %v544
  %v798 = vpack.c.b16 %v547, %v546
  %v799 = vpack.c.b16 %v549, %v548
  %v800 = vpack.c.b16 %v551, %v550
  %v801 = vpack.c.b16 %v553, %v552
  %v802 = vpack.c.b16 %v555, %v554
  %v803 = vpack.c.b16 %v557, %v556
  %v804 = vpack.c.b16 %v559, %v558
  %v805 = vpack.c.b16 %v561, %v560
  %v806 = vpack.c.b16 %v563, %v562
  %v807 = vpack.c.b16 %v565, %v564
  %v808 = vpack.c.b16 %v567, %v566
  %v809 = vpack.c.b16 %v569, %v568
  %v810 = vpack.c.b16 %v571, %v570
  %v811 = vpack.c.b16 %v573, %v572
  %v812 = vpack.c.b16 %v575, %v574
  %v813 = vpack.c.b16 %v577, %v576
  %v814 = vpack.c.b16 %v579, %v578
  %v815 = vpack.c.b16 %v581, %v580
  %v816 = vpack.c.b16 %v583, %v582
  %v817 = vpack.c.b16 %v585, %v584
  %v818 = vpack.c.b16 %v587, %v586
  %v819 = vpack.c.b16 %v589, %v588
  %v820 = vpack.c.b16 %v591, %v590
  %v821 = vpack.c.b16 %v593, %v592
  %v822 = vpack.c.b16 %v595, %v594
  %v823 = vpack.c.b16 %v597, %v596
  %v824 = vpack.c.b16 %v599, %v598
  %v825 = vpack.c.b16 %v601, %v600
  %v826 = vpack.c.b16 %v603, %v602
  %v827 = vpack.c.b16 %v605, %v604
  %v828 = vpack.c.b16 %v607, %v606
  %v829 = vpack.c.b16 %v609, %v608
  %v830 = vpack.c.b16 %v611, %v610
  %v831 = vpack.c.b16 %v613, %v612
  %v832 = vpack.c.b16 %v615, %v614
  %v833 = vpack.c.b16 %v617, %v616
  %v834 = vpack.c.b16 %v619, %v618
  %v835 = vpack.c.b16 %v621, %v620
  %v836 = vpack.c.b16 %v623, %v622
  %v837 = vpack.c.b16 %v625, %v624
  %v838 = vpack.c.b16 %v627, %v626
  %v839 = vpack.c.b16 %v629, %v628
  %v840 = vpack.c.b16 %v631, %v630
  %v841 = vpack.c.b16 %v633, %v632
  %v842 = vpack.c.b16 %v635, %v634
  %v843 = vpack.c.b16 %v637, %v636
  %v844 = vpack.c.b16 %v639, %v638
  %v845 = vpack.c.b16 %v641, %v640
  %v846 = vpack.c.b16 %v643, %v642
  %v847 = vpack.c.b16 %v645, %v644
  %v848 = vpack.c.b16 %v647, %v646
  %v849 = vpack.c.b16 %v649, %v648
  %v850 = vpack.c.b16 %v651, %v650
  %v851 = vpack.c.b16 %v653, %v652
  %v852 = vpack.c.b16 %v655, %v654
  %v853 = vpack.c.b16 %v657, %v656
  %v854 = vpack.c.b16 %v659, %v658
  %v855 = vpack.c.b16 %v661, %v660
  %v856 = vpack.c.b16 %v663, %v662
  %v857 = vpack.c.b16 %v665, %v664
  %v858 = vpack.c.b16 %v667, %v666
  %v859 = vpack.c.b16 %v669, %v668
  %v860 = vpack.c.b16 %v671, %v670
  %v861 = vpack.c.b16 %v673, %v672
  %v862 = vpack.c.b16 %v675, %v674
  %v863 = vpack.c.b16 %v677, %v676
  %v864 = vpack.c.b16 %v679, %v678
  %v865 = vpack.c.b16 %v681, %v680
  %v866 = vpack.c.b16 %v683, %v682
  %v867 = vpack.c.b16 %v685, %v684
  %v868 = vpack.c.b16 %v687, %v686
  %v869 = vpack.c.b16 %v689, %v688
  %v870 = vpack.c.b16 %v691, %v690
  %v871 = vpack.c.b16 %v693, %v692
  %v872 = vpack.c.b16 %v695, %v694
  %v873 = vpack.c.b16 %v697, %v696
  %v874 = vpack.c.b16 %v699, %v698
  %v875 = vpack.c.b16 %v701, %v700
  %v876 = vpack.c.b16 %v703, %v702
  %v877 = vpack.c.b16 %v705, %v704
  %v878 = vpack.c.b16 %v707, %v706
  %v879 = vpack.c.b16 %v709, %v708
  %v880 = vpack.c.b16 %v711, %v710
  %v881 = vpack.c.b16 %v713, %v712
  %v882 = vpack.c.b16 %v715, %v714
  %v883 = vpack.c.b16 %v717, %v716
  %v884 = vpack.c.b16 %v719, %v718
  %v885 = vpack.c.b16 %v721, %v720
  %v886 = vpack.c.b16 %v723, %v722
  %v887 = vpack.c.b16 %v725, %v724
  %v888 = vpack.c.b16 %v727, %v726
  %v889 = vpack.c.b16 %v729, %v728
  %v890 = vpack.c.b16 %v731, %v730
  %v891 = vpack.c.b16 %v733, %v732
  %v892 = vpack.c.b16 %v735, %v734
  %v893 = vpack.c.b16 %v737, %v736
  %v894 = vpack.c.b16 %v739, %v738
  %v895 = vpack.c.b16 %v741, %v740
  %v896 = vpack.c.b16 %v743, %v742
  %v897 = vpack.c.b16 %v745, %v744
  %v898 = vpack.c.b16 %v747, %v746
  %v899 = vpack.c.b16 %v749, %v748
  %v900 = vpack.c.b16 %v751, %v750
  %v901 = vpack.c.b16 %v753, %v752
  %v902 = vpack.c.b16 %v755, %v754
  %v903 = vpack.c.b16 %v757, %v756
  %v904 = vpack.c.b16 %v759, %v758
  %v905 = vpack.c.b16 %v761, %v760
  %v906 = vpack.c.b16 %v763, %v762
  %v907 = vpack.c.b16 %v765, %v764
  %v908 = vpack.c.b16 %v767, %v766
  %v909 = vpack.c.b16 %v769, %v768
  %v910 = vpack.c.b16 %v771, %v770
  %v911 = vpack.c.b16 %v773, %v772
  %v912 = vpack.c.b16 %v775, %v774
  %v913 = vpack.c.b16 %v777, %v776
  %v914 = vpack.c.b16 %v779, %v778
  %v915 = vpack.c.b16 %v781, %v780
  %v916 = vpack.c.b16 %v783, %v782
  %v917 = vpack.c.b16 %v785, %v784
  %v918 = vpack.c.b16 %v787, %v786
  %v919 = vpack.c.b16 %v789, %v788
  %v920 = vpack.c.b16 %v791, %v790
  %v921 = vpack.c.b16 %v793, %v792
  %v930 = vunpack.c.l.b16 %v274
  %v931 = vunpack.c.l.b16 %v275
  %v932 = vunpack.c.l.b16 %v276
  %v933 = vunpack.c.l.b16 %v277
  %v934 = vunpack.c.l.b16 %v278
  %v935 = vunpack.c.l.b16 %v279
  %v936 = vunpack.c.l.b16 %v280
  %v937 = vunpack.c.l.b16 %v281
  %v938 = vpack.c.b16 %v931, %v930
  %v939 = vpack.c.b16 %v933, %v932
  %v940 = vpack.c.b16 %v935, %v934
  %v941 = vpack.c.b16 %v937, %v936
  %vm946 = vcmask 523264
  %v948 = vsel %vm946, %v794, 0
  %v951 = vsel %vm946, %v795, 0
  %v954 = vsel %vm946, %v796, 0
  %v957 = vsel %vm946, %v797, 0
  %v960 = vsel %vm946, %v798, 0
  %v963 = vsel %vm946, %v799, 0
  %v966 = vsel %vm946, %v800, 0
  %v969 = vsel %vm946, %v801, 0
  %v972 = vsel %vm946, %v802, 0
  %v975 = vsel %vm946, %v803, 0
  %v978 = vsel %vm946, %v804, 0
  %v981 = vsel %vm946, %v805, 0
  %v984 = vsel %vm946, %v806, 0
  %v987 = vsel %vm946, %v807, 0
  %v990 = vsel %vm946, %v808, 0
  %v993 = vsel %vm946, %v809, 0
  %v996 = vsel %vm946, %v810, 0
  %v999 = vsel %vm946, %v811, 0
  %v1002 = vsel %vm946, %v812, 0
  %v1005 = vsel %vm946, %v813, 0
  %v1008 = vsel %vm946, %v814, 0
  %v1011 = vsel %vm946, %v815, 0
  %v1014 = vsel %vm946, %v816, 0
  %v1017 = vsel %vm946, %v817, 0
  %v1020 = vsel %vm946, %v818, 0
  %v1023 = vsel %vm946, %v819, 0
  %v1026 = vsel %vm946, %v820, 0
  %v1029 = vsel %vm946, %v821, 0
  %v1032 = vsel %vm946, %v822, 0
  %v1035 = vsel %vm946, %v823, 0
  %v1038 = vsel %vm946, %v824, 0
  %v1041 = vsel %vm946, %v825, 0
  %v1044 = vsel %vm946, %v826, 0
  %v1047 = vsel %vm946, %v827, 0
  %v1050 = vsel %vm946, %v828, 0
  %v1053 = vsel %vm946, %v829, 0
  %v1056 = vsel %vm946, %v830, 0
  %v1059 = vsel %vm946, %v831, 0
  %v1062 = vsel %vm946, %v832, 0
  %v1065 = vsel %vm946, %v833, 0
  %v1068 = vsel %vm946, %v834, 0
  %v1071 = vsel %vm946, %v835, 0
  %v1074 = vsel %vm946, %v836, 0
  %v1077 = vsel %vm946, %v837, 0
  %v1080 = vsel %vm946, %v838, 0
  %v1083 = vsel %vm946, %v839, 0
  %v1086 = vsel %vm946, %v840, 0
  %v1089 = vsel %vm946, %v841, 0
  %v1092 = vsel %vm946, %v842, 0
  %v1095 = vsel %vm946, %v843, 0
  %v1098 = vsel %vm946, %v844, 0
  %v1101 = vsel %vm946, %v845, 0
  %v1104 = vsel %vm946, %v846, 0
  %v1107 = vsel %vm946, %v847, 0
  %v1110 = vsel %vm946, %v848, 0
  %v1113 = vsel %vm946, %v849, 0
  %v1116 = vsel %vm946, %v850, 0
  %v1119 = vsel %vm946, %v851, 0
  %v1122 = vsel %vm946, %v852, 0
  %v1125 = vsel %vm946, %v853, 0
  %v1128 = vsel %vm946, %v854, 0
  %v1131 = vsel %vm946, %v855, 0
  %v1134 = vsel %vm946, %v856, 0
  %v1137 = vsel %vm946, %v857, 0
  %v1140 = vsel %vm946, %v858, 0
  %v1143 = vsel %vm946, %v859, 0
  %v1146 = vsel %vm946, %v860, 0
  %v1149 = vsel %vm946, %v861, 0
  %v1152 = vsel %vm946, %v862, 0
  %v1155 = vsel %vm946, %v863, 0
  %v1158 = vsel %vm946, %v864, 0
  %v1161 = vsel %vm946, %v865, 0
  %v1164 = vsel %vm946, %v866, 0
  %v1167 = vsel %vm946, %v867, 0
  %v1170 = vsel %vm946, %v868, 0
  %v1173 = vsel %vm946, %v869, 0
  %v1176 = vsel %vm946, %v870, 0
  %v1179 = vsel %vm946, %v871, 0
  %v1182 = vsel %vm946, %v872, 0
  %v1185 = vsel %vm946, %v873, 0
  %v1188 = vsel %vm946, %v874, 0
  %v1191 = vsel %vm946, %v875, 0
  %v1194 = vsel %vm946, %v876, 0
  %v1197 = vsel %vm946, %v877, 0
  %v1200 = vsel %vm946, %v878, 0
  %v1203 = vsel %vm946, %v879, 0
  %v1206 = vsel %vm946, %v880, 0
  %v1209 = vsel %vm946, %v881, 0
  %v1212 = vsel %vm946, %v882, 0
  %v1215 = vsel %vm946, %v883, 0
  %v1218 = vsel %vm946, %v884, 0
  %v1221 = vsel %vm946, %v885, 0
  %v1224 = vsel %vm946, %v886, 0
  %v1227 = vsel %vm946, %v887, 0
  %v1230 = vsel %vm946, %v888, 0
  %v1233 = vsel %vm946, %v889, 0
  %v1236 = vsel %vm946, %v890, 0
  %v1239 = vsel %vm946, %v891, 0
  %v1242 = vsel %vm946, %v892, 0
  %v1245 = vsel %vm946, %v893, 0
  %v1248 = vsel %vm946, %v894, 0
  %v1251 = vsel %vm946, %v895, 0
  %v1254 = vsel %vm946, %v896, 0
  %v1257 = vsel %vm946, %v897, 0
  %v1260 = vsel %vm946, %v898, 0
  %v1263 = vsel %vm946, %v899, 0
  %v1266 = vsel %vm946, %v900, 0
  %v1269 = vsel %vm946, %v901, 0
  %v1272 = vsel %vm946, %v902, 0
  %v1275 = vsel %vm946, %v903, 0
  %v1278 = vsel %vm946, %v904, 0
  %v1281 = vsel %vm946, %v905, 0
  %v1284 = vsel %vm946, %v906, 0
  %v1287 = vsel %vm946, %v907, 0
  %v1290 = vsel %vm946, %v908, 0
  %v1293 = vsel %vm946, %v909, 0
  %v1296 = vsel %vm946, %v910, 0
  %v1299 = vsel %vm946, %v911, 0
  %v1302 = vsel %vm946, %v912, 0
  %v1305 = vsel %vm946, %v913, 0
  %v1308 = vsel %vm946, %v914, 0
  %v1311 = vsel %vm946, %v915, 0
  %v1314 = vsel %vm946, %v916, 0
  %v1317 = vsel %vm946, %v917, 0
  %v1320 = vsel %vm946, %v918, 0
  %v1323 = vsel %vm946, %v919, 0
  %v1326 = vsel %vm946, %v920, 0
  %v1329 = vsel %vm946, %v921, 0
  %1331 = vmatprep.subr.bf16.mxu0 0
  %1332 = vmatpush1.bf16.msra.mxu0 %v938
  %1333 = vmatprep.subr.bf16.mxu0 0
  %1334 = vmatpush1.bf16.msra.mxu0 %v939
  %1335 = vmatprep.subr.bf16.mxu0 0
  %1336 = vmatpush1.bf16.msra.mxu0 %v940
  %1337 = vmatprep.subr.bf16.mxu0 0
  %1338 = vmatpush1.bf16.msra.mxu0 %v941
  %1339 = vmatprep.subr.bf16.mxu0 0
  %1340 = vmatpush1.bf16.msra.mxu0 0
  %1341 = vmatprep.subr.bf16.mxu0 0
  %1342 = vmatpush1.bf16.msra.mxu0 0
  %1343 = vmatprep.subr.bf16.mxu0 0
  %1344 = vmatpush1.bf16.msra.mxu0 0
  %1345 = vmatprep.subr.bf16.mxu0 0
  %1346 = vmatpush1.bf16.msra.mxu0 0
  %1347 = vmatprep.subr.bf16.mxu0 0
  %1348 = vmatpush1.bf16.msra.mxu0 0
  %1349 = vmatprep.subr.bf16.mxu0 0
  %1350 = vmatpush1.bf16.msra.mxu0 0
  %1351 = vmatprep.subr.bf16.mxu0 0
  %1352 = vmatpush1.bf16.msra.mxu0 0
  %1353 = vmatprep.subr.bf16.mxu0 0
  %1354 = vmatpush1.bf16.msra.mxu0 0
  %1355 = vmatprep.subr.bf16.mxu0 0
  %1356 = vmatpush1.bf16.msra.mxu0 0
  %1357 = vmatprep.subr.bf16.mxu0 0
  %1358 = vmatpush1.bf16.msra.mxu0 0
  %1359 = vmatprep.subr.bf16.mxu0 0
  %1360 = vmatpush1.bf16.msra.mxu0 0
  %1361 = vmatprep.subr.bf16.mxu0 0
  %1362 = vmatpush1.bf16.msra.mxu0 0
  %1363 = vmatprep.mubr.bf16.mxu0 0
  %1364 = vmatmul.mubr.bf16.gmra.mrb[0].mxu0 %v948
  %v1365 = vpop.f32.mrb[0].mxu0
  %v1366 = vadd.f32 0.0, %v1365
  %v1367 = vpop.f32.mrb[0].mxu0
  %v1368 = vpop.f32.mrb[0].mxu0
  %v1369 = vadd.f32 0.0, %v1368
  %v1370 = vpop.f32.mrb[0].mxu0
  %1371 = vmatprep.mubr.bf16.mxu0 0
  %1372 = vmatmul.mubr.bf16.gmra.mrb[0].mxu0 %v951
  %v1373 = vpop.f32.mrb[0].mxu0
  %v1374 = vadd.f32 0.0, %v1373
  %v1375 = vpop.f32.mrb[0].mxu0
  %v1376 = vpop.f32.mrb[0].mxu0
  %v1377 = vadd.f32 0.0, %v1376
  %v1378 = vpop.f32.mrb[0].mxu0
  %1379 = vmatprep.mubr.bf16.mxu0 0
  %1380 = vmatmul.mubr.bf16.gmra.mrb[0].mxu0 %v954
  %v1381 = vpop.f32.mrb[0].mxu0
  %v1382 = vadd.f32 0.0, %v1381
  %v1383 = vpop.f32.mrb[0].mxu0
  %v1384 = vpop.f32.mrb[0].mxu0
  %v1385 = vadd.f32 0.0, %v1384
  %v1386 = vpop.f32.mrb[0].mxu0
  %1387 = vmatprep.mubr.bf16.mxu0 0
  %1388 = vmatmul.mubr.bf16.gmra.mrb[0].mxu0 %v957
  %v1389 = vpop.f32.mrb[0].mxu0
  %v1390 = vadd.f32 0.0, %v1389
  %v1391 = vpop.f32.mrb[0].mxu0
  %v1392 = vpop.f32.mrb[0].mxu0
  %v1393 = vadd.f32 0.0, %v1392
  %v1394 = vpop.f32.mrb[0].mxu0
  %1395 = vmatprep.mubr.bf16.mxu0 0
  %1396 = vmatmul.mubr.bf16.gmra.mrb[0].mxu0 %v960
  %v1397 = vpop.f32.mrb[0].mxu0
  %v1398 = vadd.f32 0.0, %v1397
  %v1399 = vpop.f32.mrb[0].mxu0
  %v1400 = vpop.f32.mrb[0].mxu0
  %v1401 = vadd.f32 0.0, %v1400
  %v1402 = vpop.f32.mrb[0].mxu0
  %1403 = vmatprep.mubr.bf16.mxu0 0
  %1404 = vmatmul.mubr.bf16.gmra.mrb[0].mxu0 %v963
  %v1405 = vpop.f32.mrb[0].mxu0
  %v1406 = vadd.f32 0.0, %v1405
  %v1407 = vpop.f32.mrb[0].mxu0
  %v1408 = vpop.f32.mrb[0].mxu0
  %v1409 = vadd.f32 0.0, %v1408
  %v1410 = vpop.f32.mrb[0].mxu0
  %1411 = vmatprep.mubr.bf16.mxu0 0
  %1412 = vmatmul.mubr.bf16.gmra.mrb[0].mxu0 %v966
  %v1413 = vpop.f32.mrb[0].mxu0
  %v1414 = vadd.f32 0.0, %v1413
  %v1415 = vpop.f32.mrb[0].mxu0
  %v1416 = vpop.f32.mrb[0].mxu0
  %v1417 = vadd.f32 0.0, %v1416
  %v1418 = vpop.f32.mrb[0].mxu0
  %1419 = vmatprep.mubr.bf16.mxu0 0
  %1420 = vmatmul.mubr.bf16.gmra.mrb[0].mxu0 %v969
  %v1421 = vpop.f32.mrb[0].mxu0
  %v1422 = vadd.f32 0.0, %v1421
  %v1423 = vpop.f32.mrb[0].mxu0
  %v1424 = vpop.f32.mrb[0].mxu0
  %v1425 = vadd.f32 0.0, %v1424
  %v1426 = vpop.f32.mrb[0].mxu0
  %1427 = vmatprep.mubr.bf16.mxu0 0
  %1428 = vmatmul.mubr.bf16.gmra.mrb[0].mxu0 %v972
  %v1429 = vpop.f32.mrb[0].mxu0
  %v1430 = vadd.f32 0.0, %v1429
  %v1431 = vpop.f32.mrb[0].mxu0
  %v1432 = vpop.f32.mrb[0].mxu0
  %v1433 = vadd.f32 0.0, %v1432
  %v1434 = vpop.f32.mrb[0].mxu0
  %1435 = vmatprep.mubr.bf16.mxu0 0
  %1436 = vmatmul.mubr.bf16.gmra.mrb[0].mxu0 %v975
  %v1437 = vpop.f32.mrb[0].mxu0
  %v1438 = vadd.f32 0.0, %v1437
  %v1439 = vpop.f32.mrb[0].mxu0
  %v1440 = vpop.f32.mrb[0].mxu0
  %v1441 = vadd.f32 0.0, %v1440
  %v1442 = vpop.f32.mrb[0].mxu0
  %1443 = vmatprep.mubr.bf16.mxu0 0
  %1444 = vmatmul.mubr.bf16.gmra.mrb[0].mxu0 %v978
  %v1445 = vpop.f32.mrb[0].mxu0
  %v1446 = vadd.f32 0.0, %v1445
  %v1447 = vpop.f32.mrb[0].mxu0
  %v1448 = vpop.f32.mrb[0].mxu0
  %v1449 = vadd.f32 0.0, %v1448
  %v1450 = vpop.f32.mrb[0].mxu0
  %1451 = vmatprep.mubr.bf16.mxu0 0
  %1452 = vmatmul.mubr.bf16.gmra.mrb[0].mxu0 %v981
  %v1453 = vpop.f32.mrb[0].mxu0
  %v1454 = vadd.f32 0.0, %v1453
  %v1455 = vpop.f32.mrb[0].mxu0
  %v1456 = vpop.f32.mrb[0].mxu0
  %v1457 = vadd.f32 0.0, %v1456
  %v1458 = vpop.f32.mrb[0].mxu0
  %1459 = vmatprep.mubr.bf16.mxu0 0
  %1460 = vmatmul.mubr.bf16.gmra.mrb[0].mxu0 %v984
  %v1461 = vpop.f32.mrb[0].mxu0
  %v1462 = vadd.f32 0.0, %v1461
  %v1463 = vpop.f32.mrb[0].mxu0
  %v1464 = vpop.f32.mrb[0].mxu0
  %v1465 = vadd.f32 0.0, %v1464
  %v1466 = vpop.f32.mrb[0].mxu0
  %1467 = vmatprep.mubr.bf16.mxu0 0
  %1468 = vmatmul.mubr.bf16.gmra.mrb[0].mxu0 %v987
  %v1469 = vpop.f32.mrb[0].mxu0
  %v1470 = vadd.f32 0.0, %v1469
  %v1471 = vpop.f32.mrb[0].mxu0
  %v1472 = vpop.f32.mrb[0].mxu0
  %v1473 = vadd.f32 0.0, %v1472
  %v1474 = vpop.f32.mrb[0].mxu0
  %1475 = vmatprep.mubr.bf16.mxu0 0
  %1476 = vmatmul.mubr.bf16.gmra.mrb[0].mxu0 %v990
  %v1477 = vpop.f32.mrb[0].mxu0
  %v1478 = vadd.f32 0.0, %v1477
  %v1479 = vpop.f32.mrb[0].mxu0
  %v1480 = vpop.f32.mrb[0].mxu0
  %v1481 = vadd.f32 0.0, %v1480
  %v1482 = vpop.f32.mrb[0].mxu0
  %1483 = vmatprep.mubr.bf16.mxu0 0
  %1484 = vmatmul.mubr.bf16.gmra.mrb[0].mxu0 %v993
  %v1485 = vpop.f32.mrb[0].mxu0
  %v1486 = vadd.f32 0.0, %v1485
  %v1487 = vpop.f32.mrb[0].mxu0
  %v1488 = vpop.f32.mrb[0].mxu0
  %v1489 = vadd.f32 0.0, %v1488
  %v1490 = vpop.f32.mrb[0].mxu0
  %1491 = vmatprep.mubr.bf16.mxu0 0
  %1492 = vmatmul.mubr.bf16.gmra.mrb[0].mxu0 %v996
  %v1493 = vpop.f32.mrb[0].mxu0
  %v1494 = vadd.f32 0.0, %v1493
  %v1495 = vpop.f32.mrb[0].mxu0
  %v1496 = vpop.f32.mrb[0].mxu0
  %v1497 = vadd.f32 0.0, %v1496
  %v1498 = vpop.f32.mrb[0].mxu0
  %1499 = vmatprep.mubr.bf16.mxu0 0
  %1500 = vmatmul.mubr.bf16.gmra.mrb[0].mxu0 %v999
  %v1501 = vpop.f32.mrb[0].mxu0
  %v1502 = vadd.f32 0.0, %v1501
  %v1503 = vpop.f32.mrb[0].mxu0
  %v1504 = vpop.f32.mrb[0].mxu0
  %v1505 = vadd.f32 0.0, %v1504
  %v1506 = vpop.f32.mrb[0].mxu0
  %1507 = vmatprep.mubr.bf16.mxu0 0
  %1508 = vmatmul.mubr.bf16.gmra.mrb[0].mxu0 %v1002
  %v1509 = vpop.f32.mrb[0].mxu0
  %v1510 = vadd.f32 0.0, %v1509
  %v1511 = vpop.f32.mrb[0].mxu0
  %v1512 = vpop.f32.mrb[0].mxu0
  %v1513 = vadd.f32 0.0, %v1512
  %v1514 = vpop.f32.mrb[0].mxu0
  %1515 = vmatprep.mubr.bf16.mxu0 0
  %1516 = vmatmul.mubr.bf16.gmra.mrb[0].mxu0 %v1005
  %v1517 = vpop.f32.mrb[0].mxu0
  %v1518 = vadd.f32 0.0, %v1517
  %v1519 = vpop.f32.mrb[0].mxu0
  %v1520 = vpop.f32.mrb[0].mxu0
  %v1521 = vadd.f32 0.0, %v1520
  %v1522 = vpop.f32.mrb[0].mxu0
  %1523 = vmatprep.mubr.bf16.mxu0 0
  %1524 = vmatmul.mubr.bf16.gmra.mrb[0].mxu0 %v1008
  %v1525 = vpop.f32.mrb[0].mxu0
  %v1526 = vadd.f32 0.0, %v1525
  %v1527 = vpop.f32.mrb[0].mxu0
  %v1528 = vpop.f32.mrb[0].mxu0
  %v1529 = vadd.f32 0.0, %v1528
  %v1530 = vpop.f32.mrb[0].mxu0
  %1531 = vmatprep.mubr.bf16.mxu0 0
  %1532 = vmatmul.mubr.bf16.gmra.mrb[0].mxu0 %v1011
  %v1533 = vpop.f32.mrb[0].mxu0
  %v1534 = vadd.f32 0.0, %v1533
  %v1535 = vpop.f32.mrb[0].mxu0
  %v1536 = vpop.f32.mrb[0].mxu0
  %v1537 = vadd.f32 0.0, %v1536
  %v1538 = vpop.f32.mrb[0].mxu0
  %1539 = vmatprep.mubr.bf16.mxu0 0
  %1540 = vmatmul.mubr.bf16.gmra.mrb[0].mxu0 %v1014
  %v1541 = vpop.f32.mrb[0].mxu0
  %v1542 = vadd.f32 0.0, %v1541
  %v1543 = vpop.f32.mrb[0].mxu0
  %v1544 = vpop.f32.mrb[0].mxu0
  %v1545 = vadd.f32 0.0, %v1544
  %v1546 = vpop.f32.mrb[0].mxu0
  %1547 = vmatprep.mubr.bf16.mxu0 0
  %1548 = vmatmul.mubr.bf16.gmra.mrb[0].mxu0 %v1017
  %v1549 = vpop.f32.mrb[0].mxu0
  %v1550 = vadd.f32 0.0, %v1549
  %v1551 = vpop.f32.mrb[0].mxu0
  %v1552 = vpop.f32.mrb[0].mxu0
  %v1553 = vadd.f32 0.0, %v1552
  %v1554 = vpop.f32.mrb[0].mxu0
  %1555 = vmatprep.mubr.bf16.mxu0 0
  %1556 = vmatmul.mubr.bf16.gmra.mrb[0].mxu0 %v1020
  %v1557 = vpop.f32.mrb[0].mxu0
  %v1558 = vadd.f32 0.0, %v1557
  %v1559 = vpop.f32.mrb[0].mxu0
  %v1560 = vpop.f32.mrb[0].mxu0
  %v1561 = vadd.f32 0.0, %v1560
  %v1562 = vpop.f32.mrb[0].mxu0
  %1563 = vmatprep.mubr.bf16.mxu0 0
  %1564 = vmatmul.mubr.bf16.gmra.mrb[0].mxu0 %v1023
  %v1565 = vpop.f32.mrb[0].mxu0
  %v1566 = vadd.f32 0.0, %v1565
  %v1567 = vpop.f32.mrb[0].mxu0
  %v1568 = vpop.f32.mrb[0].mxu0
  %v1569 = vadd.f32 0.0, %v1568
  %v1570 = vpop.f32.mrb[0].mxu0
  %1571 = vmatprep.mubr.bf16.mxu0 0
  %1572 = vmatmul.mubr.bf16.gmra.mrb[0].mxu0 %v1026
  %v1573 = vpop.f32.mrb[0].mxu0
  %v1574 = vadd.f32 0.0, %v1573
  %v1575 = vpop.f32.mrb[0].mxu0
  %v1576 = vpop.f32.mrb[0].mxu0
  %v1577 = vadd.f32 0.0, %v1576
  %v1578 = vpop.f32.mrb[0].mxu0
  %1579 = vmatprep.mubr.bf16.mxu0 0
  %1580 = vmatmul.mubr.bf16.gmra.mrb[0].mxu0 %v1029
  %v1581 = vpop.f32.mrb[0].mxu0
  %v1582 = vadd.f32 0.0, %v1581
  %v1583 = vpop.f32.mrb[0].mxu0
  %v1584 = vpop.f32.mrb[0].mxu0
  %v1585 = vadd.f32 0.0, %v1584
  %v1586 = vpop.f32.mrb[0].mxu0
  %1587 = vmatprep.mubr.bf16.mxu0 0
  %1588 = vmatmul.mubr.bf16.gmra.mrb[0].mxu0 %v1032
  %v1589 = vpop.f32.mrb[0].mxu0
  %v1590 = vadd.f32 0.0, %v1589
  %v1591 = vpop.f32.mrb[0].mxu0
  %v1592 = vpop.f32.mrb[0].mxu0
  %v1593 = vadd.f32 0.0, %v1592
  %v1594 = vpop.f32.mrb[0].mxu0
  %1595 = vmatprep.mubr.bf16.mxu0 0
  %1596 = vmatmul.mubr.bf16.gmra.mrb[0].mxu0 %v1035
  %v1597 = vpop.f32.mrb[0].mxu0
  %v1598 = vadd.f32 0.0, %v1597
  %v1599 = vpop.f32.mrb[0].mxu0
  %v1600 = vpop.f32.mrb[0].mxu0
  %v1601 = vadd.f32 0.0, %v1600
  %v1602 = vpop.f32.mrb[0].mxu0
  %1603 = vmatprep.mubr.bf16.mxu0 0
  %1604 = vmatmul.mubr.bf16.gmra.mrb[0].mxu0 %v1038
  %v1605 = vpop.f32.mrb[0].mxu0
  %v1606 = vadd.f32 0.0, %v1605
  %v1607 = vpop.f32.mrb[0].mxu0
  %v1608 = vpop.f32.mrb[0].mxu0
  %v1609 = vadd.f32 0.0, %v1608
  %v1610 = vpop.f32.mrb[0].mxu0
  %1611 = vmatprep.mubr.bf16.mxu0 0
  %1612 = vmatmul.mubr.bf16.gmra.mrb[0].mxu0 %v1041
  %v1613 = vpop.f32.mrb[0].mxu0
  %v1614 = vadd.f32 0.0, %v1613
  %v1615 = vpop.f32.mrb[0].mxu0
  %v1616 = vpop.f32.mrb[0].mxu0
  %v1617 = vadd.f32 0.0, %v1616
  %v1618 = vpop.f32.mrb[0].mxu0
  %1619 = vmatprep.mubr.bf16.mxu0 0
  %1620 = vmatmul.mubr.bf16.gmra.mrb[0].mxu0 %v1044
  %v1621 = vpop.f32.mrb[0].mxu0
  %v1622 = vadd.f32 0.0, %v1621
  %v1623 = vpop.f32.mrb[0].mxu0
  %v1624 = vpop.f32.mrb[0].mxu0
  %v1625 = vadd.f32 0.0, %v1624
  %v1626 = vpop.f32.mrb[0].mxu0
  %1627 = vmatprep.mubr.bf16.mxu0 0
  %1628 = vmatmul.mubr.bf16.gmra.mrb[0].mxu0 %v1047
  %v1629 = vpop.f32.mrb[0].mxu0
  %v1630 = vadd.f32 0.0, %v1629
  %v1631 = vpop.f32.mrb[0].mxu0
  %v1632 = vpop.f32.mrb[0].mxu0
  %v1633 = vadd.f32 0.0, %v1632
  %v1634 = vpop.f32.mrb[0].mxu0
  %1635 = vmatprep.mubr.bf16.mxu0 0
  %1636 = vmatmul.mubr.bf16.gmra.mrb[0].mxu0 %v1050
  %v1637 = vpop.f32.mrb[0].mxu0
  %v1638 = vadd.f32 0.0, %v1637
  %v1639 = vpop.f32.mrb[0].mxu0
  %v1640 = vpop.f32.mrb[0].mxu0
  %v1641 = vadd.f32 0.0, %v1640
  %v1642 = vpop.f32.mrb[0].mxu0
  %1643 = vmatprep.mubr.bf16.mxu0 0
  %1644 = vmatmul.mubr.bf16.gmra.mrb[0].mxu0 %v1053
  %v1645 = vpop.f32.mrb[0].mxu0
  %v1646 = vadd.f32 0.0, %v1645
  %v1647 = vpop.f32.mrb[0].mxu0
  %v1648 = vpop.f32.mrb[0].mxu0
  %v1649 = vadd.f32 0.0, %v1648
  %v1650 = vpop.f32.mrb[0].mxu0
  %1651 = vmatprep.mubr.bf16.mxu0 0
  %1652 = vmatmul.mubr.bf16.gmra.mrb[0].mxu0 %v1056
  %v1653 = vpop.f32.mrb[0].mxu0
  %v1654 = vadd.f32 0.0, %v1653
  %v1655 = vpop.f32.mrb[0].mxu0
  %v1656 = vpop.f32.mrb[0].mxu0
  %v1657 = vadd.f32 0.0, %v1656
  %v1658 = vpop.f32.mrb[0].mxu0
  %1659 = vmatprep.mubr.bf16.mxu0 0
  %1660 = vmatmul.mubr.bf16.gmra.mrb[0].mxu0 %v1059
  %v1661 = vpop.f32.mrb[0].mxu0
  %v1662 = vadd.f32 0.0, %v1661
  %v1663 = vpop.f32.mrb[0].mxu0
  %v1664 = vpop.f32.mrb[0].mxu0
  %v1665 = vadd.f32 0.0, %v1664
  %v1666 = vpop.f32.mrb[0].mxu0
  %1667 = vmatprep.mubr.bf16.mxu0 0
  %1668 = vmatmul.mubr.bf16.gmra.mrb[0].mxu0 %v1062
  %v1669 = vpop.f32.mrb[0].mxu0
  %v1670 = vadd.f32 0.0, %v1669
  %v1671 = vpop.f32.mrb[0].mxu0
  %v1672 = vpop.f32.mrb[0].mxu0
  %v1673 = vadd.f32 0.0, %v1672
  %v1674 = vpop.f32.mrb[0].mxu0
  %1675 = vmatprep.mubr.bf16.mxu0 0
  %1676 = vmatmul.mubr.bf16.gmra.mrb[0].mxu0 %v1065
  %v1677 = vpop.f32.mrb[0].mxu0
  %v1678 = vadd.f32 0.0, %v1677
  %v1679 = vpop.f32.mrb[0].mxu0
  %v1680 = vpop.f32.mrb[0].mxu0
  %v1681 = vadd.f32 0.0, %v1680
  %v1682 = vpop.f32.mrb[0].mxu0
  %1683 = vmatprep.mubr.bf16.mxu0 0
  %1684 = vmatmul.mubr.bf16.gmra.mrb[0].mxu0 %v1068
  %v1685 = vpop.f32.mrb[0].mxu0
  %v1686 = vadd.f32 0.0, %v1685
  %v1687 = vpop.f32.mrb[0].mxu0
  %v1688 = vpop.f32.mrb[0].mxu0
  %v1689 = vadd.f32 0.0, %v1688
  %v1690 = vpop.f32.mrb[0].mxu0
  %1691 = vmatprep.mubr.bf16.mxu0 0
  %1692 = vmatmul.mubr.bf16.gmra.mrb[0].mxu0 %v1071
  %v1693 = vpop.f32.mrb[0].mxu0
  %v1694 = vadd.f32 0.0, %v1693
  %v1695 = vpop.f32.mrb[0].mxu0
  %v1696 = vpop.f32.mrb[0].mxu0
  %v1697 = vadd.f32 0.0, %v1696
  %v1698 = vpop.f32.mrb[0].mxu0
  %1699 = vmatprep.mubr.bf16.mxu0 0
  %1700 = vmatmul.mubr.bf16.gmra.mrb[0].mxu0 %v1074
  %v1701 = vpop.f32.mrb[0].mxu0
  %v1702 = vadd.f32 0.0, %v1701
  %v1703 = vpop.f32.mrb[0].mxu0
  %v1704 = vpop.f32.mrb[0].mxu0
  %v1705 = vadd.f32 0.0, %v1704
  %v1706 = vpop.f32.mrb[0].mxu0
  %1707 = vmatprep.mubr.bf16.mxu0 0
  %1708 = vmatmul.mubr.bf16.gmra.mrb[0].mxu0 %v1077
  %v1709 = vpop.f32.mrb[0].mxu0
  %v1710 = vadd.f32 0.0, %v1709
  %v1711 = vpop.f32.mrb[0].mxu0
  %v1712 = vpop.f32.mrb[0].mxu0
  %v1713 = vadd.f32 0.0, %v1712
  %v1714 = vpop.f32.mrb[0].mxu0
  %1715 = vmatprep.mubr.bf16.mxu0 0
  %1716 = vmatmul.mubr.bf16.gmra.mrb[0].mxu0 %v1080
  %v1717 = vpop.f32.mrb[0].mxu0
  %v1718 = vadd.f32 0.0, %v1717
  %v1719 = vpop.f32.mrb[0].mxu0
  %v1720 = vpop.f32.mrb[0].mxu0
  %v1721 = vadd.f32 0.0, %v1720
  %v1722 = vpop.f32.mrb[0].mxu0
  %1723 = vmatprep.mubr.bf16.mxu0 0
  %1724 = vmatmul.mubr.bf16.gmra.mrb[0].mxu0 %v1083
  %v1725 = vpop.f32.mrb[0].mxu0
  %v1726 = vadd.f32 0.0, %v1725
  %v1727 = vpop.f32.mrb[0].mxu0
  %v1728 = vpop.f32.mrb[0].mxu0
  %v1729 = vadd.f32 0.0, %v1728
  %v1730 = vpop.f32.mrb[0].mxu0
  %1731 = vmatprep.mubr.bf16.mxu0 0
  %1732 = vmatmul.mubr.bf16.gmra.mrb[0].mxu0 %v1086
  %v1733 = vpop.f32.mrb[0].mxu0
  %v1734 = vadd.f32 0.0, %v1733
  %v1735 = vpop.f32.mrb[0].mxu0
  %v1736 = vpop.f32.mrb[0].mxu0
  %v1737 = vadd.f32 0.0, %v1736
  %v1738 = vpop.f32.mrb[0].mxu0
  %1739 = vmatprep.mubr.bf16.mxu0 0
  %1740 = vmatmul.mubr.bf16.gmra.mrb[0].mxu0 %v1089
  %v1741 = vpop.f32.mrb[0].mxu0
  %v1742 = vadd.f32 0.0, %v1741
  %v1743 = vpop.f32.mrb[0].mxu0
  %v1744 = vpop.f32.mrb[0].mxu0
  %v1745 = vadd.f32 0.0, %v1744
  %v1746 = vpop.f32.mrb[0].mxu0
  %1747 = vmatprep.mubr.bf16.mxu0 0
  %1748 = vmatmul.mubr.bf16.gmra.mrb[0].mxu0 %v1092
  %v1749 = vpop.f32.mrb[0].mxu0
  %v1750 = vadd.f32 0.0, %v1749
  %v1751 = vpop.f32.mrb[0].mxu0
  %v1752 = vpop.f32.mrb[0].mxu0
  %v1753 = vadd.f32 0.0, %v1752
  %v1754 = vpop.f32.mrb[0].mxu0
  %1755 = vmatprep.mubr.bf16.mxu0 0
  %1756 = vmatmul.mubr.bf16.gmra.mrb[0].mxu0 %v1095
  %v1757 = vpop.f32.mrb[0].mxu0
  %v1758 = vadd.f32 0.0, %v1757
  %v1759 = vpop.f32.mrb[0].mxu0
  %v1760 = vpop.f32.mrb[0].mxu0
  %v1761 = vadd.f32 0.0, %v1760
  %v1762 = vpop.f32.mrb[0].mxu0
  %1763 = vmatprep.mubr.bf16.mxu0 0
  %1764 = vmatmul.mubr.bf16.gmra.mrb[0].mxu0 %v1098
  %v1765 = vpop.f32.mrb[0].mxu0
  %v1766 = vadd.f32 0.0, %v1765
  %v1767 = vpop.f32.mrb[0].mxu0
  %v1768 = vpop.f32.mrb[0].mxu0
  %v1769 = vadd.f32 0.0, %v1768
  %v1770 = vpop.f32.mrb[0].mxu0
  %1771 = vmatprep.mubr.bf16.mxu0 0
  %1772 = vmatmul.mubr.bf16.gmra.mrb[0].mxu0 %v1101
  %v1773 = vpop.f32.mrb[0].mxu0
  %v1774 = vadd.f32 0.0, %v1773
  %v1775 = vpop.f32.mrb[0].mxu0
  %v1776 = vpop.f32.mrb[0].mxu0
  %v1777 = vadd.f32 0.0, %v1776
  %v1778 = vpop.f32.mrb[0].mxu0
  %1779 = vmatprep.mubr.bf16.mxu0 0
  %1780 = vmatmul.mubr.bf16.gmra.mrb[0].mxu0 %v1104
  %v1781 = vpop.f32.mrb[0].mxu0
  %v1782 = vadd.f32 0.0, %v1781
  %v1783 = vpop.f32.mrb[0].mxu0
  %v1784 = vpop.f32.mrb[0].mxu0
  %v1785 = vadd.f32 0.0, %v1784
  %v1786 = vpop.f32.mrb[0].mxu0
  %1787 = vmatprep.mubr.bf16.mxu0 0
  %1788 = vmatmul.mubr.bf16.gmra.mrb[0].mxu0 %v1107
  %v1789 = vpop.f32.mrb[0].mxu0
  %v1790 = vadd.f32 0.0, %v1789
  %v1791 = vpop.f32.mrb[0].mxu0
  %v1792 = vpop.f32.mrb[0].mxu0
  %v1793 = vadd.f32 0.0, %v1792
  %v1794 = vpop.f32.mrb[0].mxu0
  %1795 = vmatprep.mubr.bf16.mxu0 0
  %1796 = vmatmul.mubr.bf16.gmra.mrb[0].mxu0 %v1110
  %v1797 = vpop.f32.mrb[0].mxu0
  %v1798 = vadd.f32 0.0, %v1797
  %v1799 = vpop.f32.mrb[0].mxu0
  %v1800 = vpop.f32.mrb[0].mxu0
  %v1801 = vadd.f32 0.0, %v1800
  %v1802 = vpop.f32.mrb[0].mxu0
  %1803 = vmatprep.mubr.bf16.mxu0 0
  %1804 = vmatmul.mubr.bf16.gmra.mrb[0].mxu0 %v1113
  %v1805 = vpop.f32.mrb[0].mxu0
  %v1806 = vadd.f32 0.0, %v1805
  %v1807 = vpop.f32.mrb[0].mxu0
  %v1808 = vpop.f32.mrb[0].mxu0
  %v1809 = vadd.f32 0.0, %v1808
  %v1810 = vpop.f32.mrb[0].mxu0
  %1811 = vmatprep.mubr.bf16.mxu0 0
  %1812 = vmatmul.mubr.bf16.gmra.mrb[0].mxu0 %v1116
  %v1813 = vpop.f32.mrb[0].mxu0
  %v1814 = vadd.f32 0.0, %v1813
  %v1815 = vpop.f32.mrb[0].mxu0
  %v1816 = vpop.f32.mrb[0].mxu0
  %v1817 = vadd.f32 0.0, %v1816
  %v1818 = vpop.f32.mrb[0].mxu0
  %1819 = vmatprep.mubr.bf16.mxu0 0
  %1820 = vmatmul.mubr.bf16.gmra.mrb[0].mxu0 %v1119
  %v1821 = vpop.f32.mrb[0].mxu0
  %v1822 = vadd.f32 0.0, %v1821
  %v1823 = vpop.f32.mrb[0].mxu0
  %v1824 = vpop.f32.mrb[0].mxu0
  %v1825 = vadd.f32 0.0, %v1824
  %v1826 = vpop.f32.mrb[0].mxu0
  %1827 = vmatprep.mubr.bf16.mxu0 0
  %1828 = vmatmul.mubr.bf16.gmra.mrb[0].mxu0 %v1122
  %v1829 = vpop.f32.mrb[0].mxu0
  %v1830 = vadd.f32 0.0, %v1829
  %v1831 = vpop.f32.mrb[0].mxu0
  %v1832 = vpop.f32.mrb[0].mxu0
  %v1833 = vadd.f32 0.0, %v1832
  %v1834 = vpop.f32.mrb[0].mxu0
  %1835 = vmatprep.mubr.bf16.mxu0 0
  %1836 = vmatmul.mubr.bf16.gmra.mrb[0].mxu0 %v1125
  %v1837 = vpop.f32.mrb[0].mxu0
  %v1838 = vadd.f32 0.0, %v1837
  %v1839 = vpop.f32.mrb[0].mxu0
  %v1840 = vpop.f32.mrb[0].mxu0
  %v1841 = vadd.f32 0.0, %v1840
  %v1842 = vpop.f32.mrb[0].mxu0
  %1843 = vmatprep.mubr.bf16.mxu0 0
  %1844 = vmatmul.mubr.bf16.gmra.mrb[0].mxu0 %v1128
  %v1845 = vpop.f32.mrb[0].mxu0
  %v1846 = vadd.f32 0.0, %v1845
  %v1847 = vpop.f32.mrb[0].mxu0
  %v1848 = vpop.f32.mrb[0].mxu0
  %v1849 = vadd.f32 0.0, %v1848
  %v1850 = vpop.f32.mrb[0].mxu0
  %1851 = vmatprep.mubr.bf16.mxu0 0
  %1852 = vmatmul.mubr.bf16.gmra.mrb[0].mxu0 %v1131
  %v1853 = vpop.f32.mrb[0].mxu0
  %v1854 = vadd.f32 0.0, %v1853
  %v1855 = vpop.f32.mrb[0].mxu0
  %v1856 = vpop.f32.mrb[0].mxu0
  %v1857 = vadd.f32 0.0, %v1856
  %v1858 = vpop.f32.mrb[0].mxu0
  %1859 = vmatprep.mubr.bf16.mxu0 0
  %1860 = vmatmul.mubr.bf16.gmra.mrb[0].mxu0 %v1134
  %v1861 = vpop.f32.mrb[0].mxu0
  %v1862 = vadd.f32 0.0, %v1861
  %v1863 = vpop.f32.mrb[0].mxu0
  %v1864 = vpop.f32.mrb[0].mxu0
  %v1865 = vadd.f32 0.0, %v1864
  %v1866 = vpop.f32.mrb[0].mxu0
  %1867 = vmatprep.mubr.bf16.mxu0 0
  %1868 = vmatmul.mubr.bf16.gmra.mrb[0].mxu0 %v1137
  %v1869 = vpop.f32.mrb[0].mxu0
  %v1870 = vadd.f32 0.0, %v1869
  %v1871 = vpop.f32.mrb[0].mxu0
  %v1872 = vpop.f32.mrb[0].mxu0
  %v1873 = vadd.f32 0.0, %v1872
  %v1874 = vpop.f32.mrb[0].mxu0
  %1875 = vmatprep.mubr.bf16.mxu0 0
  %1876 = vmatmul.mubr.bf16.gmra.mrb[0].mxu0 %v1140
  %v1877 = vpop.f32.mrb[0].mxu0
  %v1878 = vadd.f32 0.0, %v1877
  %v1879 = vpop.f32.mrb[0].mxu0
  %v1880 = vpop.f32.mrb[0].mxu0
  %v1881 = vadd.f32 0.0, %v1880
  %v1882 = vpop.f32.mrb[0].mxu0
  %1883 = vmatprep.mubr.bf16.mxu0 0
  %1884 = vmatmul.mubr.bf16.gmra.mrb[0].mxu0 %v1143
  %v1885 = vpop.f32.mrb[0].mxu0
  %v1886 = vadd.f32 0.0, %v1885
  %v1887 = vpop.f32.mrb[0].mxu0
  %v1888 = vpop.f32.mrb[0].mxu0
  %v1889 = vadd.f32 0.0, %v1888
  %v1890 = vpop.f32.mrb[0].mxu0
  %1891 = vmatprep.mubr.bf16.mxu0 0
  %1892 = vmatmul.mubr.bf16.gmra.mrb[0].mxu0 %v1146
  %v1893 = vpop.f32.mrb[0].mxu0
  %v1894 = vadd.f32 0.0, %v1893
  %v1895 = vpop.f32.mrb[0].mxu0
  %v1896 = vpop.f32.mrb[0].mxu0
  %v1897 = vadd.f32 0.0, %v1896
  %v1898 = vpop.f32.mrb[0].mxu0
  %1899 = vmatprep.mubr.bf16.mxu0 0
  %1900 = vmatmul.mubr.bf16.gmra.mrb[0].mxu0 %v1149
  %v1901 = vpop.f32.mrb[0].mxu0
  %v1902 = vadd.f32 0.0, %v1901
  %v1903 = vpop.f32.mrb[0].mxu0
  %v1904 = vpop.f32.mrb[0].mxu0
  %v1905 = vadd.f32 0.0, %v1904
  %v1906 = vpop.f32.mrb[0].mxu0
  %1907 = vmatprep.mubr.bf16.mxu0 0
  %1908 = vmatmul.mubr.bf16.gmra.mrb[0].mxu0 %v1152
  %v1909 = vpop.f32.mrb[0].mxu0
  %v1910 = vadd.f32 0.0, %v1909
  %v1911 = vpop.f32.mrb[0].mxu0
  %v1912 = vpop.f32.mrb[0].mxu0
  %v1913 = vadd.f32 0.0, %v1912
  %v1914 = vpop.f32.mrb[0].mxu0
  %1915 = vmatprep.mubr.bf16.mxu0 0
  %1916 = vmatmul.mubr.bf16.gmra.mrb[0].mxu0 %v1155
  %v1917 = vpop.f32.mrb[0].mxu0
  %v1918 = vadd.f32 0.0, %v1917
  %v1919 = vpop.f32.mrb[0].mxu0
  %v1920 = vpop.f32.mrb[0].mxu0
  %v1921 = vadd.f32 0.0, %v1920
  %v1922 = vpop.f32.mrb[0].mxu0
  %1923 = vmatprep.mubr.bf16.mxu0 0
  %1924 = vmatmul.mubr.bf16.gmra.mrb[0].mxu0 %v1158
  %v1925 = vpop.f32.mrb[0].mxu0
  %v1926 = vadd.f32 0.0, %v1925
  %v1927 = vpop.f32.mrb[0].mxu0
  %v1928 = vpop.f32.mrb[0].mxu0
  %v1929 = vadd.f32 0.0, %v1928
  %v1930 = vpop.f32.mrb[0].mxu0
  %1931 = vmatprep.mubr.bf16.mxu0 0
  %1932 = vmatmul.mubr.bf16.gmra.mrb[0].mxu0 %v1161
  %v1933 = vpop.f32.mrb[0].mxu0
  %v1934 = vadd.f32 0.0, %v1933
  %v1935 = vpop.f32.mrb[0].mxu0
  %v1936 = vpop.f32.mrb[0].mxu0
  %v1937 = vadd.f32 0.0, %v1936
  %v1938 = vpop.f32.mrb[0].mxu0
  %1939 = vmatprep.mubr.bf16.mxu0 0
  %1940 = vmatmul.mubr.bf16.gmra.mrb[0].mxu0 %v1164
  %v1941 = vpop.f32.mrb[0].mxu0
  %v1942 = vadd.f32 0.0, %v1941
  %v1943 = vpop.f32.mrb[0].mxu0
  %v1944 = vpop.f32.mrb[0].mxu0
  %v1945 = vadd.f32 0.0, %v1944
  %v1946 = vpop.f32.mrb[0].mxu0
  %1947 = vmatprep.mubr.bf16.mxu0 0
  %1948 = vmatmul.mubr.bf16.gmra.mrb[0].mxu0 %v1167
  %v1949 = vpop.f32.mrb[0].mxu0
  %v1950 = vadd.f32 0.0, %v1949
  %v1951 = vpop.f32.mrb[0].mxu0
  %v1952 = vpop.f32.mrb[0].mxu0
  %v1953 = vadd.f32 0.0, %v1952
  %v1954 = vpop.f32.mrb[0].mxu0
  %1955 = vmatprep.mubr.bf16.mxu0 0
  %1956 = vmatmul.mubr.bf16.gmra.mrb[0].mxu0 %v1170
  %v1957 = vpop.f32.mrb[0].mxu0
  %v1958 = vadd.f32 0.0, %v1957
  %v1959 = vpop.f32.mrb[0].mxu0
  %v1960 = vpop.f32.mrb[0].mxu0
  %v1961 = vadd.f32 0.0, %v1960
  %v1962 = vpop.f32.mrb[0].mxu0
  %1963 = vmatprep.mubr.bf16.mxu0 0
  %1964 = vmatmul.mubr.bf16.gmra.mrb[0].mxu0 %v1173
  %v1965 = vpop.f32.mrb[0].mxu0
  %v1966 = vadd.f32 0.0, %v1965
  %v1967 = vpop.f32.mrb[0].mxu0
  %v1968 = vpop.f32.mrb[0].mxu0
  %v1969 = vadd.f32 0.0, %v1968
  %v1970 = vpop.f32.mrb[0].mxu0
  %1971 = vmatprep.mubr.bf16.mxu0 0
  %1972 = vmatmul.mubr.bf16.gmra.mrb[0].mxu0 %v1176
  %v1973 = vpop.f32.mrb[0].mxu0
  %v1974 = vadd.f32 0.0, %v1973
  %v1975 = vpop.f32.mrb[0].mxu0
  %v1976 = vpop.f32.mrb[0].mxu0
  %v1977 = vadd.f32 0.0, %v1976
  %v1978 = vpop.f32.mrb[0].mxu0
  %1979 = vmatprep.mubr.bf16.mxu0 0
  %1980 = vmatmul.mubr.bf16.gmra.mrb[0].mxu0 %v1179
  %v1981 = vpop.f32.mrb[0].mxu0
  %v1982 = vadd.f32 0.0, %v1981
  %v1983 = vpop.f32.mrb[0].mxu0
  %v1984 = vpop.f32.mrb[0].mxu0
  %v1985 = vadd.f32 0.0, %v1984
  %v1986 = vpop.f32.mrb[0].mxu0
  %1987 = vmatprep.mubr.bf16.mxu0 0
  %1988 = vmatmul.mubr.bf16.gmra.mrb[0].mxu0 %v1182
  %v1989 = vpop.f32.mrb[0].mxu0
  %v1990 = vadd.f32 0.0, %v1989
  %v1991 = vpop.f32.mrb[0].mxu0
  %v1992 = vpop.f32.mrb[0].mxu0
  %v1993 = vadd.f32 0.0, %v1992
  %v1994 = vpop.f32.mrb[0].mxu0
  %1995 = vmatprep.mubr.bf16.mxu0 0
  %1996 = vmatmul.mubr.bf16.gmra.mrb[0].mxu0 %v1185
  %v1997 = vpop.f32.mrb[0].mxu0
  %v1998 = vadd.f32 0.0, %v1997
  %v1999 = vpop.f32.mrb[0].mxu0
  %v2000 = vpop.f32.mrb[0].mxu0
  %v2001 = vadd.f32 0.0, %v2000
  %v2002 = vpop.f32.mrb[0].mxu0
  %2003 = vmatprep.mubr.bf16.mxu0 0
  %2004 = vmatmul.mubr.bf16.gmra.mrb[0].mxu0 %v1188
  %v2005 = vpop.f32.mrb[0].mxu0
  %v2006 = vadd.f32 0.0, %v2005
  %v2007 = vpop.f32.mrb[0].mxu0
  %v2008 = vpop.f32.mrb[0].mxu0
  %v2009 = vadd.f32 0.0, %v2008
  %v2010 = vpop.f32.mrb[0].mxu0
  %2011 = vmatprep.mubr.bf16.mxu0 0
  %2012 = vmatmul.mubr.bf16.gmra.mrb[0].mxu0 %v1191
  %v2013 = vpop.f32.mrb[0].mxu0
  %v2014 = vadd.f32 0.0, %v2013
  %v2015 = vpop.f32.mrb[0].mxu0
  %v2016 = vpop.f32.mrb[0].mxu0
  %v2017 = vadd.f32 0.0, %v2016
  %v2018 = vpop.f32.mrb[0].mxu0
  %2019 = vmatprep.mubr.bf16.mxu0 0
  %2020 = vmatmul.mubr.bf16.gmra.mrb[0].mxu0 %v1194
  %v2021 = vpop.f32.mrb[0].mxu0
  %v2022 = vadd.f32 0.0, %v2021
  %v2023 = vpop.f32.mrb[0].mxu0
  %v2024 = vpop.f32.mrb[0].mxu0
  %v2025 = vadd.f32 0.0, %v2024
  %v2026 = vpop.f32.mrb[0].mxu0
  %2027 = vmatprep.mubr.bf16.mxu0 0
  %2028 = vmatmul.mubr.bf16.gmra.mrb[0].mxu0 %v1197
  %v2029 = vpop.f32.mrb[0].mxu0
  %v2030 = vadd.f32 0.0, %v2029
  %v2031 = vpop.f32.mrb[0].mxu0
  %v2032 = vpop.f32.mrb[0].mxu0
  %v2033 = vadd.f32 0.0, %v2032
  %v2034 = vpop.f32.mrb[0].mxu0
  %2035 = vmatprep.mubr.bf16.mxu0 0
  %2036 = vmatmul.mubr.bf16.gmra.mrb[0].mxu0 %v1200
  %v2037 = vpop.f32.mrb[0].mxu0
  %v2038 = vadd.f32 0.0, %v2037
  %v2039 = vpop.f32.mrb[0].mxu0
  %v2040 = vpop.f32.mrb[0].mxu0
  %v2041 = vadd.f32 0.0, %v2040
  %v2042 = vpop.f32.mrb[0].mxu0
  %2043 = vmatprep.mubr.bf16.mxu0 0
  %2044 = vmatmul.mubr.bf16.gmra.mrb[0].mxu0 %v1203
  %v2045 = vpop.f32.mrb[0].mxu0
  %v2046 = vadd.f32 0.0, %v2045
  %v2047 = vpop.f32.mrb[0].mxu0
  %v2048 = vpop.f32.mrb[0].mxu0
  %v2049 = vadd.f32 0.0, %v2048
  %v2050 = vpop.f32.mrb[0].mxu0
  %2051 = vmatprep.mubr.bf16.mxu0 0
  %2052 = vmatmul.mubr.bf16.gmra.mrb[0].mxu0 %v1206
  %v2053 = vpop.f32.mrb[0].mxu0
  %v2054 = vadd.f32 0.0, %v2053
  %v2055 = vpop.f32.mrb[0].mxu0
  %v2056 = vpop.f32.mrb[0].mxu0
  %v2057 = vadd.f32 0.0, %v2056
  %v2058 = vpop.f32.mrb[0].mxu0
  %2059 = vmatprep.mubr.bf16.mxu0 0
  %2060 = vmatmul.mubr.bf16.gmra.mrb[0].mxu0 %v1209
  %v2061 = vpop.f32.mrb[0].mxu0
  %v2062 = vadd.f32 0.0, %v2061
  %v2063 = vpop.f32.mrb[0].mxu0
  %v2064 = vpop.f32.mrb[0].mxu0
  %v2065 = vadd.f32 0.0, %v2064
  %v2066 = vpop.f32.mrb[0].mxu0
  %2067 = vmatprep.mubr.bf16.mxu0 0
  %2068 = vmatmul.mubr.bf16.gmra.mrb[0].mxu0 %v1212
  %v2069 = vpop.f32.mrb[0].mxu0
  %v2070 = vadd.f32 0.0, %v2069
  %v2071 = vpop.f32.mrb[0].mxu0
  %v2072 = vpop.f32.mrb[0].mxu0
  %v2073 = vadd.f32 0.0, %v2072
  %v2074 = vpop.f32.mrb[0].mxu0
  %2075 = vmatprep.mubr.bf16.mxu0 0
  %2076 = vmatmul.mubr.bf16.gmra.mrb[0].mxu0 %v1215
  %v2077 = vpop.f32.mrb[0].mxu0
  %v2078 = vadd.f32 0.0, %v2077
  %v2079 = vpop.f32.mrb[0].mxu0
  %v2080 = vpop.f32.mrb[0].mxu0
  %v2081 = vadd.f32 0.0, %v2080
  %v2082 = vpop.f32.mrb[0].mxu0
  %2083 = vmatprep.mubr.bf16.mxu0 0
  %2084 = vmatmul.mubr.bf16.gmra.mrb[0].mxu0 %v1218
  %v2085 = vpop.f32.mrb[0].mxu0
  %v2086 = vadd.f32 0.0, %v2085
  %v2087 = vpop.f32.mrb[0].mxu0
  %v2088 = vpop.f32.mrb[0].mxu0
  %v2089 = vadd.f32 0.0, %v2088
  %v2090 = vpop.f32.mrb[0].mxu0
  %2091 = vmatprep.mubr.bf16.mxu0 0
  %2092 = vmatmul.mubr.bf16.gmra.mrb[0].mxu0 %v1221
  %v2093 = vpop.f32.mrb[0].mxu0
  %v2094 = vadd.f32 0.0, %v2093
  %v2095 = vpop.f32.mrb[0].mxu0
  %v2096 = vpop.f32.mrb[0].mxu0
  %v2097 = vadd.f32 0.0, %v2096
  %v2098 = vpop.f32.mrb[0].mxu0
  %2099 = vmatprep.mubr.bf16.mxu0 0
  %2100 = vmatmul.mubr.bf16.gmra.mrb[0].mxu0 %v1224
  %v2101 = vpop.f32.mrb[0].mxu0
  %v2102 = vadd.f32 0.0, %v2101
  %v2103 = vpop.f32.mrb[0].mxu0
  %v2104 = vpop.f32.mrb[0].mxu0
  %v2105 = vadd.f32 0.0, %v2104
  %v2106 = vpop.f32.mrb[0].mxu0
  %2107 = vmatprep.mubr.bf16.mxu0 0
  %2108 = vmatmul.mubr.bf16.gmra.mrb[0].mxu0 %v1227
  %v2109 = vpop.f32.mrb[0].mxu0
  %v2110 = vadd.f32 0.0, %v2109
  %v2111 = vpop.f32.mrb[0].mxu0
  %v2112 = vpop.f32.mrb[0].mxu0
  %v2113 = vadd.f32 0.0, %v2112
  %v2114 = vpop.f32.mrb[0].mxu0
  %2115 = vmatprep.mubr.bf16.mxu0 0
  %2116 = vmatmul.mubr.bf16.gmra.mrb[0].mxu0 %v1230
  %v2117 = vpop.f32.mrb[0].mxu0
  %v2118 = vadd.f32 0.0, %v2117
  %v2119 = vpop.f32.mrb[0].mxu0
  %v2120 = vpop.f32.mrb[0].mxu0
  %v2121 = vadd.f32 0.0, %v2120
  %v2122 = vpop.f32.mrb[0].mxu0
  %2123 = vmatprep.mubr.bf16.mxu0 0
  %2124 = vmatmul.mubr.bf16.gmra.mrb[0].mxu0 %v1233
  %v2125 = vpop.f32.mrb[0].mxu0
  %v2126 = vadd.f32 0.0, %v2125
  %v2127 = vpop.f32.mrb[0].mxu0
  %v2128 = vpop.f32.mrb[0].mxu0
  %v2129 = vadd.f32 0.0, %v2128
  %v2130 = vpop.f32.mrb[0].mxu0
  %2131 = vmatprep.mubr.bf16.mxu0 0
  %2132 = vmatmul.mubr.bf16.gmra.mrb[0].mxu0 %v1236
  %v2133 = vpop.f32.mrb[0].mxu0
  %v2134 = vadd.f32 0.0, %v2133
  %v2135 = vpop.f32.mrb[0].mxu0
  %v2136 = vpop.f32.mrb[0].mxu0
  %v2137 = vadd.f32 0.0, %v2136
  %v2138 = vpop.f32.mrb[0].mxu0
  %2139 = vmatprep.mubr.bf16.mxu0 0
  %2140 = vmatmul.mubr.bf16.gmra.mrb[0].mxu0 %v1239
  %v2141 = vpop.f32.mrb[0].mxu0
  %v2142 = vadd.f32 0.0, %v2141
  %v2143 = vpop.f32.mrb[0].mxu0
  %v2144 = vpop.f32.mrb[0].mxu0
  %v2145 = vadd.f32 0.0, %v2144
  %v2146 = vpop.f32.mrb[0].mxu0
  %2147 = vmatprep.mubr.bf16.mxu0 0
  %2148 = vmatmul.mubr.bf16.gmra.mrb[0].mxu0 %v1242
  %v2149 = vpop.f32.mrb[0].mxu0
  %v2150 = vadd.f32 0.0, %v2149
  %v2151 = vpop.f32.mrb[0].mxu0
  %v2152 = vpop.f32.mrb[0].mxu0
  %v2153 = vadd.f32 0.0, %v2152
  %v2154 = vpop.f32.mrb[0].mxu0
  %2155 = vmatprep.mubr.bf16.mxu0 0
  %2156 = vmatmul.mubr.bf16.gmra.mrb[0].mxu0 %v1245
  %v2157 = vpop.f32.mrb[0].mxu0
  %v2158 = vadd.f32 0.0, %v2157
  %v2159 = vpop.f32.mrb[0].mxu0
  %v2160 = vpop.f32.mrb[0].mxu0
  %v2161 = vadd.f32 0.0, %v2160
  %v2162 = vpop.f32.mrb[0].mxu0
  %2163 = vmatprep.mubr.bf16.mxu0 0
  %2164 = vmatmul.mubr.bf16.gmra.mrb[0].mxu0 %v1248
  %v2165 = vpop.f32.mrb[0].mxu0
  %v2166 = vadd.f32 0.0, %v2165
  %v2167 = vpop.f32.mrb[0].mxu0
  %v2168 = vpop.f32.mrb[0].mxu0
  %v2169 = vadd.f32 0.0, %v2168
  %v2170 = vpop.f32.mrb[0].mxu0
  %2171 = vmatprep.mubr.bf16.mxu0 0
  %2172 = vmatmul.mubr.bf16.gmra.mrb[0].mxu0 %v1251
  %v2173 = vpop.f32.mrb[0].mxu0
  %v2174 = vadd.f32 0.0, %v2173
  %v2175 = vpop.f32.mrb[0].mxu0
  %v2176 = vpop.f32.mrb[0].mxu0
  %v2177 = vadd.f32 0.0, %v2176
  %v2178 = vpop.f32.mrb[0].mxu0
  %2179 = vmatprep.mubr.bf16.mxu0 0
  %2180 = vmatmul.mubr.bf16.gmra.mrb[0].mxu0 %v1254
  %v2181 = vpop.f32.mrb[0].mxu0
  %v2182 = vadd.f32 0.0, %v2181
  %v2183 = vpop.f32.mrb[0].mxu0
  %v2184 = vpop.f32.mrb[0].mxu0
  %v2185 = vadd.f32 0.0, %v2184
  %v2186 = vpop.f32.mrb[0].mxu0
  %2187 = vmatprep.mubr.bf16.mxu0 0
  %2188 = vmatmul.mubr.bf16.gmra.mrb[0].mxu0 %v1257
  %v2189 = vpop.f32.mrb[0].mxu0
  %v2190 = vadd.f32 0.0, %v2189
  %v2191 = vpop.f32.mrb[0].mxu0
  %v2192 = vpop.f32.mrb[0].mxu0
  %v2193 = vadd.f32 0.0, %v2192
  %v2194 = vpop.f32.mrb[0].mxu0
  %2195 = vmatprep.mubr.bf16.mxu0 0
  %2196 = vmatmul.mubr.bf16.gmra.mrb[0].mxu0 %v1260
  %v2197 = vpop.f32.mrb[0].mxu0
  %v2198 = vadd.f32 0.0, %v2197
  %v2199 = vpop.f32.mrb[0].mxu0
  %v2200 = vpop.f32.mrb[0].mxu0
  %v2201 = vadd.f32 0.0, %v2200
  %v2202 = vpop.f32.mrb[0].mxu0
  %2203 = vmatprep.mubr.bf16.mxu0 0
  %2204 = vmatmul.mubr.bf16.gmra.mrb[0].mxu0 %v1263
  %v2205 = vpop.f32.mrb[0].mxu0
  %v2206 = vadd.f32 0.0, %v2205
  %v2207 = vpop.f32.mrb[0].mxu0
  %v2208 = vpop.f32.mrb[0].mxu0
  %v2209 = vadd.f32 0.0, %v2208
  %v2210 = vpop.f32.mrb[0].mxu0
  %2211 = vmatprep.mubr.bf16.mxu0 0
  %2212 = vmatmul.mubr.bf16.gmra.mrb[0].mxu0 %v1266
  %v2213 = vpop.f32.mrb[0].mxu0
  %v2214 = vadd.f32 0.0, %v2213
  %v2215 = vpop.f32.mrb[0].mxu0
  %v2216 = vpop.f32.mrb[0].mxu0
  %v2217 = vadd.f32 0.0, %v2216
  %v2218 = vpop.f32.mrb[0].mxu0
  %2219 = vmatprep.mubr.bf16.mxu0 0
  %2220 = vmatmul.mubr.bf16.gmra.mrb[0].mxu0 %v1269
  %v2221 = vpop.f32.mrb[0].mxu0
  %v2222 = vadd.f32 0.0, %v2221
  %v2223 = vpop.f32.mrb[0].mxu0
  %v2224 = vpop.f32.mrb[0].mxu0
  %v2225 = vadd.f32 0.0, %v2224
  %v2226 = vpop.f32.mrb[0].mxu0
  %2227 = vmatprep.mubr.bf16.mxu0 0
  %2228 = vmatmul.mubr.bf16.gmra.mrb[0].mxu0 %v1272
  %v2229 = vpop.f32.mrb[0].mxu0
  %v2230 = vadd.f32 0.0, %v2229
  %v2231 = vpop.f32.mrb[0].mxu0
  %v2232 = vpop.f32.mrb[0].mxu0
  %v2233 = vadd.f32 0.0, %v2232
  %v2234 = vpop.f32.mrb[0].mxu0
  %2235 = vmatprep.mubr.bf16.mxu0 0
  %2236 = vmatmul.mubr.bf16.gmra.mrb[0].mxu0 %v1275
  %v2237 = vpop.f32.mrb[0].mxu0
  %v2238 = vadd.f32 0.0, %v2237
  %v2239 = vpop.f32.mrb[0].mxu0
  %v2240 = vpop.f32.mrb[0].mxu0
  %v2241 = vadd.f32 0.0, %v2240
  %v2242 = vpop.f32.mrb[0].mxu0
  %2243 = vmatprep.mubr.bf16.mxu0 0
  %2244 = vmatmul.mubr.bf16.gmra.mrb[0].mxu0 %v1278
  %v2245 = vpop.f32.mrb[0].mxu0
  %v2246 = vadd.f32 0.0, %v2245
  %v2247 = vpop.f32.mrb[0].mxu0
  %v2248 = vpop.f32.mrb[0].mxu0
  %v2249 = vadd.f32 0.0, %v2248
  %v2250 = vpop.f32.mrb[0].mxu0
  %2251 = vmatprep.mubr.bf16.mxu0 0
  %2252 = vmatmul.mubr.bf16.gmra.mrb[0].mxu0 %v1281
  %v2253 = vpop.f32.mrb[0].mxu0
  %v2254 = vadd.f32 0.0, %v2253
  %v2255 = vpop.f32.mrb[0].mxu0
  %v2256 = vpop.f32.mrb[0].mxu0
  %v2257 = vadd.f32 0.0, %v2256
  %v2258 = vpop.f32.mrb[0].mxu0
  %2259 = vmatprep.mubr.bf16.mxu0 0
  %2260 = vmatmul.mubr.bf16.gmra.mrb[0].mxu0 %v1284
  %v2261 = vpop.f32.mrb[0].mxu0
  %v2262 = vadd.f32 0.0, %v2261
  %v2263 = vpop.f32.mrb[0].mxu0
  %v2264 = vpop.f32.mrb[0].mxu0
  %v2265 = vadd.f32 0.0, %v2264
  %v2266 = vpop.f32.mrb[0].mxu0
  %2267 = vmatprep.mubr.bf16.mxu0 0
  %2268 = vmatmul.mubr.bf16.gmra.mrb[0].mxu0 %v1287
  %v2269 = vpop.f32.mrb[0].mxu0
  %v2270 = vadd.f32 0.0, %v2269
  %v2271 = vpop.f32.mrb[0].mxu0
  %v2272 = vpop.f32.mrb[0].mxu0
  %v2273 = vadd.f32 0.0, %v2272
  %v2274 = vpop.f32.mrb[0].mxu0
  %2275 = vmatprep.mubr.bf16.mxu0 0
  %2276 = vmatmul.mubr.bf16.gmra.mrb[0].mxu0 %v1290
  %v2277 = vpop.f32.mrb[0].mxu0
  %v2278 = vadd.f32 0.0, %v2277
  %v2279 = vpop.f32.mrb[0].mxu0
  %v2280 = vpop.f32.mrb[0].mxu0
  %v2281 = vadd.f32 0.0, %v2280
  %v2282 = vpop.f32.mrb[0].mxu0
  %2283 = vmatprep.mubr.bf16.mxu0 0
  %2284 = vmatmul.mubr.bf16.gmra.mrb[0].mxu0 %v1293
  %v2285 = vpop.f32.mrb[0].mxu0
  %v2286 = vadd.f32 0.0, %v2285
  %v2287 = vpop.f32.mrb[0].mxu0
  %v2288 = vpop.f32.mrb[0].mxu0
  %v2289 = vadd.f32 0.0, %v2288
  %v2290 = vpop.f32.mrb[0].mxu0
  %2291 = vmatprep.mubr.bf16.mxu0 0
  %2292 = vmatmul.mubr.bf16.gmra.mrb[0].mxu0 %v1296
  %v2293 = vpop.f32.mrb[0].mxu0
  %v2294 = vadd.f32 0.0, %v2293
  %v2295 = vpop.f32.mrb[0].mxu0
  %v2296 = vpop.f32.mrb[0].mxu0
  %v2297 = vadd.f32 0.0, %v2296
  %v2298 = vpop.f32.mrb[0].mxu0
  %2299 = vmatprep.mubr.bf16.mxu0 0
  %2300 = vmatmul.mubr.bf16.gmra.mrb[0].mxu0 %v1299
  %v2301 = vpop.f32.mrb[0].mxu0
  %v2302 = vadd.f32 0.0, %v2301
  %v2303 = vpop.f32.mrb[0].mxu0
  %v2304 = vpop.f32.mrb[0].mxu0
  %v2305 = vadd.f32 0.0, %v2304
  %v2306 = vpop.f32.mrb[0].mxu0
  %2307 = vmatprep.mubr.bf16.mxu0 0
  %2308 = vmatmul.mubr.bf16.gmra.mrb[0].mxu0 %v1302
  %v2309 = vpop.f32.mrb[0].mxu0
  %v2310 = vadd.f32 0.0, %v2309
  %v2311 = vpop.f32.mrb[0].mxu0
  %v2312 = vpop.f32.mrb[0].mxu0
  %v2313 = vadd.f32 0.0, %v2312
  %v2314 = vpop.f32.mrb[0].mxu0
  %2315 = vmatprep.mubr.bf16.mxu0 0
  %2316 = vmatmul.mubr.bf16.gmra.mrb[0].mxu0 %v1305
  %v2317 = vpop.f32.mrb[0].mxu0
  %v2318 = vadd.f32 0.0, %v2317
  %v2319 = vpop.f32.mrb[0].mxu0
  %v2320 = vpop.f32.mrb[0].mxu0
  %v2321 = vadd.f32 0.0, %v2320
  %v2322 = vpop.f32.mrb[0].mxu0
  %2323 = vmatprep.mubr.bf16.mxu0 0
  %2324 = vmatmul.mubr.bf16.gmra.mrb[0].mxu0 %v1308
  %v2325 = vpop.f32.mrb[0].mxu0
  %v2326 = vadd.f32 0.0, %v2325
  %v2327 = vpop.f32.mrb[0].mxu0
  %v2328 = vpop.f32.mrb[0].mxu0
  %v2329 = vadd.f32 0.0, %v2328
  %v2330 = vpop.f32.mrb[0].mxu0
  %2331 = vmatprep.mubr.bf16.mxu0 0
  %2332 = vmatmul.mubr.bf16.gmra.mrb[0].mxu0 %v1311
  %v2333 = vpop.f32.mrb[0].mxu0
  %v2334 = vadd.f32 0.0, %v2333
  %v2335 = vpop.f32.mrb[0].mxu0
  %v2336 = vpop.f32.mrb[0].mxu0
  %v2337 = vadd.f32 0.0, %v2336
  %v2338 = vpop.f32.mrb[0].mxu0
  %2339 = vmatprep.mubr.bf16.mxu0 0
  %2340 = vmatmul.mubr.bf16.gmra.mrb[0].mxu0 %v1314
  %v2341 = vpop.f32.mrb[0].mxu0
  %v2342 = vadd.f32 0.0, %v2341
  %v2343 = vpop.f32.mrb[0].mxu0
  %v2344 = vpop.f32.mrb[0].mxu0
  %v2345 = vadd.f32 0.0, %v2344
  %v2346 = vpop.f32.mrb[0].mxu0
  %2347 = vmatprep.mubr.bf16.mxu0 0
  %2348 = vmatmul.mubr.bf16.gmra.mrb[0].mxu0 %v1317
  %v2349 = vpop.f32.mrb[0].mxu0
  %v2350 = vadd.f32 0.0, %v2349
  %v2351 = vpop.f32.mrb[0].mxu0
  %v2352 = vpop.f32.mrb[0].mxu0
  %v2353 = vadd.f32 0.0, %v2352
  %v2354 = vpop.f32.mrb[0].mxu0
  %2355 = vmatprep.mubr.bf16.mxu0 0
  %2356 = vmatmul.mubr.bf16.gmra.mrb[0].mxu0 %v1320
  %v2357 = vpop.f32.mrb[0].mxu0
  %v2358 = vadd.f32 0.0, %v2357
  %v2359 = vpop.f32.mrb[0].mxu0
  %v2360 = vpop.f32.mrb[0].mxu0
  %v2361 = vadd.f32 0.0, %v2360
  %v2362 = vpop.f32.mrb[0].mxu0
  %2363 = vmatprep.mubr.bf16.mxu0 0
  %2364 = vmatmul.mubr.bf16.gmra.mrb[0].mxu0 %v1323
  %v2365 = vpop.f32.mrb[0].mxu0
  %v2366 = vadd.f32 0.0, %v2365
  %v2367 = vpop.f32.mrb[0].mxu0
  %v2368 = vpop.f32.mrb[0].mxu0
  %v2369 = vadd.f32 0.0, %v2368
  %v2370 = vpop.f32.mrb[0].mxu0
  %2371 = vmatprep.mubr.bf16.mxu0 0
  %2372 = vmatmul.mubr.bf16.gmra.mrb[0].mxu0 %v1326
  %v2373 = vpop.f32.mrb[0].mxu0
  %v2374 = vadd.f32 0.0, %v2373
  %v2375 = vpop.f32.mrb[0].mxu0
  %v2376 = vpop.f32.mrb[0].mxu0
  %v2377 = vadd.f32 0.0, %v2376
  %v2378 = vpop.f32.mrb[0].mxu0
  %2379 = vmatprep.mubr.bf16.mxu0 0
  %2380 = vmatmul.mubr.bf16.gmra.mrb[0].mxu0 %v1329
  %v2381 = vpop.f32.mrb[0].mxu0
  %v2382 = vadd.f32 0.0, %v2381
  %v2383 = vpop.f32.mrb[0].mxu0
  %v2384 = vpop.f32.mrb[0].mxu0
  %v2385 = vadd.f32 0.0, %v2384
  %v2386 = vpop.f32.mrb[0].mxu0
  %2387 = vdwg.mxu0
  %v2388 = vmax.f32 %v1366, %v1494
  %v2389 = vmax.f32 %v1369, %v1497
  %v2390 = vmax.f32 %v1374, %v1502
  %v2391 = vmax.f32 %v1377, %v1505
  %v2392 = vmax.f32 %v1382, %v1510
  %v2393 = vmax.f32 %v1385, %v1513
  %v2394 = vmax.f32 %v1390, %v1518
  %v2395 = vmax.f32 %v1393, %v1521
  %v2396 = vmax.f32 %v1398, %v1526
  %v2397 = vmax.f32 %v1401, %v1529
  %v2398 = vmax.f32 %v1406, %v1534
  %v2399 = vmax.f32 %v1409, %v1537
  %v2400 = vmax.f32 %v1414, %v1542
  %v2401 = vmax.f32 %v1417, %v1545
  %v2402 = vmax.f32 %v1422, %v1550
  %v2403 = vmax.f32 %v1425, %v1553
  %v2404 = vmax.f32 %v1430, %v1558
  %v2405 = vmax.f32 %v1433, %v1561
  %v2406 = vmax.f32 %v1438, %v1566
  %v2407 = vmax.f32 %v1441, %v1569
  %v2408 = vmax.f32 %v1446, %v1574
  %v2409 = vmax.f32 %v1449, %v1577
  %v2410 = vmax.f32 %v1454, %v1582
  %v2411 = vmax.f32 %v1457, %v1585
  %v2412 = vmax.f32 %v1462, %v1590
  %v2413 = vmax.f32 %v1465, %v1593
  %v2414 = vmax.f32 %v1470, %v1598
  %v2415 = vmax.f32 %v1473, %v1601
  %v2416 = vmax.f32 %v1478, %v1606
  %v2417 = vmax.f32 %v1481, %v1609
  %v2418 = vmax.f32 %v1486, %v1614
  %v2419 = vmax.f32 %v1489, %v1617
  %v2420 = vmax.f32 %v2388, %v1622
  %v2421 = vmax.f32 %v2389, %v1625
  %v2422 = vmax.f32 %v2390, %v1630
  %v2423 = vmax.f32 %v2391, %v1633
  %v2424 = vmax.f32 %v2392, %v1638
  %v2425 = vmax.f32 %v2393, %v1641
  %v2426 = vmax.f32 %v2394, %v1646
  %v2427 = vmax.f32 %v2395, %v1649
  %v2428 = vmax.f32 %v2396, %v1654
  %v2429 = vmax.f32 %v2397, %v1657
  %v2430 = vmax.f32 %v2398, %v1662
  %v2431 = vmax.f32 %v2399, %v1665
  %v2432 = vmax.f32 %v2400, %v1670
  %v2433 = vmax.f32 %v2401, %v1673
  %v2434 = vmax.f32 %v2402, %v1678
  %v2435 = vmax.f32 %v2403, %v1681
  %v2436 = vmax.f32 %v2404, %v1686
  %v2437 = vmax.f32 %v2405, %v1689
  %v2438 = vmax.f32 %v2406, %v1694
  %v2439 = vmax.f32 %v2407, %v1697
  %v2440 = vmax.f32 %v2408, %v1702
  %v2441 = vmax.f32 %v2409, %v1705
  %v2442 = vmax.f32 %v2410, %v1710
  %v2443 = vmax.f32 %v2411, %v1713
  %v2444 = vmax.f32 %v2412, %v1718
  %v2445 = vmax.f32 %v2413, %v1721
  %v2446 = vmax.f32 %v2414, %v1726
  %v2447 = vmax.f32 %v2415, %v1729
  %v2448 = vmax.f32 %v2416, %v1734
  %v2449 = vmax.f32 %v2417, %v1737
  %v2450 = vmax.f32 %v2418, %v1742
  %v2451 = vmax.f32 %v2419, %v1745
  %v2452 = vmax.f32 %v2420, %v1750
  %v2453 = vmax.f32 %v2421, %v1753
  %v2454 = vmax.f32 %v2422, %v1758
  %v2455 = vmax.f32 %v2423, %v1761
  %v2456 = vmax.f32 %v2424, %v1766
  %v2457 = vmax.f32 %v2425, %v1769
  %v2458 = vmax.f32 %v2426, %v1774
  %v2459 = vmax.f32 %v2427, %v1777
  %v2460 = vmax.f32 %v2428, %v1782
  %v2461 = vmax.f32 %v2429, %v1785
  %v2462 = vmax.f32 %v2430, %v1790
  %v2463 = vmax.f32 %v2431, %v1793
  %v2464 = vmax.f32 %v2432, %v1798
  %v2465 = vmax.f32 %v2433, %v1801
  %v2466 = vmax.f32 %v2434, %v1806
  %v2467 = vmax.f32 %v2435, %v1809
  %v2468 = vmax.f32 %v2436, %v1814
  %v2469 = vmax.f32 %v2437, %v1817
  %v2470 = vmax.f32 %v2438, %v1822
  %v2471 = vmax.f32 %v2439, %v1825
  %v2472 = vmax.f32 %v2440, %v1830
  %v2473 = vmax.f32 %v2441, %v1833
  %v2474 = vmax.f32 %v2442, %v1838
  %v2475 = vmax.f32 %v2443, %v1841
  %v2476 = vmax.f32 %v2444, %v1846
  %v2477 = vmax.f32 %v2445, %v1849
  %v2478 = vmax.f32 %v2446, %v1854
  %v2479 = vmax.f32 %v2447, %v1857
  %v2480 = vmax.f32 %v2448, %v1862
  %v2481 = vmax.f32 %v2449, %v1865
  %v2482 = vmax.f32 %v2450, %v1870
  %v2483 = vmax.f32 %v2451, %v1873
  %v2484 = vmax.f32 %v2452, %v1878
  %v2485 = vmax.f32 %v2453, %v1881
  %v2486 = vmax.f32 %v2454, %v1886
  %v2487 = vmax.f32 %v2455, %v1889
  %v2488 = vmax.f32 %v2456, %v1894
  %v2489 = vmax.f32 %v2457, %v1897
  %v2490 = vmax.f32 %v2458, %v1902
  %v2491 = vmax.f32 %v2459, %v1905
  %v2492 = vmax.f32 %v2460, %v1910
  %v2493 = vmax.f32 %v2461, %v1913
  %v2494 = vmax.f32 %v2462, %v1918
  %v2495 = vmax.f32 %v2463, %v1921
  %v2496 = vmax.f32 %v2464, %v1926
  %v2497 = vmax.f32 %v2465, %v1929
  %v2498 = vmax.f32 %v2466, %v1934
  %v2499 = vmax.f32 %v2467, %v1937
  %v2500 = vmax.f32 %v2468, %v1942
  %v2501 = vmax.f32 %v2469, %v1945
  %v2502 = vmax.f32 %v2470, %v1950
  %v2503 = vmax.f32 %v2471, %v1953
  %v2504 = vmax.f32 %v2472, %v1958
  %v2505 = vmax.f32 %v2473, %v1961
  %v2506 = vmax.f32 %v2474, %v1966
  %v2507 = vmax.f32 %v2475, %v1969
  %v2508 = vmax.f32 %v2476, %v1974
  %v2509 = vmax.f32 %v2477, %v1977
  %v2510 = vmax.f32 %v2478, %v1982
  %v2511 = vmax.f32 %v2479, %v1985
  %v2512 = vmax.f32 %v2480, %v1990
  %v2513 = vmax.f32 %v2481, %v1993
  %v2514 = vmax.f32 %v2482, %v1998
  %v2515 = vmax.f32 %v2483, %v2001
  %v2516 = vmax.f32 %v2484, %v2006
  %v2517 = vmax.f32 %v2485, %v2009
  %v2518 = vmax.f32 %v2486, %v2014
  %v2519 = vmax.f32 %v2487, %v2017
  %v2520 = vmax.f32 %v2488, %v2022
  %v2521 = vmax.f32 %v2489, %v2025
  %v2522 = vmax.f32 %v2490, %v2030
  %v2523 = vmax.f32 %v2491, %v2033
  %v2524 = vmax.f32 %v2492, %v2038
  %v2525 = vmax.f32 %v2493, %v2041
  %v2526 = vmax.f32 %v2494, %v2046
  %v2527 = vmax.f32 %v2495, %v2049
  %v2528 = vmax.f32 %v2496, %v2054
  %v2529 = vmax.f32 %v2497, %v2057
  %v2530 = vmax.f32 %v2498, %v2062
  %v2531 = vmax.f32 %v2499, %v2065
  %v2532 = vmax.f32 %v2500, %v2070
  %v2533 = vmax.f32 %v2501, %v2073
  %v2534 = vmax.f32 %v2502, %v2078
  %v2535 = vmax.f32 %v2503, %v2081
  %v2536 = vmax.f32 %v2504, %v2086
  %v2537 = vmax.f32 %v2505, %v2089
  %v2538 = vmax.f32 %v2506, %v2094
  %v2539 = vmax.f32 %v2507, %v2097
  %v2540 = vmax.f32 %v2508, %v2102
  %v2541 = vmax.f32 %v2509, %v2105
  %v2542 = vmax.f32 %v2510, %v2110
  %v2543 = vmax.f32 %v2511, %v2113
  %v2544 = vmax.f32 %v2512, %v2118
  %v2545 = vmax.f32 %v2513, %v2121
  %v2546 = vmax.f32 %v2514, %v2126
  %v2547 = vmax.f32 %v2515, %v2129
  %v2548 = vmax.f32 %v2516, %v2134
  %v2549 = vmax.f32 %v2517, %v2137
  %v2550 = vmax.f32 %v2518, %v2142
  %v2551 = vmax.f32 %v2519, %v2145
  %v2552 = vmax.f32 %v2520, %v2150
  %v2553 = vmax.f32 %v2521, %v2153
  %v2554 = vmax.f32 %v2522, %v2158
  %v2555 = vmax.f32 %v2523, %v2161
  %v2556 = vmax.f32 %v2524, %v2166
  %v2557 = vmax.f32 %v2525, %v2169
  %v2558 = vmax.f32 %v2526, %v2174
  %v2559 = vmax.f32 %v2527, %v2177
  %v2560 = vmax.f32 %v2528, %v2182
  %v2561 = vmax.f32 %v2529, %v2185
  %v2562 = vmax.f32 %v2530, %v2190
  %v2563 = vmax.f32 %v2531, %v2193
  %v2564 = vmax.f32 %v2532, %v2198
  %v2565 = vmax.f32 %v2533, %v2201
  %v2566 = vmax.f32 %v2534, %v2206
  %v2567 = vmax.f32 %v2535, %v2209
  %v2568 = vmax.f32 %v2536, %v2214
  %v2569 = vmax.f32 %v2537, %v2217
  %v2570 = vmax.f32 %v2538, %v2222
  %v2571 = vmax.f32 %v2539, %v2225
  %v2572 = vmax.f32 %v2540, %v2230
  %v2573 = vmax.f32 %v2541, %v2233
  %v2574 = vmax.f32 %v2542, %v2238
  %v2575 = vmax.f32 %v2543, %v2241
  %v2576 = vmax.f32 %v2544, %v2246
  %v2577 = vmax.f32 %v2545, %v2249
  %v2578 = vmax.f32 %v2546, %v2254
  %v2579 = vmax.f32 %v2547, %v2257
  %v2580 = vmax.f32 %v2548, %v2262
  %v2581 = vmax.f32 %v2549, %v2265
  %v2582 = vmax.f32 %v2550, %v2270
  %v2583 = vmax.f32 %v2551, %v2273
  %v2584 = vmax.f32 %v2552, %v2278
  %v2585 = vmax.f32 %v2553, %v2281
  %v2586 = vmax.f32 %v2554, %v2286
  %v2587 = vmax.f32 %v2555, %v2289
  %v2588 = vmax.f32 %v2556, %v2294
  %v2589 = vmax.f32 %v2557, %v2297
  %v2590 = vmax.f32 %v2558, %v2302
  %v2591 = vmax.f32 %v2559, %v2305
  %v2592 = vmax.f32 %v2560, %v2310
  %v2593 = vmax.f32 %v2561, %v2313
  %v2594 = vmax.f32 %v2562, %v2318
  %v2595 = vmax.f32 %v2563, %v2321
  %v2596 = vmax.f32 %v2564, %v2326
  %v2597 = vmax.f32 %v2565, %v2329
  %v2598 = vmax.f32 %v2566, %v2334
  %v2599 = vmax.f32 %v2567, %v2337
  %v2600 = vmax.f32 %v2568, %v2342
  %v2601 = vmax.f32 %v2569, %v2345
  %v2602 = vmax.f32 %v2570, %v2350
  %v2603 = vmax.f32 %v2571, %v2353
  %v2604 = vmax.f32 %v2572, %v2358
  %v2605 = vmax.f32 %v2573, %v2361
  %v2606 = vmax.f32 %v2574, %v2366
  %v2607 = vmax.f32 %v2575, %v2369
  %v2608 = vmax.f32 %v2576, %v2374
  %v2609 = vmax.f32 %v2577, %v2377
  %v2610 = vmax.f32 %v2578, %v2382
  %v2611 = vmax.f32 %v2579, %v2385
  %v2612 = vld [vmem:[%s2] sm:$0x1]
  %v2614 = vlaneseq
  %v2615 = vshrl.u32 %v2614, 7
  %v2616 = vsub.s32 0, %v2615
  %v2617 = vrot.slane %v2612, %v2616
  %v2619 = vmul.f32 %v2580, %v2617
  %v2620 = vmul.f32 %v2581, %v2617
  %v2621 = vmul.f32 %v2582, %v2617
  %v2622 = vmul.f32 %v2583, %v2617
  %v2623 = vmul.f32 %v2584, %v2617
  %v2624 = vmul.f32 %v2585, %v2617
  %v2625 = vmul.f32 %v2586, %v2617
  %v2626 = vmul.f32 %v2587, %v2617
  %v2627 = vmul.f32 %v2588, %v2617
  %v2628 = vmul.f32 %v2589, %v2617
  %v2629 = vmul.f32 %v2590, %v2617
  %v2630 = vmul.f32 %v2591, %v2617
  %v2631 = vmul.f32 %v2592, %v2617
  %v2632 = vmul.f32 %v2593, %v2617
  %v2633 = vmul.f32 %v2594, %v2617
  %v2634 = vmul.f32 %v2595, %v2617
  %v2635 = vmul.f32 %v2596, %v2617
  %v2636 = vmul.f32 %v2597, %v2617
  %v2637 = vmul.f32 %v2598, %v2617
  %v2638 = vmul.f32 %v2599, %v2617
  %v2639 = vmul.f32 %v2600, %v2617
  %v2640 = vmul.f32 %v2601, %v2617
  %v2641 = vmul.f32 %v2602, %v2617
  %v2642 = vmul.f32 %v2603, %v2617
  %v2643 = vmul.f32 %v2604, %v2617
  %v2644 = vmul.f32 %v2605, %v2617
  %v2645 = vmul.f32 %v2606, %v2617
  %v2646 = vmul.f32 %v2607, %v2617
  %v2647 = vmul.f32 %v2608, %v2617
  %v2648 = vmul.f32 %v2609, %v2617
  %v2649 = vmul.f32 %v2610, %v2617
  %v2650 = vmul.f32 %v2611, %v2617
  %v2651 = vld [vmem:[%s3] sm:$0x1]
  %v2653 = vlaneseq
  %v2654 = vshrl.u32 %v2653, 7
  %v2655 = vsub.s32 0, %v2654
  %v2656 = vrot.slane %v2651, %v2655
  %v2658 = vadd.f32 %v2619, %v2656
  %v2659 = vadd.f32 %v2620, %v2656
  %v2660 = vadd.f32 %v2621, %v2656
  %v2661 = vadd.f32 %v2622, %v2656
  %v2662 = vadd.f32 %v2623, %v2656
  %v2663 = vadd.f32 %v2624, %v2656
  %v2664 = vadd.f32 %v2625, %v2656
  %v2665 = vadd.f32 %v2626, %v2656
  %v2666 = vadd.f32 %v2627, %v2656
  %v2667 = vadd.f32 %v2628, %v2656
  %v2668 = vadd.f32 %v2629, %v2656
  %v2669 = vadd.f32 %v2630, %v2656
  %v2670 = vadd.f32 %v2631, %v2656
  %v2671 = vadd.f32 %v2632, %v2656
  %v2672 = vadd.f32 %v2633, %v2656
  %v2673 = vadd.f32 %v2634, %v2656
  %v2674 = vadd.f32 %v2635, %v2656
  %v2675 = vadd.f32 %v2636, %v2656
  %v2676 = vadd.f32 %v2637, %v2656
  %v2677 = vadd.f32 %v2638, %v2656
  %v2678 = vadd.f32 %v2639, %v2656
  %v2679 = vadd.f32 %v2640, %v2656
  %v2680 = vadd.f32 %v2641, %v2656
  %v2681 = vadd.f32 %v2642, %v2656
  %v2682 = vadd.f32 %v2643, %v2656
  %v2683 = vadd.f32 %v2644, %v2656
  %v2684 = vadd.f32 %v2645, %v2656
  %v2685 = vadd.f32 %v2646, %v2656
  %v2686 = vadd.f32 %v2647, %v2656
  %v2687 = vadd.f32 %v2648, %v2656
  %v2688 = vadd.f32 %v2649, %v2656
  %v2689 = vadd.f32 %v2650, %v2656
  %v2690 = vmul.f32 %v2658, 0.2
  %v2691 = vmul.f32 %v2659, 0.2
  %v2692 = vmul.f32 %v2660, 0.2
  %v2693 = vmul.f32 %v2661, 0.2
  %v2694 = vmul.f32 %v2662, 0.2
  %v2695 = vmul.f32 %v2663, 0.2
  %v2696 = vmul.f32 %v2664, 0.2
  %v2697 = vmul.f32 %v2665, 0.2
  %v2698 = vmul.f32 %v2666, 0.2
  %v2699 = vmul.f32 %v2667, 0.2
  %v2700 = vmul.f32 %v2668, 0.2
  %v2701 = vmul.f32 %v2669, 0.2
  %v2702 = vmul.f32 %v2670, 0.2
  %v2703 = vmul.f32 %v2671, 0.2
  %v2704 = vmul.f32 %v2672, 0.2
  %v2705 = vmul.f32 %v2673, 0.2
  %v2706 = vmul.f32 %v2674, 0.2
  %v2707 = vmul.f32 %v2675, 0.2
  %v2708 = vmul.f32 %v2676, 0.2
  %v2709 = vmul.f32 %v2677, 0.2
  %v2710 = vmul.f32 %v2678, 0.2
  %v2711 = vmul.f32 %v2679, 0.2
  %v2712 = vmul.f32 %v2680, 0.2
  %v2713 = vmul.f32 %v2681, 0.2
  %v2714 = vmul.f32 %v2682, 0.2
  %v2715 = vmul.f32 %v2683, 0.2
  %v2716 = vmul.f32 %v2684, 0.2
  %v2717 = vmul.f32 %v2685, 0.2
  %v2718 = vmul.f32 %v2686, 0.2
  %v2719 = vmul.f32 %v2687, 0.2
  %v2720 = vmul.f32 %v2688, 0.2
  %v2721 = vmul.f32 %v2689, 0.2
  %v2722 = vmax.f32 %v2658, %v2690
  %v2723 = vmax.f32 %v2659, %v2691
  %v2724 = vmax.f32 %v2660, %v2692
  %v2725 = vmax.f32 %v2661, %v2693
  %v2726 = vmax.f32 %v2662, %v2694
  %v2727 = vmax.f32 %v2663, %v2695
  %v2728 = vmax.f32 %v2664, %v2696
  %v2729 = vmax.f32 %v2665, %v2697
  %v2730 = vmax.f32 %v2666, %v2698
  %v2731 = vmax.f32 %v2667, %v2699
  %v2732 = vmax.f32 %v2668, %v2700
  %v2733 = vmax.f32 %v2669, %v2701
  %v2734 = vmax.f32 %v2670, %v2702
  %v2735 = vmax.f32 %v2671, %v2703
  %v2736 = vmax.f32 %v2672, %v2704
  %v2737 = vmax.f32 %v2673, %v2705
  %v2738 = vmax.f32 %v2674, %v2706
  %v2739 = vmax.f32 %v2675, %v2707
  %v2740 = vmax.f32 %v2676, %v2708
  %v2741 = vmax.f32 %v2677, %v2709
  %v2742 = vmax.f32 %v2678, %v2710
  %v2743 = vmax.f32 %v2679, %v2711
  %v2744 = vmax.f32 %v2680, %v2712
  %v2745 = vmax.f32 %v2681, %v2713
  %v2746 = vmax.f32 %v2682, %v2714
  %v2747 = vmax.f32 %v2683, %v2715
  %v2748 = vmax.f32 %v2684, %v2716
  %v2749 = vmax.f32 %v2685, %v2717
  %v2750 = vmax.f32 %v2686, %v2718
  %v2751 = vmax.f32 %v2687, %v2719
  %v2752 = vmax.f32 %v2688, %v2720
  %v2753 = vmax.f32 %v2689, %v2721
  %v2754 = vpack.c.bf16 %v2723, %v2722
  %v2755 = vpack.c.bf16 %v2725, %v2724
  %v2756 = vpack.c.bf16 %v2727, %v2726
  %v2757 = vpack.c.bf16 %v2729, %v2728
  %v2758 = vpack.c.bf16 %v2731, %v2730
  %v2759 = vpack.c.bf16 %v2733, %v2732
  %v2760 = vpack.c.bf16 %v2735, %v2734
  %v2761 = vpack.c.bf16 %v2737, %v2736
  %v2762 = vpack.c.bf16 %v2739, %v2738
  %v2763 = vpack.c.bf16 %v2741, %v2740
  %v2764 = vpack.c.bf16 %v2743, %v2742
  %v2765 = vpack.c.bf16 %v2745, %v2744
  %v2766 = vpack.c.bf16 %v2747, %v2746
  %v2767 = vpack.c.bf16 %v2749, %v2748
  %v2768 = vpack.c.bf16 %v2751, %v2750
  %v2769 = vpack.c.bf16 %v2753, %v2752
  %v2786 = vunpack.c.l.b16 %v2754
  %v2787 = vunpack.c.h.b16 %v2754
  %v2788 = vunpack.c.l.b16 %v2755
  %v2789 = vunpack.c.h.b16 %v2755
  %v2790 = vunpack.c.l.b16 %v2756
  %v2791 = vunpack.c.h.b16 %v2756
  %v2792 = vunpack.c.l.b16 %v2757
  %v2793 = vunpack.c.h.b16 %v2757
  %v2794 = vunpack.c.l.b16 %v2758
  %v2795 = vunpack.c.h.b16 %v2758
  %v2796 = vunpack.c.l.b16 %v2759
  %v2797 = vunpack.c.h.b16 %v2759
  %v2798 = vunpack.c.l.b16 %v2760
  %v2799 = vunpack.c.h.b16 %v2760
  %v2800 = vunpack.c.l.b16 %v2761
  %v2801 = vunpack.c.h.b16 %v2761
  %v2802 = vunpack.c.l.b16 %v2762
  %v2803 = vunpack.c.h.b16 %v2762
  %v2804 = vunpack.c.l.b16 %v2763
  %v2805 = vunpack.c.h.b16 %v2763
  %v2806 = vunpack.c.l.b16 %v2764
  %v2807 = vunpack.c.h.b16 %v2764
  %v2808 = vunpack.c.l.b16 %v2765
  %v2809 = vunpack.c.h.b16 %v2765
  %v2810 = vunpack.c.l.b16 %v2766
  %v2811 = vunpack.c.h.b16 %v2766
  %v2812 = vunpack.c.l.b16 %v2767
  %v2813 = vunpack.c.h.b16 %v2767
  %v2814 = vunpack.c.l.b16 %v2768
  %v2815 = vunpack.c.h.b16 %v2768
  %v2816 = vunpack.c.l.b16 %v2769
  %v2817 = vunpack.c.h.b16 %v2769
  %v2818 = vpack.c.b16 %v2786, %v2786
  %v2819 = vpack.c.b16 %v2787, %v2787
  %v2820 = vpack.c.b16 %v2788, %v2788
  %v2821 = vpack.c.b16 %v2789, %v2789
  %v2822 = vpack.c.b16 %v2790, %v2790
  %v2823 = vpack.c.b16 %v2791, %v2791
  %v2824 = vpack.c.b16 %v2792, %v2792
  %v2825 = vpack.c.b16 %v2793, %v2793
  %v2826 = vpack.c.b16 %v2794, %v2794
  %v2827 = vpack.c.b16 %v2795, %v2795
  %v2828 = vpack.c.b16 %v2796, %v2796
  %v2829 = vpack.c.b16 %v2797, %v2797
  %v2830 = vpack.c.b16 %v2798, %v2798
  %v2831 = vpack.c.b16 %v2799, %v2799
  %v2832 = vpack.c.b16 %v2800, %v2800
  %v2833 = vpack.c.b16 %v2801, %v2801
  %v2834 = vpack.c.b16 %v2802, %v2802
  %v2835 = vpack.c.b16 %v2803, %v2803
  %v2836 = vpack.c.b16 %v2804, %v2804
  %v2837 = vpack.c.b16 %v2805, %v2805
  %v2838 = vpack.c.b16 %v2806, %v2806
  %v2839 = vpack.c.b16 %v2807, %v2807
  %v2840 = vpack.c.b16 %v2808, %v2808
  %v2841 = vpack.c.b16 %v2809, %v2809
  %v2842 = vpack.c.b16 %v2810, %v2810
  %v2843 = vpack.c.b16 %v2811, %v2811
  %v2844 = vpack.c.b16 %v2812, %v2812
  %v2845 = vpack.c.b16 %v2813, %v2813
  %v2846 = vpack.c.b16 %v2814, %v2814
  %v2847 = vpack.c.b16 %v2815, %v2815
  %v2848 = vpack.c.b16 %v2816, %v2816
  %v2849 = vpack.c.b16 %v2817, %v2817
  %vm2882 = vcmask 125952
  %2883 = vst.msk [vmem:[%s4] sm:$0xf] %vm2882, %v2818
  %2884 = vst.msk [vmem:[%s4 + $0x4] sm:$0xf] %vm2882, %v2819
  %2885 = vst.msk [vmem:[%s4 + $0x8] sm:$0xf] %vm2882, %v2820
  %2886 = vst.msk [vmem:[%s4 + $0xc] sm:$0xf] %vm2882, %v2821
  %2887 = vst.msk [vmem:[%s4 + $0x10] sm:$0xf] %vm2882, %v2822
  %2888 = vst.msk [vmem:[%s4 + $0x14] sm:$0xf] %vm2882, %v2823
  %2889 = vst.msk [vmem:[%s4 + $0x18] sm:$0xf] %vm2882, %v2824
  %2890 = vst.msk [vmem:[%s4 + $0x1c] sm:$0xf] %vm2882, %v2825
  %2891 = vst.msk [vmem:[%s4 + $0x20] sm:$0xf] %vm2882, %v2826
  %2892 = vst.msk [vmem:[%s4 + $0x24] sm:$0xf] %vm2882, %v2827
  %2893 = vst.msk [vmem:[%s4 + $0x28] sm:$0xf] %vm2882, %v2828
  %2894 = vst.msk [vmem:[%s4 + $0x2c] sm:$0xf] %vm2882, %v2829
  %2895 = vst.msk [vmem:[%s4 + $0x30] sm:$0xf] %vm2882, %v2830
  %2896 = vst.msk [vmem:[%s4 + $0x34] sm:$0xf] %vm2882, %v2831
  %2897 = vst.msk [vmem:[%s4 + $0x38] sm:$0xf] %vm2882, %v2832
  %2898 = vst.msk [vmem:[%s4 + $0x3c] sm:$0xf] %vm2882, %v2833
  %2899 = vst.msk [vmem:[%s4 + $0x40] sm:$0xf] %vm2882, %v2834
  %2900 = vst.msk [vmem:[%s4 + $0x44] sm:$0xf] %vm2882, %v2835
  %2901 = vst.msk [vmem:[%s4 + $0x48] sm:$0xf] %vm2882, %v2836
  %2902 = vst.msk [vmem:[%s4 + $0x4c] sm:$0xf] %vm2882, %v2837
  %2903 = vst.msk [vmem:[%s4 + $0x50] sm:$0xf] %vm2882, %v2838
  %2904 = vst.msk [vmem:[%s4 + $0x54] sm:$0xf] %vm2882, %v2839
  %2905 = vst.msk [vmem:[%s4 + $0x58] sm:$0xf] %vm2882, %v2840
  %2906 = vst.msk [vmem:[%s4 + $0x5c] sm:$0xf] %vm2882, %v2841
  %2907 = vst.msk [vmem:[%s4 + $0x60] sm:$0xf] %vm2882, %v2842
  %2908 = vst.msk [vmem:[%s4 + $0x64] sm:$0xf] %vm2882, %v2843
  %2909 = vst.msk [vmem:[%s4 + $0x68] sm:$0xf] %vm2882, %v2844
  %2910 = vst.msk [vmem:[%s4 + $0x6c] sm:$0xf] %vm2882, %v2845
  %2911 = vst.msk [vmem:[%s4 + $0x70] sm:$0xf] %vm2882, %v2846
  %2912 = vst.msk [vmem:[%s4 + $0x74] sm:$0xf] %vm2882, %v2847
  %2913 = vst.msk [vmem:[%s4 + $0x78] sm:$0xf] %vm2882, %v2848
  %2914 = vst.msk [vmem:[%s4 + $0x7c] sm:$0xf] %vm2882, %v2849
  // Predicated region
  $region18: #{_lambda_.2} parent=0 // pred_check
    _
  $region19: #{_lambda_.2} parent=0 // pred_check_branch
    %2916 = sbr.rel (0) target = $region21
  $region20: #{_lambda_.2} parent=0 // pred_region
    _
  $region21: #{_lambda_.2} parent=0 // pred_fallthru
    _
  // Predicated region
  $region22: #{_lambda_.2} parent=0 // pred_check
    _
  $region23: #{_lambda_.2} parent=0 // pred_check_branch
    %2918 = sbr.rel (0) target = $region25
  $region24: #{_lambda_.2} parent=0 // pred_region
    _
  $region25: #{_lambda_.2} parent=0 // pred_fallthru
    _

// kernel: _lambda_.3
$region0: #{_lambda_.3}
  #allocation0 [shape = 'u32[]', space=smem, size = 0x4, offset = 0x4, fixed_abs, tag = 'smem constant byte address 0x4 - core index']
  #allocation1 [shape = 'u32[144,128]{1,0:T(1,128)}', space=vmem, size = 0x12000, scoped, tag = 'internal scratch']
  #allocation2 [shape = 'f32[16,32]{1,0:T(8,128)}', space=vmem, size = 0x2000, scoped, tag = 'scratch operand']
  #allocation3 [shape = 'f32[1,1]{1,0:T(1,128)S(1)}', space=vmem, size = 0x200, scoped, tag = 'scoped memory for _lambda_.3']
  %s0 = inlined_call_operand.vmem [shape: bf16[128,1024], index: 0, kind: input, shape index: {}]
  %s1 = inlined_call_operand.vmem [shape: bf16[1024,32], index: 1, kind: input, shape index: {}]
  %s2 = inlined_call_operand.vmem [shape: f32[1,32], index: 2, kind: input, shape index: {}]
  %s3 = inlined_call_operand.vmem [shape: f32[1,32], index: 3, kind: input, shape index: {}]
  %s4 = inlined_call_operand.vmem [shape: bf16[8,32,128], index: 4, kind: input, shape index: {}]
  %s5 = inlined_call_operand.vmem [shape: f32[1,128], index: 5, kind: input, shape index: {}]
  %s6 = inlined_call_operand.vmem [shape: bf16[128,64], index: 6, kind: input, shape index: {}]
  %s7 = inlined_call_operand.vmem [shape: f32[1,64], index: 7, kind: input, shape index: {}]
  %s8 = inlined_call_operand.vmem [shape: f32[1,64], index: 8, kind: input, shape index: {}]
  %s9 = inlined_call_operand.<no memory space> [shape: f32[1,1], index: 9, kind: input, shape index: {}]
  %s10 = inlined_call_operand.vmem [shape: f32[2,1], index: 10, kind: output, shape index: {}]
  %s11 = sld [smem:[#allocation0]]
  $region50: #{_lambda_.3} parent=0
    _
  %s13 = ssub.s32 1, %s11
  %s14 = scalar_select 0, %s13, %s11
  %v15 = vstv %s9
  %16 = vst [vmem:[#allocation3] sm:$0x1] %v15
  // Predicated region
  $region2: #{_lambda_.3} parent=0 // pred_check
    _
  $region3: #{_lambda_.3} parent=0 // pred_check_branch
    %18 = sbr.rel (0) target = $region5
  $region4: #{_lambda_.3} parent=0 // pred_region
    _
  $region5: #{_lambda_.3} parent=0 // pred_fallthru
    _
  // Predicated region
  $region6: #{_lambda_.3} parent=0 // pred_check
    _
  $region7: #{_lambda_.3} parent=0 // pred_check_branch
    %20 = sbr.rel (0) target = $region9
  $region8: #{_lambda_.3} parent=0 // pred_region
    _
  $region9: #{_lambda_.3} parent=0 // pred_fallthru
    _
  // Predicated region
  $region10: #{_lambda_.3} parent=0 // pred_check
    _
  $region11: #{_lambda_.3} parent=0 // pred_check_branch
    %22 = sbr.rel (0) target = $region13
  $region12: #{_lambda_.3} parent=0 // pred_region
    _
  $region13: #{_lambda_.3} parent=0 // pred_fallthru
    _
  // Predicated region
  $region14: #{_lambda_.3} parent=0 // pred_check
    _
  $region15: #{_lambda_.3} parent=0 // pred_check_branch
    %24 = sbr.rel (0) target = $region17
  $region16: #{_lambda_.3} parent=0 // pred_region
    _
  $region17: #{_lambda_.3} parent=0 // pred_fallthru
    _
  // Predicated region
  $region18: #{_lambda_.3} parent=0 // pred_check
    _
  $region19: #{_lambda_.3} parent=0 // pred_check_branch
    %26 = sbr.rel (0) target = $region21
  $region20: #{_lambda_.3} parent=0 // pred_region
    _
  $region21: #{_lambda_.3} parent=0 // pred_fallthru
    _
  // Predicated region
  $region22: #{_lambda_.3} parent=0 // pred_check
    _
  $region23: #{_lambda_.3} parent=0 // pred_check_branch
    %28 = sbr.rel (0) target = $region25
  $region24: #{_lambda_.3} parent=0 // pred_region
    _
  $region25: #{_lambda_.3} parent=0 // pred_fallthru
    _
  // Predicated region
  $region26: #{_lambda_.3} parent=0 // pred_check
    _
  $region27: #{_lambda_.3} parent=0 // pred_check_branch
    %30 = sbr.rel (0) target = $region29
  $region28: #{_lambda_.3} parent=0 // pred_region
    _
  $region29: #{_lambda_.3} parent=0 // pred_fallthru
    _
  // Predicated region
  $region30: #{_lambda_.3} parent=0 // pred_check
    _
  $region31: #{_lambda_.3} parent=0 // pred_check_branch
    %32 = sbr.rel (0) target = $region33
  $region32: #{_lambda_.3} parent=0 // pred_region
    _
  $region33: #{_lambda_.3} parent=0 // pred_fallthru
    _
  // Predicated region
  $region34: #{_lambda_.3} parent=0 // pred_check
    _
  $region35: #{_lambda_.3} parent=0 // pred_check_branch
    %34 = sbr.rel (0) target = $region37
  $region36: #{_lambda_.3} parent=0 // pred_region
    _
  $region37: #{_lambda_.3} parent=0 // pred_fallthru
    _
  // Predicated region
  $region38: #{_lambda_.3} parent=0 // pred_check
    _
  $region39: #{_lambda_.3} parent=0 // pred_check_branch
    %36 = sbr.rel (0) target = $region41
  $region40: #{_lambda_.3} parent=0 // pred_region
    _
  $region41: #{_lambda_.3} parent=0 // pred_fallthru
    _
  %v38 = vld [vmem:[%s0] sm:$0xff]
  %v39 = vld [vmem:[%s0 + $0x8] sm:$0xff]
  %v40 = vld [vmem:[%s0 + $0x10] sm:$0xff]
  %v41 = vld [vmem:[%s0 + $0x18] sm:$0xff]
  %v42 = vld [vmem:[%s0 + $0x20] sm:$0xff]
  %v43 = vld [vmem:[%s0 + $0x28] sm:$0xff]
  %v44 = vld [vmem:[%s0 + $0x30] sm:$0xff]
  %v45 = vld [vmem:[%s0 + $0x38] sm:$0xff]
  %v46 = vld [vmem:[%s0 + $0x40] sm:$0xff]
  %v47 = vld [vmem:[%s0 + $0x48] sm:$0xff]
  %v48 = vld [vmem:[%s0 + $0x50] sm:$0xff]
  %v49 = vld [vmem:[%s0 + $0x58] sm:$0xff]
  %v50 = vld [vmem:[%s0 + $0x60] sm:$0xff]
  %v51 = vld [vmem:[%s0 + $0x68] sm:$0xff]
  %v52 = vld [vmem:[%s0 + $0x70] sm:$0xff]
  %v53 = vld [vmem:[%s0 + $0x78] sm:$0xff]
  %v54 = vld [vmem:[%s0 + $0x80] sm:$0xff]
  %v55 = vld [vmem:[%s0 + $0x88] sm:$0xff]
  %v56 = vld [vmem:[%s0 + $0x90] sm:$0xff]
  %v57 = vld [vmem:[%s0 + $0x98] sm:$0xff]
  %v58 = vld [vmem:[%s0 + $0xa0] sm:$0xff]
  %v59 = vld [vmem:[%s0 + $0xa8] sm:$0xff]
  %v60 = vld [vmem:[%s0 + $0xb0] sm:$0xff]
  %v61 = vld [vmem:[%s0 + $0xb8] sm:$0xff]
  %v62 = vld [vmem:[%s0 + $0xc0] sm:$0xff]
  %v63 = vld [vmem:[%s0 + $0xc8] sm:$0xff]
  %v64 = vld [vmem:[%s0 + $0xd0] sm:$0xff]
  %v65 = vld [vmem:[%s0 + $0xd8] sm:$0xff]
  %v66 = vld [vmem:[%s0 + $0xe0] sm:$0xff]
  %v67 = vld [vmem:[%s0 + $0xe8] sm:$0xff]
  %v68 = vld [vmem:[%s0 + $0xf0] sm:$0xff]
  %v69 = vld [vmem:[%s0 + $0xf8] sm:$0xff]
  %v70 = vld [vmem:[%s0 + $0x100] sm:$0xff]
  %v71 = vld [vmem:[%s0 + $0x108] sm:$0xff]
  %v72 = vld [vmem:[%s0 + $0x110] sm:$0xff]
  %v73 = vld [vmem:[%s0 + $0x118] sm:$0xff]
  %v74 = vld [vmem:[%s0 + $0x120] sm:$0xff]
  %v75 = vld [vmem:[%s0 + $0x128] sm:$0xff]
  %v76 = vld [vmem:[%s0 + $0x130] sm:$0xff]
  %v77 = vld [vmem:[%s0 + $0x138] sm:$0xff]
  %v78 = vld [vmem:[%s0 + $0x140] sm:$0xff]
  %v79 = vld [vmem:[%s0 + $0x148] sm:$0xff]
  %v80 = vld [vmem:[%s0 + $0x150] sm:$0xff]
  %v81 = vld [vmem:[%s0 + $0x158] sm:$0xff]
  %v82 = vld [vmem:[%s0 + $0x160] sm:$0xff]
  %v83 = vld [vmem:[%s0 + $0x168] sm:$0xff]
  %v84 = vld [vmem:[%s0 + $0x170] sm:$0xff]
  %v85 = vld [vmem:[%s0 + $0x178] sm:$0xff]
  %v86 = vld [vmem:[%s0 + $0x180] sm:$0xff]
  %v87 = vld [vmem:[%s0 + $0x188] sm:$0xff]
  %v88 = vld [vmem:[%s0 + $0x190] sm:$0xff]
  %v89 = vld [vmem:[%s0 + $0x198] sm:$0xff]
  %v90 = vld [vmem:[%s0 + $0x1a0] sm:$0xff]
  %v91 = vld [vmem:[%s0 + $0x1a8] sm:$0xff]
  %v92 = vld [vmem:[%s0 + $0x1b0] sm:$0xff]
  %v93 = vld [vmem:[%s0 + $0x1b8] sm:$0xff]
  %v94 = vld [vmem:[%s0 + $0x1c0] sm:$0xff]
  %v95 = vld [vmem:[%s0 + $0x1c8] sm:$0xff]
  %v96 = vld [vmem:[%s0 + $0x1d0] sm:$0xff]
  %v97 = vld [vmem:[%s0 + $0x1d8] sm:$0xff]
  %v98 = vld [vmem:[%s0 + $0x1e0] sm:$0xff]
  %v99 = vld [vmem:[%s0 + $0x1e8] sm:$0xff]
  %v100 = vld [vmem:[%s0 + $0x1f0] sm:$0xff]
  %v101 = vld [vmem:[%s0 + $0x1f8] sm:$0xff]
  %v102 = vld [vmem:[%s1] sm:$0xf]
  %v103 = vld [vmem:[%s1 + $0x4] sm:$0xf]
  %v104 = vld [vmem:[%s1 + $0x8] sm:$0xf]
  %v105 = vld [vmem:[%s1 + $0xc] sm:$0xf]
  %v106 = vld [vmem:[%s1 + $0x10] sm:$0xf]
  %v107 = vld [vmem:[%s1 + $0x14] sm:$0xf]
  %v108 = vld [vmem:[%s1 + $0x18] sm:$0xf]
  %v109 = vld [vmem:[%s1 + $0x1c] sm:$0xf]
  %v110 = vld [vmem:[%s1 + $0x20] sm:$0xf]
  %v111 = vld [vmem:[%s1 + $0x24] sm:$0xf]
  %v112 = vld [vmem:[%s1 + $0x28] sm:$0xf]
  %v113 = vld [vmem:[%s1 + $0x2c] sm:$0xf]
  %v114 = vld [vmem:[%s1 + $0x30] sm:$0xf]
  %v115 = vld [vmem:[%s1 + $0x34] sm:$0xf]
  %v116 = vld [vmem:[%s1 + $0x38] sm:$0xf]
  %v117 = vld [vmem:[%s1 + $0x3c] sm:$0xf]
  %v118 = vld [vmem:[%s1 + $0x40] sm:$0xf]
  %v119 = vld [vmem:[%s1 + $0x44] sm:$0xf]
  %v120 = vld [vmem:[%s1 + $0x48] sm:$0xf]
  %v121 = vld [vmem:[%s1 + $0x4c] sm:$0xf]
  %v122 = vld [vmem:[%s1 + $0x50] sm:$0xf]
  %v123 = vld [vmem:[%s1 + $0x54] sm:$0xf]
  %v124 = vld [vmem:[%s1 + $0x58] sm:$0xf]
  %v125 = vld [vmem:[%s1 + $0x5c] sm:$0xf]
  %v126 = vld [vmem:[%s1 + $0x60] sm:$0xf]
  %v127 = vld [vmem:[%s1 + $0x64] sm:$0xf]
  %v128 = vld [vmem:[%s1 + $0x68] sm:$0xf]
  %v129 = vld [vmem:[%s1 + $0x6c] sm:$0xf]
  %v130 = vld [vmem:[%s1 + $0x70] sm:$0xf]
  %v131 = vld [vmem:[%s1 + $0x74] sm:$0xf]
  %v132 = vld [vmem:[%s1 + $0x78] sm:$0xf]
  %v133 = vld [vmem:[%s1 + $0x7c] sm:$0xf]
  %v134 = vld [vmem:[%s1 + $0x80] sm:$0xf]
  %v135 = vld [vmem:[%s1 + $0x84] sm:$0xf]
  %v136 = vld [vmem:[%s1 + $0x88] sm:$0xf]
  %v137 = vld [vmem:[%s1 + $0x8c] sm:$0xf]
  %v138 = vld [vmem:[%s1 + $0x90] sm:$0xf]
  %v139 = vld [vmem:[%s1 + $0x94] sm:$0xf]
  %v140 = vld [vmem:[%s1 + $0x98] sm:$0xf]
  %v141 = vld [vmem:[%s1 + $0x9c] sm:$0xf]
  %v142 = vld [vmem:[%s1 + $0xa0] sm:$0xf]
  %v143 = vld [vmem:[%s1 + $0xa4] sm:$0xf]
  %v144 = vld [vmem:[%s1 + $0xa8] sm:$0xf]
  %v145 = vld [vmem:[%s1 + $0xac] sm:$0xf]
  %v146 = vld [vmem:[%s1 + $0xb0] sm:$0xf]
  %v147 = vld [vmem:[%s1 + $0xb4] sm:$0xf]
  %v148 = vld [vmem:[%s1 + $0xb8] sm:$0xf]
  %v149 = vld [vmem:[%s1 + $0xbc] sm:$0xf]
  %v150 = vld [vmem:[%s1 + $0xc0] sm:$0xf]
  %v151 = vld [vmem:[%s1 + $0xc4] sm:$0xf]
  %v152 = vld [vmem:[%s1 + $0xc8] sm:$0xf]
  %v153 = vld [vmem:[%s1 + $0xcc] sm:$0xf]
  %v154 = vld [vmem:[%s1 + $0xd0] sm:$0xf]
  %v155 = vld [vmem:[%s1 + $0xd4] sm:$0xf]
  %v156 = vld [vmem:[%s1 + $0xd8] sm:$0xf]
  %v157 = vld [vmem:[%s1 + $0xdc] sm:$0xf]
  %v158 = vld [vmem:[%s1 + $0xe0] sm:$0xf]
  %v159 = vld [vmem:[%s1 + $0xe4] sm:$0xf]
  %v160 = vld [vmem:[%s1 + $0xe8] sm:$0xf]
  %v161 = vld [vmem:[%s1 + $0xec] sm:$0xf]
  %v162 = vld [vmem:[%s1 + $0xf0] sm:$0xf]
  %v163 = vld [vmem:[%s1 + $0xf4] sm:$0xf]
  %v164 = vld [vmem:[%s1 + $0xf8] sm:$0xf]
  %v165 = vld [vmem:[%s1 + $0xfc] sm:$0xf]
  %v166 = vld [vmem:[%s1 + $0x100] sm:$0xf]
  %v167 = vld [vmem:[%s1 + $0x104] sm:$0xf]
  %v168 = vld [vmem:[%s1 + $0x108] sm:$0xf]
  %v169 = vld [vmem:[%s1 + $0x10c] sm:$0xf]
  %v170 = vld [vmem:[%s1 + $0x110] sm:$0xf]
  %v171 = vld [vmem:[%s1 + $0x114] sm:$0xf]
  %v172 = vld [vmem:[%s1 + $0x118] sm:$0xf]
  %v173 = vld [vmem:[%s1 + $0x11c] sm:$0xf]
  %v174 = vld [vmem:[%s1 + $0x120] sm:$0xf]
  %v175 = vld [vmem:[%s1 + $0x124] sm:$0xf]
  %v176 = vld [vmem:[%s1 + $0x128] sm:$0xf]
  %v177 = vld [vmem:[%s1 + $0x12c] sm:$0xf]
  %v178 = vld [vmem:[%s1 + $0x130] sm:$0xf]
  %v179 = vld [vmem:[%s1 + $0x134] sm:$0xf]
  %v180 = vld [vmem:[%s1 + $0x138] sm:$0xf]
  %v181 = vld [vmem:[%s1 + $0x13c] sm:$0xf]
  %v182 = vld [vmem:[%s1 + $0x140] sm:$0xf]
  %v183 = vld [vmem:[%s1 + $0x144] sm:$0xf]
  %v184 = vld [vmem:[%s1 + $0x148] sm:$0xf]
  %v185 = vld [vmem:[%s1 + $0x14c] sm:$0xf]
  %v186 = vld [vmem:[%s1 + $0x150] sm:$0xf]
  %v187 = vld [vmem:[%s1 + $0x154] sm:$0xf]
  %v188 = vld [vmem:[%s1 + $0x158] sm:$0xf]
  %v189 = vld [vmem:[%s1 + $0x15c] sm:$0xf]
  %v190 = vld [vmem:[%s1 + $0x160] sm:$0xf]
  %v191 = vld [vmem:[%s1 + $0x164] sm:$0xf]
  %v192 = vld [vmem:[%s1 + $0x168] sm:$0xf]
  %v193 = vld [vmem:[%s1 + $0x16c] sm:$0xf]
  %v194 = vld [vmem:[%s1 + $0x170] sm:$0xf]
  %v195 = vld [vmem:[%s1 + $0x174] sm:$0xf]
  %v196 = vld [vmem:[%s1 + $0x178] sm:$0xf]
  %v197 = vld [vmem:[%s1 + $0x17c] sm:$0xf]
  %v198 = vld [vmem:[%s1 + $0x180] sm:$0xf]
  %v199 = vld [vmem:[%s1 + $0x184] sm:$0xf]
  %v200 = vld [vmem:[%s1 + $0x188] sm:$0xf]
  %v201 = vld [vmem:[%s1 + $0x18c] sm:$0xf]
  %v202 = vld [vmem:[%s1 + $0x190] sm:$0xf]
  %v203 = vld [vmem:[%s1 + $0x194] sm:$0xf]
  %v204 = vld [vmem:[%s1 + $0x198] sm:$0xf]
  %v205 = vld [vmem:[%s1 + $0x19c] sm:$0xf]
  %v206 = vld [vmem:[%s1 + $0x1a0] sm:$0xf]
  %v207 = vld [vmem:[%s1 + $0x1a4] sm:$0xf]
  %v208 = vld [vmem:[%s1 + $0x1a8] sm:$0xf]
  %v209 = vld [vmem:[%s1 + $0x1ac] sm:$0xf]
  %v210 = vld [vmem:[%s1 + $0x1b0] sm:$0xf]
  %v211 = vld [vmem:[%s1 + $0x1b4] sm:$0xf]
  %v212 = vld [vmem:[%s1 + $0x1b8] sm:$0xf]
  %v213 = vld [vmem:[%s1 + $0x1bc] sm:$0xf]
  %v214 = vld [vmem:[%s1 + $0x1c0] sm:$0xf]
  %v215 = vld [vmem:[%s1 + $0x1c4] sm:$0xf]
  %v216 = vld [vmem:[%s1 + $0x1c8] sm:$0xf]
  %v217 = vld [vmem:[%s1 + $0x1cc] sm:$0xf]
  %v218 = vld [vmem:[%s1 + $0x1d0] sm:$0xf]
  %v219 = vld [vmem:[%s1 + $0x1d4] sm:$0xf]
  %v220 = vld [vmem:[%s1 + $0x1d8] sm:$0xf]
  %v221 = vld [vmem:[%s1 + $0x1dc] sm:$0xf]
  %v222 = vld [vmem:[%s1 + $0x1e0] sm:$0xf]
  %v223 = vld [vmem:[%s1 + $0x1e4] sm:$0xf]
  %v224 = vld [vmem:[%s1 + $0x1e8] sm:$0xf]
  %v225 = vld [vmem:[%s1 + $0x1ec] sm:$0xf]
  %v226 = vld [vmem:[%s1 + $0x1f0] sm:$0xf]
  %v227 = vld [vmem:[%s1 + $0x1f4] sm:$0xf]
  %v228 = vld [vmem:[%s1 + $0x1f8] sm:$0xf]
  %v229 = vld [vmem:[%s1 + $0x1fc] sm:$0xf]
  %v294 = vunpack.c.l.b16 %v38
  %v295 = vunpack.c.h.b16 %v38
  %v296 = vunpack.c.l.b16 %v39
  %v297 = vunpack.c.h.b16 %v39
  %v298 = vunpack.c.l.b16 %v40
  %v299 = vunpack.c.h.b16 %v40
  %v300 = vunpack.c.l.b16 %v41
  %v301 = vunpack.c.h.b16 %v41
  %v302 = vunpack.c.l.b16 %v42
  %v303 = vunpack.c.h.b16 %v42
  %v304 = vunpack.c.l.b16 %v43
  %v305 = vunpack.c.h.b16 %v43
  %v306 = vunpack.c.l.b16 %v44
  %v307 = vunpack.c.h.b16 %v44
  %v308 = vunpack.c.l.b16 %v45
  %v309 = vunpack.c.h.b16 %v45
  %v310 = vunpack.c.l.b16 %v46
  %v311 = vunpack.c.h.b16 %v46
  %v312 = vunpack.c.l.b16 %v47
  %v313 = vunpack.c.h.b16 %v47
  %v314 = vunpack.c.l.b16 %v48
  %v315 = vunpack.c.h.b16 %v48
  %v316 = vunpack.c.l.b16 %v49
  %v317 = vunpack.c.h.b16 %v49
  %v318 = vunpack.c.l.b16 %v50
  %v319 = vunpack.c.h.b16 %v50
  %v320 = vunpack.c.l.b16 %v51
  %v321 = vunpack.c.h.b16 %v51
  %v322 = vunpack.c.l.b16 %v52
  %v323 = vunpack.c.h.b16 %v52
  %v324 = vunpack.c.l.b16 %v53
  %v325 = vunpack.c.h.b16 %v53
  %v326 = vunpack.c.l.b16 %v54
  %v327 = vunpack.c.h.b16 %v54
  %v328 = vunpack.c.l.b16 %v55
  %v329 = vunpack.c.h.b16 %v55
  %v330 = vunpack.c.l.b16 %v56
  %v331 = vunpack.c.h.b16 %v56
  %v332 = vunpack.c.l.b16 %v57
  %v333 = vunpack.c.h.b16 %v57
  %v334 = vunpack.c.l.b16 %v58
  %v335 = vunpack.c.h.b16 %v58
  %v336 = vunpack.c.l.b16 %v59
  %v337 = vunpack.c.h.b16 %v59
  %v338 = vunpack.c.l.b16 %v60
  %v339 = vunpack.c.h.b16 %v60
  %v340 = vunpack.c.l.b16 %v61
  %v341 = vunpack.c.h.b16 %v61
  %v342 = vunpack.c.l.b16 %v62
  %v343 = vunpack.c.h.b16 %v62
  %v344 = vunpack.c.l.b16 %v63
  %v345 = vunpack.c.h.b16 %v63
  %v346 = vunpack.c.l.b16 %v64
  %v347 = vunpack.c.h.b16 %v64
  %v348 = vunpack.c.l.b16 %v65
  %v349 = vunpack.c.h.b16 %v65
  %v350 = vunpack.c.l.b16 %v66
  %v351 = vunpack.c.h.b16 %v66
  %v352 = vunpack.c.l.b16 %v67
  %v353 = vunpack.c.h.b16 %v67
  %v354 = vunpack.c.l.b16 %v68
  %v355 = vunpack.c.h.b16 %v68
  %v356 = vunpack.c.l.b16 %v69
  %v357 = vunpack.c.h.b16 %v69
  %v358 = vunpack.c.l.b16 %v70
  %v359 = vunpack.c.h.b16 %v70
  %v360 = vunpack.c.l.b16 %v71
  %v361 = vunpack.c.h.b16 %v71
  %v362 = vunpack.c.l.b16 %v72
  %v363 = vunpack.c.h.b16 %v72
  %v364 = vunpack.c.l.b16 %v73
  %v365 = vunpack.c.h.b16 %v73
  %v366 = vunpack.c.l.b16 %v74
  %v367 = vunpack.c.h.b16 %v74
  %v368 = vunpack.c.l.b16 %v75
  %v369 = vunpack.c.h.b16 %v75
  %v370 = vunpack.c.l.b16 %v76
  %v371 = vunpack.c.h.b16 %v76
  %v372 = vunpack.c.l.b16 %v77
  %v373 = vunpack.c.h.b16 %v77
  %v374 = vunpack.c.l.b16 %v78
  %v375 = vunpack.c.h.b16 %v78
  %v376 = vunpack.c.l.b16 %v79
  %v377 = vunpack.c.h.b16 %v79
  %v378 = vunpack.c.l.b16 %v80
  %v379 = vunpack.c.h.b16 %v80
  %v380 = vunpack.c.l.b16 %v81
  %v381 = vunpack.c.h.b16 %v81
  %v382 = vunpack.c.l.b16 %v82
  %v383 = vunpack.c.h.b16 %v82
  %v384 = vunpack.c.l.b16 %v83
  %v385 = vunpack.c.h.b16 %v83
  %v386 = vunpack.c.l.b16 %v84
  %v387 = vunpack.c.h.b16 %v84
  %v388 = vunpack.c.l.b16 %v85
  %v389 = vunpack.c.h.b16 %v85
  %v390 = vunpack.c.l.b16 %v86
  %v391 = vunpack.c.h.b16 %v86
  %v392 = vunpack.c.l.b16 %v87
  %v393 = vunpack.c.h.b16 %v87
  %v394 = vunpack.c.l.b16 %v88
  %v395 = vunpack.c.h.b16 %v88
  %v396 = vunpack.c.l.b16 %v89
  %v397 = vunpack.c.h.b16 %v89
  %v398 = vunpack.c.l.b16 %v90
  %v399 = vunpack.c.h.b16 %v90
  %v400 = vunpack.c.l.b16 %v91
  %v401 = vunpack.c.h.b16 %v91
  %v402 = vunpack.c.l.b16 %v92
  %v403 = vunpack.c.h.b16 %v92
  %v404 = vunpack.c.l.b16 %v93
  %v405 = vunpack.c.h.b16 %v93
  %v406 = vunpack.c.l.b16 %v94
  %v407 = vunpack.c.h.b16 %v94
  %v408 = vunpack.c.l.b16 %v95
  %v409 = vunpack.c.h.b16 %v95
  %v410 = vunpack.c.l.b16 %v96
  %v411 = vunpack.c.h.b16 %v96
  %v412 = vunpack.c.l.b16 %v97
  %v413 = vunpack.c.h.b16 %v97
  %v414 = vunpack.c.l.b16 %v98
  %v415 = vunpack.c.h.b16 %v98
  %v416 = vunpack.c.l.b16 %v99
  %v417 = vunpack.c.h.b16 %v99
  %v418 = vunpack.c.l.b16 %v100
  %v419 = vunpack.c.h.b16 %v100
  %v420 = vunpack.c.l.b16 %v101
  %v421 = vunpack.c.h.b16 %v101
  %v422 = vpack.c.b16 %v302, %v294
  %v423 = vpack.c.b16 %v303, %v295
  %v424 = vpack.c.b16 %v304, %v296
  %v425 = vpack.c.b16 %v305, %v297
  %v426 = vpack.c.b16 %v306, %v298
  %v427 = vpack.c.b16 %v307, %v299
  %v428 = vpack.c.b16 %v308, %v300
  %v429 = vpack.c.b16 %v309, %v301
  %v430 = vpack.c.b16 %v318, %v310
  %v431 = vpack.c.b16 %v319, %v311
  %v432 = vpack.c.b16 %v320, %v312
  %v433 = vpack.c.b16 %v321, %v313
  %v434 = vpack.c.b16 %v322, %v314
  %v435 = vpack.c.b16 %v323, %v315
  %v436 = vpack.c.b16 %v324, %v316
  %v437 = vpack.c.b16 %v325, %v317
  %v438 = vpack.c.b16 %v334, %v326
  %v439 = vpack.c.b16 %v335, %v327
  %v440 = vpack.c.b16 %v336, %v328
  %v441 = vpack.c.b16 %v337, %v329
  %v442 = vpack.c.b16 %v338, %v330
  %v443 = vpack.c.b16 %v339, %v331
  %v444 = vpack.c.b16 %v340, %v332
  %v445 = vpack.c.b16 %v341, %v333
  %v446 = vpack.c.b16 %v350, %v342
  %v447 = vpack.c.b16 %v351, %v343
  %v448 = vpack.c.b16 %v352, %v344
  %v449 = vpack.c.b16 %v353, %v345
  %v450 = vpack.c.b16 %v354, %v346
  %v451 = vpack.c.b16 %v355, %v347
  %v452 = vpack.c.b16 %v356, %v348
  %v453 = vpack.c.b16 %v357, %v349
  %v454 = vpack.c.b16 %v366, %v358
  %v455 = vpack.c.b16 %v367, %v359
  %v456 = vpack.c.b16 %v368, %v360
  %v457 = vpack.c.b16 %v369, %v361
  %v458 = vpack.c.b16 %v370, %v362
  %v459 = vpack.c.b16 %v371, %v363
  %v460 = vpack.c.b16 %v372, %v364
  %v461 = vpack.c.b16 %v373, %v365
  %v462 = vpack.c.b16 %v382, %v374
  %v463 = vpack.c.b16 %v383, %v375
  %v464 = vpack.c.b16 %v384, %v376
  %v465 = vpack.c.b16 %v385, %v377
  %v466 = vpack.c.b16 %v386, %v378
  %v467 = vpack.c.b16 %v387, %v379
  %v468 = vpack.c.b16 %v388, %v380
  %v469 = vpack.c.b16 %v389, %v381
  %v470 = vpack.c.b16 %v398, %v390
  %v471 = vpack.c.b16 %v399, %v391
  %v472 = vpack.c.b16 %v400, %v392
  %v473 = vpack.c.b16 %v401, %v393
  %v474 = vpack.c.b16 %v402, %v394
  %v475 = vpack.c.b16 %v403, %v395
  %v476 = vpack.c.b16 %v404, %v396
  %v477 = vpack.c.b16 %v405, %v397
  %v478 = vpack.c.b16 %v414, %v406
  %v479 = vpack.c.b16 %v415, %v407
  %v480 = vpack.c.b16 %v416, %v408
  %v481 = vpack.c.b16 %v417, %v409
  %v482 = vpack.c.b16 %v418, %v410
  %v483 = vpack.c.b16 %v419, %v411
  %v484 = vpack.c.b16 %v420, %v412
  %v485 = vpack.c.b16 %v421, %v413
  %v678 = vunpack.c.l.b16 %v102
  %v679 = vunpack.c.l.b16 %v103
  %v680 = vunpack.c.l.b16 %v104
  %v681 = vunpack.c.l.b16 %v105
  %v682 = vunpack.c.l.b16 %v106
  %v683 = vunpack.c.l.b16 %v107
  %v684 = vunpack.c.l.b16 %v108
  %v685 = vunpack.c.l.b16 %v109
  %v686 = vunpack.c.l.b16 %v110
  %v687 = vunpack.c.l.b16 %v111
  %v688 = vunpack.c.l.b16 %v112
  %v689 = vunpack.c.l.b16 %v113
  %v690 = vunpack.c.l.b16 %v114
  %v691 = vunpack.c.l.b16 %v115
  %v692 = vunpack.c.l.b16 %v116
  %v693 = vunpack.c.l.b16 %v117
  %v694 = vunpack.c.l.b16 %v118
  %v695 = vunpack.c.l.b16 %v119
  %v696 = vunpack.c.l.b16 %v120
  %v697 = vunpack.c.l.b16 %v121
  %v698 = vunpack.c.l.b16 %v122
  %v699 = vunpack.c.l.b16 %v123
  %v700 = vunpack.c.l.b16 %v124
  %v701 = vunpack.c.l.b16 %v125
  %v702 = vunpack.c.l.b16 %v126
  %v703 = vunpack.c.l.b16 %v127
  %v704 = vunpack.c.l.b16 %v128
  %v705 = vunpack.c.l.b16 %v129
  %v706 = vunpack.c.l.b16 %v130
  %v707 = vunpack.c.l.b16 %v131
  %v708 = vunpack.c.l.b16 %v132
  %v709 = vunpack.c.l.b16 %v133
  %v710 = vunpack.c.l.b16 %v134
  %v711 = vunpack.c.l.b16 %v135
  %v712 = vunpack.c.l.b16 %v136
  %v713 = vunpack.c.l.b16 %v137
  %v714 = vunpack.c.l.b16 %v138
  %v715 = vunpack.c.l.b16 %v139
  %v716 = vunpack.c.l.b16 %v140
  %v717 = vunpack.c.l.b16 %v141
  %v718 = vunpack.c.l.b16 %v142
  %v719 = vunpack.c.l.b16 %v143
  %v720 = vunpack.c.l.b16 %v144
  %v721 = vunpack.c.l.b16 %v145
  %v722 = vunpack.c.l.b16 %v146
  %v723 = vunpack.c.l.b16 %v147
  %v724 = vunpack.c.l.b16 %v148
  %v725 = vunpack.c.l.b16 %v149
  %v726 = vunpack.c.l.b16 %v150
  %v727 = vunpack.c.l.b16 %v151
  %v728 = vunpack.c.l.b16 %v152
  %v729 = vunpack.c.l.b16 %v153
  %v730 = vunpack.c.l.b16 %v154
  %v731 = vunpack.c.l.b16 %v155
  %v732 = vunpack.c.l.b16 %v156
  %v733 = vunpack.c.l.b16 %v157
  %v734 = vunpack.c.l.b16 %v158
  %v735 = vunpack.c.l.b16 %v159
  %v736 = vunpack.c.l.b16 %v160
  %v737 = vunpack.c.l.b16 %v161
  %v738 = vunpack.c.l.b16 %v162
  %v739 = vunpack.c.l.b16 %v163
  %v740 = vunpack.c.l.b16 %v164
  %v741 = vunpack.c.l.b16 %v165
  %v742 = vunpack.c.l.b16 %v166
  %v743 = vunpack.c.l.b16 %v167
  %v744 = vunpack.c.l.b16 %v168
  %v745 = vunpack.c.l.b16 %v169
  %v746 = vunpack.c.l.b16 %v170
  %v747 = vunpack.c.l.b16 %v171
  %v748 = vunpack.c.l.b16 %v172
  %v749 = vunpack.c.l.b16 %v173
  %v750 = vunpack.c.l.b16 %v174
  %v751 = vunpack.c.l.b16 %v175
  %v752 = vunpack.c.l.b16 %v176
  %v753 = vunpack.c.l.b16 %v177
  %v754 = vunpack.c.l.b16 %v178
  %v755 = vunpack.c.l.b16 %v179
  %v756 = vunpack.c.l.b16 %v180
  %v757 = vunpack.c.l.b16 %v181
  %v758 = vunpack.c.l.b16 %v182
  %v759 = vunpack.c.l.b16 %v183
  %v760 = vunpack.c.l.b16 %v184
  %v761 = vunpack.c.l.b16 %v185
  %v762 = vunpack.c.l.b16 %v186
  %v763 = vunpack.c.l.b16 %v187
  %v764 = vunpack.c.l.b16 %v188
  %v765 = vunpack.c.l.b16 %v189
  %v766 = vunpack.c.l.b16 %v190
  %v767 = vunpack.c.l.b16 %v191
  %v768 = vunpack.c.l.b16 %v192
  %v769 = vunpack.c.l.b16 %v193
  %v770 = vunpack.c.l.b16 %v194
  %v771 = vunpack.c.l.b16 %v195
  %v772 = vunpack.c.l.b16 %v196
  %v773 = vunpack.c.l.b16 %v197
  %v774 = vunpack.c.l.b16 %v198
  %v775 = vunpack.c.l.b16 %v199
  %v776 = vunpack.c.l.b16 %v200
  %v777 = vunpack.c.l.b16 %v201
  %v778 = vunpack.c.l.b16 %v202
  %v779 = vunpack.c.l.b16 %v203
  %v780 = vunpack.c.l.b16 %v204
  %v781 = vunpack.c.l.b16 %v205
  %v782 = vunpack.c.l.b16 %v206
  %v783 = vunpack.c.l.b16 %v207
  %v784 = vunpack.c.l.b16 %v208
  %v785 = vunpack.c.l.b16 %v209
  %v786 = vunpack.c.l.b16 %v210
  %v787 = vunpack.c.l.b16 %v211
  %v788 = vunpack.c.l.b16 %v212
  %v789 = vunpack.c.l.b16 %v213
  %v790 = vunpack.c.l.b16 %v214
  %v791 = vunpack.c.l.b16 %v215
  %v792 = vunpack.c.l.b16 %v216
  %v793 = vunpack.c.l.b16 %v217
  %v794 = vunpack.c.l.b16 %v218
  %v795 = vunpack.c.l.b16 %v219
  %v796 = vunpack.c.l.b16 %v220
  %v797 = vunpack.c.l.b16 %v221
  %v798 = vunpack.c.l.b16 %v222
  %v799 = vunpack.c.l.b16 %v223
  %v800 = vunpack.c.l.b16 %v224
  %v801 = vunpack.c.l.b16 %v225
  %v802 = vunpack.c.l.b16 %v226
  %v803 = vunpack.c.l.b16 %v227
  %v804 = vunpack.c.l.b16 %v228
  %v805 = vunpack.c.l.b16 %v229
  %v806 = vpack.c.b16 %v679, %v678
  %v807 = vpack.c.b16 %v681, %v680
  %v808 = vpack.c.b16 %v683, %v682
  %v809 = vpack.c.b16 %v685, %v684
  %v810 = vpack.c.b16 %v687, %v686
  %v811 = vpack.c.b16 %v689, %v688
  %v812 = vpack.c.b16 %v691, %v690
  %v813 = vpack.c.b16 %v693, %v692
  %v814 = vpack.c.b16 %v695, %v694
  %v815 = vpack.c.b16 %v697, %v696
  %v816 = vpack.c.b16 %v699, %v698
  %v817 = vpack.c.b16 %v701, %v700
  %v818 = vpack.c.b16 %v703, %v702
  %v819 = vpack.c.b16 %v705, %v704
  %v820 = vpack.c.b16 %v707, %v706
  %v821 = vpack.c.b16 %v709, %v708
  %v822 = vpack.c.b16 %v711, %v710
  %v823 = vpack.c.b16 %v713, %v712
  %v824 = vpack.c.b16 %v715, %v714
  %v825 = vpack.c.b16 %v717, %v716
  %v826 = vpack.c.b16 %v719, %v718
  %v827 = vpack.c.b16 %v721, %v720
  %v828 = vpack.c.b16 %v723, %v722
  %v829 = vpack.c.b16 %v725, %v724
  %v830 = vpack.c.b16 %v727, %v726
  %v831 = vpack.c.b16 %v729, %v728
  %v832 = vpack.c.b16 %v731, %v730
  %v833 = vpack.c.b16 %v733, %v732
  %v834 = vpack.c.b16 %v735, %v734
  %v835 = vpack.c.b16 %v737, %v736
  %v836 = vpack.c.b16 %v739, %v738
  %v837 = vpack.c.b16 %v741, %v740
  %v838 = vpack.c.b16 %v743, %v742
  %v839 = vpack.c.b16 %v745, %v744
  %v840 = vpack.c.b16 %v747, %v746
  %v841 = vpack.c.b16 %v749, %v748
  %v842 = vpack.c.b16 %v751, %v750
  %v843 = vpack.c.b16 %v753, %v752
  %v844 = vpack.c.b16 %v755, %v754
  %v845 = vpack.c.b16 %v757, %v756
  %v846 = vpack.c.b16 %v759, %v758
  %v847 = vpack.c.b16 %v761, %v760
  %v848 = vpack.c.b16 %v763, %v762
  %v849 = vpack.c.b16 %v765, %v764
  %v850 = vpack.c.b16 %v767, %v766
  %v851 = vpack.c.b16 %v769, %v768
  %v852 = vpack.c.b16 %v771, %v770
  %v853 = vpack.c.b16 %v773, %v772
  %v854 = vpack.c.b16 %v775, %v774
  %v855 = vpack.c.b16 %v777, %v776
  %v856 = vpack.c.b16 %v779, %v778
  %v857 = vpack.c.b16 %v781, %v780
  %v858 = vpack.c.b16 %v783, %v782
  %v859 = vpack.c.b16 %v785, %v784
  %v860 = vpack.c.b16 %v787, %v786
  %v861 = vpack.c.b16 %v789, %v788
  %v862 = vpack.c.b16 %v791, %v790
  %v863 = vpack.c.b16 %v793, %v792
  %v864 = vpack.c.b16 %v795, %v794
  %v865 = vpack.c.b16 %v797, %v796
  %v866 = vpack.c.b16 %v799, %v798
  %v867 = vpack.c.b16 %v801, %v800
  %v868 = vpack.c.b16 %v803, %v802
  %v869 = vpack.c.b16 %v805, %v804
  %934 = vmatprep.subr.bf16.mxu0 0
  %935 = vmatpush1.bf16.msra.mxu0 %v806
  %936 = vmatprep.subr.bf16.mxu0 0
  %937 = vmatpush1.bf16.msra.mxu0 %v807
  %938 = vmatprep.subr.bf16.mxu0 0
  %939 = vmatpush1.bf16.msra.mxu0 %v808
  %940 = vmatprep.subr.bf16.mxu0 0
  %941 = vmatpush1.bf16.msra.mxu0 %v809
  %942 = vmatprep.subr.bf16.mxu0 0
  %943 = vmatpush1.bf16.msra.mxu0 %v810
  %944 = vmatprep.subr.bf16.mxu0 0
  %945 = vmatpush1.bf16.msra.mxu0 %v811
  %946 = vmatprep.subr.bf16.mxu0 0
  %947 = vmatpush1.bf16.msra.mxu0 %v812
  %948 = vmatprep.subr.bf16.mxu0 0
  %949 = vmatpush1.bf16.msra.mxu0 %v813
  %950 = vmatprep.subr.bf16.mxu0 0
  %951 = vmatpush1.bf16.msra.mxu0 %v814
  %952 = vmatprep.subr.bf16.mxu0 0
  %953 = vmatpush1.bf16.msra.mxu0 %v815
  %954 = vmatprep.subr.bf16.mxu0 0
  %955 = vmatpush1.bf16.msra.mxu0 %v816
  %956 = vmatprep.subr.bf16.mxu0 0
  %957 = vmatpush1.bf16.msra.mxu0 %v817
  %958 = vmatprep.subr.bf16.mxu0 0
  %959 = vmatpush1.bf16.msra.mxu0 %v818
  %960 = vmatprep.subr.bf16.mxu0 0
  %961 = vmatpush1.bf16.msra.mxu0 %v819
  %962 = vmatprep.subr.bf16.mxu0 0
  %963 = vmatpush1.bf16.msra.mxu0 %v820
  %964 = vmatprep.subr.bf16.mxu0 0
  %965 = vmatpush1.bf16.msra.mxu0 %v821
  %966 = vmatprep.mubr.bf16.mxu0 %v423
  %967 = vmatmul.mubr.bf16.gmra.mrb[0].mxu0 %v422
  %v968 = vpop.f32.mrb[0].mxu0
  %v969 = vadd.f32 0.0, %v968
  %v970 = vpop.f32.mrb[0].mxu0
  %v971 = vpop.f32.mrb[0].mxu0
  %v972 = vadd.f32 0.0, %v971
  %v973 = vpop.f32.mrb[0].mxu0
  %974 = vmatprep.mubr.bf16.mxu0 %v431
  %975 = vmatmul.mubr.bf16.gmra.mrb[0].mxu0 %v430
  %v976 = vpop.f32.mrb[0].mxu0
  %v977 = vadd.f32 0.0, %v976
  %v978 = vpop.f32.mrb[0].mxu0
  %v979 = vpop.f32.mrb[0].mxu0
  %v980 = vadd.f32 0.0, %v979
  %v981 = vpop.f32.mrb[0].mxu0
  %982 = vmatprep.mubr.bf16.mxu0 %v439
  %983 = vmatmul.mubr.bf16.gmra.mrb[0].mxu0 %v438
  %v984 = vpop.f32.mrb[0].mxu0
  %v985 = vadd.f32 0.0, %v984
  %v986 = vpop.f32.mrb[0].mxu0
  %v987 = vpop.f32.mrb[0].mxu0
  %v988 = vadd.f32 0.0, %v987
  %v989 = vpop.f32.mrb[0].mxu0
  %990 = vmatprep.mubr.bf16.mxu0 %v447
  %991 = vmatmul.mubr.bf16.gmra.mrb[0].mxu0 %v446
  %v992 = vpop.f32.mrb[0].mxu0
  %v993 = vadd.f32 0.0, %v992
  %v994 = vpop.f32.mrb[0].mxu0
  %v995 = vpop.f32.mrb[0].mxu0
  %v996 = vadd.f32 0.0, %v995
  %v997 = vpop.f32.mrb[0].mxu0
  %998 = vmatprep.mubr.bf16.mxu0 %v455
  %999 = vmatmul.mubr.bf16.gmra.mrb[0].mxu0 %v454
  %v1000 = vpop.f32.mrb[0].mxu0
  %v1001 = vadd.f32 0.0, %v1000
  %v1002 = vpop.f32.mrb[0].mxu0
  %v1003 = vpop.f32.mrb[0].mxu0
  %v1004 = vadd.f32 0.0, %v1003
  %v1005 = vpop.f32.mrb[0].mxu0
  %1006 = vmatprep.mubr.bf16.mxu0 %v463
  %1007 = vmatmul.mubr.bf16.gmra.mrb[0].mxu0 %v462
  %v1008 = vpop.f32.mrb[0].mxu0
  %v1009 = vadd.f32 0.0, %v1008
  %v1010 = vpop.f32.mrb[0].mxu0
  %v1011 = vpop.f32.mrb[0].mxu0
  %v1012 = vadd.f32 0.0, %v1011
  %v1013 = vpop.f32.mrb[0].mxu0
  %1014 = vmatprep.mubr.bf16.mxu0 %v471
  %1015 = vmatmul.mubr.bf16.gmra.mrb[0].mxu0 %v470
  %v1016 = vpop.f32.mrb[0].mxu0
  %v1017 = vadd.f32 0.0, %v1016
  %v1018 = vpop.f32.mrb[0].mxu0
  %v1019 = vpop.f32.mrb[0].mxu0
  %v1020 = vadd.f32 0.0, %v1019
  %v1021 = vpop.f32.mrb[0].mxu0
  %1022 = vmatprep.mubr.bf16.mxu0 %v479
  %1023 = vmatmul.mubr.bf16.gmra.mrb[0].mxu0 %v478
  %v1024 = vpop.f32.mrb[0].mxu0
  %v1025 = vadd.f32 0.0, %v1024
  %v1026 = vpop.f32.mrb[0].mxu0
  %v1027 = vpop.f32.mrb[0].mxu0
  %v1028 = vadd.f32 0.0, %v1027
  %v1029 = vpop.f32.mrb[0].mxu0
  %1030 = vdwg.mxu0
  %1031 = vmatprep.subr.bf16.mxu0 0
  %1032 = vmatpush1.bf16.msra.mxu0 %v822
  %1033 = vmatprep.subr.bf16.mxu0 0
  %1034 = vmatpush1.bf16.msra.mxu0 %v823
  %1035 = vmatprep.subr.bf16.mxu0 0
  %1036 = vmatpush1.bf16.msra.mxu0 %v824
  %1037 = vmatprep.subr.bf16.mxu0 0
  %1038 = vmatpush1.bf16.msra.mxu0 %v825
  %1039 = vmatprep.subr.bf16.mxu0 0
  %1040 = vmatpush1.bf16.msra.mxu0 %v826
  %1041 = vmatprep.subr.bf16.mxu0 0
  %1042 = vmatpush1.bf16.msra.mxu0 %v827
  %1043 = vmatprep.subr.bf16.mxu0 0
  %1044 = vmatpush1.bf16.msra.mxu0 %v828
  %1045 = vmatprep.subr.bf16.mxu0 0
  %1046 = vmatpush1.bf16.msra.mxu0 %v829
  %1047 = vmatprep.subr.bf16.mxu0 0
  %1048 = vmatpush1.bf16.msra.mxu0 %v830
  %1049 = vmatprep.subr.bf16.mxu0 0
  %1050 = vmatpush1.bf16.msra.mxu0 %v831
  %1051 = vmatprep.subr.bf16.mxu0 0
  %1052 = vmatpush1.bf16.msra.mxu0 %v832
  %1053 = vmatprep.subr.bf16.mxu0 0
  %1054 = vmatpush1.bf16.msra.mxu0 %v833
  %1055 = vmatprep.subr.bf16.mxu0 0
  %1056 = vmatpush1.bf16.msra.mxu0 %v834
  %1057 = vmatprep.subr.bf16.mxu0 0
  %1058 = vmatpush1.bf16.msra.mxu0 %v835
  %1059 = vmatprep.subr.bf16.mxu0 0
  %1060 = vmatpush1.bf16.msra.mxu0 %v836
  %1061 = vmatprep.subr.bf16.mxu0 0
  %1062 = vmatpush1.bf16.msra.mxu0 %v837
  %1063 = vmatprep.mubr.bf16.mxu0 %v425
  %1064 = vmatmul.mubr.bf16.gmra.mrb[0].mxu0 %v424
  %v1065 = vpop.f32.mrb[0].mxu0
  %v1066 = vadd.f32 %v969, %v1065
  %v1067 = vpop.f32.mrb[0].mxu0
  %v1068 = vpop.f32.mrb[0].mxu0
  %v1069 = vadd.f32 %v972, %v1068
  %v1070 = vpop.f32.mrb[0].mxu0
  %1071 = vmatprep.mubr.bf16.mxu0 %v433
  %1072 = vmatmul.mubr.bf16.gmra.mrb[0].mxu0 %v432
  %v1073 = vpop.f32.mrb[0].mxu0
  %v1074 = vadd.f32 %v977, %v1073
  %v1075 = vpop.f32.mrb[0].mxu0
  %v1076 = vpop.f32.mrb[0].mxu0
  %v1077 = vadd.f32 %v980, %v1076
  %v1078 = vpop.f32.mrb[0].mxu0
  %1079 = vmatprep.mubr.bf16.mxu0 %v441
  %1080 = vmatmul.mubr.bf16.gmra.mrb[0].mxu0 %v440
  %v1081 = vpop.f32.mrb[0].mxu0
  %v1082 = vadd.f32 %v985, %v1081
  %v1083 = vpop.f32.mrb[0].mxu0
  %v1084 = vpop.f32.mrb[0].mxu0
  %v1085 = vadd.f32 %v988, %v1084
  %v1086 = vpop.f32.mrb[0].mxu0
  %1087 = vmatprep.mubr.bf16.mxu0 %v449
  %1088 = vmatmul.mubr.bf16.gmra.mrb[0].mxu0 %v448
  %v1089 = vpop.f32.mrb[0].mxu0
  %v1090 = vadd.f32 %v993, %v1089
  %v1091 = vpop.f32.mrb[0].mxu0
  %v1092 = vpop.f32.mrb[0].mxu0
  %v1093 = vadd.f32 %v996, %v1092
  %v1094 = vpop.f32.mrb[0].mxu0
  %1095 = vmatprep.mubr.bf16.mxu0 %v457
  %1096 = vmatmul.mubr.bf16.gmra.mrb[0].mxu0 %v456
  %v1097 = vpop.f32.mrb[0].mxu0
  %v1098 = vadd.f32 %v1001, %v1097
  %v1099 = vpop.f32.mrb[0].mxu0
  %v1100 = vpop.f32.mrb[0].mxu0
  %v1101 = vadd.f32 %v1004, %v1100
  %v1102 = vpop.f32.mrb[0].mxu0
  %1103 = vmatprep.mubr.bf16.mxu0 %v465
  %1104 = vmatmul.mubr.bf16.gmra.mrb[0].mxu0 %v464
  %v1105 = vpop.f32.mrb[0].mxu0
  %v1106 = vadd.f32 %v1009, %v1105
  %v1107 = vpop.f32.mrb[0].mxu0
  %v1108 = vpop.f32.mrb[0].mxu0
  %v1109 = vadd.f32 %v1012, %v1108
  %v1110 = vpop.f32.mrb[0].mxu0
  %1111 = vmatprep.mubr.bf16.mxu0 %v473
  %1112 = vmatmul.mubr.bf16.gmra.mrb[0].mxu0 %v472
  %v1113 = vpop.f32.mrb[0].mxu0
  %v1114 = vadd.f32 %v1017, %v1113
  %v1115 = vpop.f32.mrb[0].mxu0
  %v1116 = vpop.f32.mrb[0].mxu0
  %v1117 = vadd.f32 %v1020, %v1116
  %v1118 = vpop.f32.mrb[0].mxu0
  %1119 = vmatprep.mubr.bf16.mxu0 %v481
  %1120 = vmatmul.mubr.bf16.gmra.mrb[0].mxu0 %v480
  %v1121 = vpop.f32.mrb[0].mxu0
  %v1122 = vadd.f32 %v1025, %v1121
  %v1123 = vpop.f32.mrb[0].mxu0
  %v1124 = vpop.f32.mrb[0].mxu0
  %v1125 = vadd.f32 %v1028, %v1124
  %v1126 = vpop.f32.mrb[0].mxu0
  %1127 = vdwg.mxu0
  %1128 = vmatprep.subr.bf16.mxu0 0
  %1129 = vmatpush1.bf16.msra.mxu0 %v838
  %1130 = vmatprep.subr.bf16.mxu0 0
  %1131 = vmatpush1.bf16.msra.mxu0 %v839
  %1132 = vmatprep.subr.bf16.mxu0 0
  %1133 = vmatpush1.bf16.msra.mxu0 %v840
  %1134 = vmatprep.subr.bf16.mxu0 0
  %1135 = vmatpush1.bf16.msra.mxu0 %v841
  %1136 = vmatprep.subr.bf16.mxu0 0
  %1137 = vmatpush1.bf16.msra.mxu0 %v842
  %1138 = vmatprep.subr.bf16.mxu0 0
  %1139 = vmatpush1.bf16.msra.mxu0 %v843
  %1140 = vmatprep.subr.bf16.mxu0 0
  %1141 = vmatpush1.bf16.msra.mxu0 %v844
  %1142 = vmatprep.subr.bf16.mxu0 0
  %1143 = vmatpush1.bf16.msra.mxu0 %v845
  %1144 = vmatprep.subr.bf16.mxu0 0
  %1145 = vmatpush1.bf16.msra.mxu0 %v846
  %1146 = vmatprep.subr.bf16.mxu0 0
  %1147 = vmatpush1.bf16.msra.mxu0 %v847
  %1148 = vmatprep.subr.bf16.mxu0 0
  %1149 = vmatpush1.bf16.msra.mxu0 %v848
  %1150 = vmatprep.subr.bf16.mxu0 0
  %1151 = vmatpush1.bf16.msra.mxu0 %v849
  %1152 = vmatprep.subr.bf16.mxu0 0
  %1153 = vmatpush1.bf16.msra.mxu0 %v850
  %1154 = vmatprep.subr.bf16.mxu0 0
  %1155 = vmatpush1.bf16.msra.mxu0 %v851
  %1156 = vmatprep.subr.bf16.mxu0 0
  %1157 = vmatpush1.bf16.msra.mxu0 %v852
  %1158 = vmatprep.subr.bf16.mxu0 0
  %1159 = vmatpush1.bf16.msra.mxu0 %v853
  %1160 = vmatprep.mubr.bf16.mxu0 %v427
  %1161 = vmatmul.mubr.bf16.gmra.mrb[0].mxu0 %v426
  %v1162 = vpop.f32.mrb[0].mxu0
  %v1163 = vadd.f32 %v1066, %v1162
  %v1164 = vpop.f32.mrb[0].mxu0
  %v1165 = vpop.f32.mrb[0].mxu0
  %v1166 = vadd.f32 %v1069, %v1165
  %v1167 = vpop.f32.mrb[0].mxu0
  %1168 = vmatprep.mubr.bf16.mxu0 %v435
  %1169 = vmatmul.mubr.bf16.gmra.mrb[0].mxu0 %v434
  %v1170 = vpop.f32.mrb[0].mxu0
  %v1171 = vadd.f32 %v1074, %v1170
  %v1172 = vpop.f32.mrb[0].mxu0
  %v1173 = vpop.f32.mrb[0].mxu0
  %v1174 = vadd.f32 %v1077, %v1173
  %v1175 = vpop.f32.mrb[0].mxu0
  %1176 = vmatprep.mubr.bf16.mxu0 %v443
  %1177 = vmatmul.mubr.bf16.gmra.mrb[0].mxu0 %v442
  %v1178 = vpop.f32.mrb[0].mxu0
  %v1179 = vadd.f32 %v1082, %v1178
  %v1180 = vpop.f32.mrb[0].mxu0
  %v1181 = vpop.f32.mrb[0].mxu0
  %v1182 = vadd.f32 %v1085, %v1181
  %v1183 = vpop.f32.mrb[0].mxu0
  %1184 = vmatprep.mubr.bf16.mxu0 %v451
  %1185 = vmatmul.mubr.bf16.gmra.mrb[0].mxu0 %v450
  %v1186 = vpop.f32.mrb[0].mxu0
  %v1187 = vadd.f32 %v1090, %v1186
  %v1188 = vpop.f32.mrb[0].mxu0
  %v1189 = vpop.f32.mrb[0].mxu0
  %v1190 = vadd.f32 %v1093, %v1189
  %v1191 = vpop.f32.mrb[0].mxu0
  %1192 = vmatprep.mubr.bf16.mxu0 %v459
  %1193 = vmatmul.mubr.bf16.gmra.mrb[0].mxu0 %v458
  %v1194 = vpop.f32.mrb[0].mxu0
  %v1195 = vadd.f32 %v1098, %v1194
  %v1196 = vpop.f32.mrb[0].mxu0
  %v1197 = vpop.f32.mrb[0].mxu0
  %v1198 = vadd.f32 %v1101, %v1197
  %v1199 = vpop.f32.mrb[0].mxu0
  %1200 = vmatprep.mubr.bf16.mxu0 %v467
  %1201 = vmatmul.mubr.bf16.gmra.mrb[0].mxu0 %v466
  %v1202 = vpop.f32.mrb[0].mxu0
  %v1203 = vadd.f32 %v1106, %v1202
  %v1204 = vpop.f32.mrb[0].mxu0
  %v1205 = vpop.f32.mrb[0].mxu0
  %v1206 = vadd.f32 %v1109, %v1205
  %v1207 = vpop.f32.mrb[0].mxu0
  %1208 = vmatprep.mubr.bf16.mxu0 %v475
  %1209 = vmatmul.mubr.bf16.gmra.mrb[0].mxu0 %v474
  %v1210 = vpop.f32.mrb[0].mxu0
  %v1211 = vadd.f32 %v1114, %v1210
  %v1212 = vpop.f32.mrb[0].mxu0
  %v1213 = vpop.f32.mrb[0].mxu0
  %v1214 = vadd.f32 %v1117, %v1213
  %v1215 = vpop.f32.mrb[0].mxu0
  %1216 = vmatprep.mubr.bf16.mxu0 %v483
  %1217 = vmatmul.mubr.bf16.gmra.mrb[0].mxu0 %v482
  %v1218 = vpop.f32.mrb[0].mxu0
  %v1219 = vadd.f32 %v1122, %v1218
  %v1220 = vpop.f32.mrb[0].mxu0
  %v1221 = vpop.f32.mrb[0].mxu0
  %v1222 = vadd.f32 %v1125, %v1221
  %v1223 = vpop.f32.mrb[0].mxu0
  %1224 = vdwg.mxu0
  %1225 = vmatprep.subr.bf16.mxu0 0
  %1226 = vmatpush1.bf16.msra.mxu0 %v854
  %1227 = vmatprep.subr.bf16.mxu0 0
  %1228 = vmatpush1.bf16.msra.mxu0 %v855
  %1229 = vmatprep.subr.bf16.mxu0 0
  %1230 = vmatpush1.bf16.msra.mxu0 %v856
  %1231 = vmatprep.subr.bf16.mxu0 0
  %1232 = vmatpush1.bf16.msra.mxu0 %v857
  %1233 = vmatprep.subr.bf16.mxu0 0
  %1234 = vmatpush1.bf16.msra.mxu0 %v858
  %1235 = vmatprep.subr.bf16.mxu0 0
  %1236 = vmatpush1.bf16.msra.mxu0 %v859
  %1237 = vmatprep.subr.bf16.mxu0 0
  %1238 = vmatpush1.bf16.msra.mxu0 %v860
  %1239 = vmatprep.subr.bf16.mxu0 0
  %1240 = vmatpush1.bf16.msra.mxu0 %v861
  %1241 = vmatprep.subr.bf16.mxu0 0
  %1242 = vmatpush1.bf16.msra.mxu0 %v862
  %1243 = vmatprep.subr.bf16.mxu0 0
  %1244 = vmatpush1.bf16.msra.mxu0 %v863
  %1245 = vmatprep.subr.bf16.mxu0 0
  %1246 = vmatpush1.bf16.msra.mxu0 %v864
  %1247 = vmatprep.subr.bf16.mxu0 0
  %1248 = vmatpush1.bf16.msra.mxu0 %v865
  %1249 = vmatprep.subr.bf16.mxu0 0
  %1250 = vmatpush1.bf16.msra.mxu0 %v866
  %1251 = vmatprep.subr.bf16.mxu0 0
  %1252 = vmatpush1.bf16.msra.mxu0 %v867
  %1253 = vmatprep.subr.bf16.mxu0 0
  %1254 = vmatpush1.bf16.msra.mxu0 %v868
  %1255 = vmatprep.subr.bf16.mxu0 0
  %1256 = vmatpush1.bf16.msra.mxu0 %v869
  %1257 = vmatprep.mubr.bf16.mxu0 %v429
  %1258 = vmatmul.mubr.bf16.gmra.mrb[0].mxu0 %v428
  %v1259 = vpop.f32.mrb[0].mxu0
  %v1260 = vadd.f32 %v1163, %v1259
  %v1261 = vpop.f32.mrb[0].mxu0
  %v1262 = vpop.f32.mrb[0].mxu0
  %v1263 = vadd.f32 %v1166, %v1262
  %v1264 = vpop.f32.mrb[0].mxu0
  %1265 = vmatprep.mubr.bf16.mxu0 %v437
  %1266 = vmatmul.mubr.bf16.gmra.mrb[0].mxu0 %v436
  %v1267 = vpop.f32.mrb[0].mxu0
  %v1268 = vadd.f32 %v1171, %v1267
  %v1269 = vpop.f32.mrb[0].mxu0
  %v1270 = vpop.f32.mrb[0].mxu0
  %v1271 = vadd.f32 %v1174, %v1270
  %v1272 = vpop.f32.mrb[0].mxu0
  %1273 = vmatprep.mubr.bf16.mxu0 %v445
  %1274 = vmatmul.mubr.bf16.gmra.mrb[0].mxu0 %v444
  %v1275 = vpop.f32.mrb[0].mxu0
  %v1276 = vadd.f32 %v1179, %v1275
  %v1277 = vpop.f32.mrb[0].mxu0
  %v1278 = vpop.f32.mrb[0].mxu0
  %v1279 = vadd.f32 %v1182, %v1278
  %v1280 = vpop.f32.mrb[0].mxu0
  %1281 = vmatprep.mubr.bf16.mxu0 %v453
  %1282 = vmatmul.mubr.bf16.gmra.mrb[0].mxu0 %v452
  %v1283 = vpop.f32.mrb[0].mxu0
  %v1284 = vadd.f32 %v1187, %v1283
  %v1285 = vpop.f32.mrb[0].mxu0
  %v1286 = vpop.f32.mrb[0].mxu0
  %v1287 = vadd.f32 %v1190, %v1286
  %v1288 = vpop.f32.mrb[0].mxu0
  %1289 = vmatprep.mubr.bf16.mxu0 %v461
  %1290 = vmatmul.mubr.bf16.gmra.mrb[0].mxu0 %v460
  %v1291 = vpop.f32.mrb[0].mxu0
  %v1292 = vadd.f32 %v1195, %v1291
  %v1293 = vpop.f32.mrb[0].mxu0
  %v1294 = vpop.f32.mrb[0].mxu0
  %v1295 = vadd.f32 %v1198, %v1294
  %v1296 = vpop.f32.mrb[0].mxu0
  %1297 = vmatprep.mubr.bf16.mxu0 %v469
  %1298 = vmatmul.mubr.bf16.gmra.mrb[0].mxu0 %v468
  %v1299 = vpop.f32.mrb[0].mxu0
  %v1300 = vadd.f32 %v1203, %v1299
  %v1301 = vpop.f32.mrb[0].mxu0
  %v1302 = vpop.f32.mrb[0].mxu0
  %v1303 = vadd.f32 %v1206, %v1302
  %v1304 = vpop.f32.mrb[0].mxu0
  %1305 = vmatprep.mubr.bf16.mxu0 %v477
  %1306 = vmatmul.mubr.bf16.gmra.mrb[0].mxu0 %v476
  %v1307 = vpop.f32.mrb[0].mxu0
  %v1308 = vadd.f32 %v1211, %v1307
  %v1309 = vpop.f32.mrb[0].mxu0
  %v1310 = vpop.f32.mrb[0].mxu0
  %v1311 = vadd.f32 %v1214, %v1310
  %v1312 = vpop.f32.mrb[0].mxu0
  %1313 = vmatprep.mubr.bf16.mxu0 %v485
  %1314 = vmatmul.mubr.bf16.gmra.mrb[0].mxu0 %v484
  %v1315 = vpop.f32.mrb[0].mxu0
  %v1316 = vadd.f32 %v1219, %v1315
  %v1317 = vpop.f32.mrb[0].mxu0
  %v1318 = vpop.f32.mrb[0].mxu0
  %v1319 = vadd.f32 %v1222, %v1318
  %v1320 = vpop.f32.mrb[0].mxu0
  %1321 = vdwg.mxu0
  %v1322 = vmax.f32 %v1260, %v1268
  %v1323 = vmax.f32 %v1263, %v1271
  %v1324 = vmax.f32 %v1322, %v1276
  %v1325 = vmax.f32 %v1323, %v1279
  %v1326 = vmax.f32 %v1324, %v1284
  %v1327 = vmax.f32 %v1325, %v1287
  %v1328 = vmax.f32 %v1326, %v1292
  %v1329 = vmax.f32 %v1327, %v1295
  %v1330 = vmax.f32 %v1328, %v1300
  %v1331 = vmax.f32 %v1329, %v1303
  %v1332 = vmax.f32 %v1330, %v1308
  %v1333 = vmax.f32 %v1331, %v1311
  %v1334 = vmax.f32 %v1332, %v1316
  %v1335 = vmax.f32 %v1333, %v1319
  %v1336 = vld [vmem:[%s2] sm:$0x1]
  %v1338 = vlaneseq
  %v1339 = vshrl.u32 %v1338, 7
  %v1340 = vsub.s32 0, %v1339
  %v1341 = vrot.slane %v1336, %v1340
  %v1343 = vmul.f32 %v1334, %v1341
  %v1344 = vmul.f32 %v1335, %v1341
  %v1345 = vld [vmem:[%s3] sm:$0x1]
  %v1347 = vlaneseq
  %v1348 = vshrl.u32 %v1347, 7
  %v1349 = vsub.s32 0, %v1348
  %v1350 = vrot.slane %v1345, %v1349
  %v1352 = vadd.f32 %v1343, %v1350
  %v1353 = vadd.f32 %v1344, %v1350
  %v1354 = vmul.f32 %v1352, 0.2
  %v1355 = vmul.f32 %v1353, 0.2
  %v1356 = vmax.f32 %v1352, %v1354
  %v1357 = vmax.f32 %v1353, %v1355
  %vm1358 = vcmask 261120
  %1359 = vst.msk [vmem:[#allocation2] sm:$0xff] %vm1358, %v1356
  %1360 = vst.msk [vmem:[#allocation2 + $0x8] sm:$0xff] %vm1358, %v1357
  %v1361 = vld [vmem:[#allocation2] sm:$0x3]
  %v1362 = vpack.c.bf16 %v1361, %v1361
  %v1363 = vld [vmem:[%s4] sm:$0xf]
  %v1364 = vld [vmem:[%s4 + $0x4] sm:$0xf]
  %v1365 = vld [vmem:[%s4 + $0x8] sm:$0xf]
  %v1366 = vld [vmem:[%s4 + $0xc] sm:$0xf]
  %v1367 = vld [vmem:[#allocation2 + $0x2] sm:$0x3]
  %v1368 = vpack.c.bf16 %v1367, %v1367
  %s1369 = scalar_lea.vmem %s4, 16
  %v1370 = vld [vmem:[%s1369] sm:$0xf]
  %v1371 = vld [vmem:[%s1369 + $0x4] sm:$0xf]
  %v1372 = vld [vmem:[%s1369 + $0x8] sm:$0xf]
  %v1373 = vld [vmem:[%s1369 + $0xc] sm:$0xf]
  %v1378 = vunpack.c.l.b16 %v1370
  %v1379 = vunpack.c.l.b16 %v1371
  %v1380 = vunpack.c.l.b16 %v1372
  %v1381 = vunpack.c.l.b16 %v1373
  %v1382 = vpack.c.b16 %v1379, %v1378
  %v1383 = vpack.c.b16 %v1381, %v1380
  %v1387 = vsel %vm1358, %v1368, 0
  %1389 = vmatprep.subr.bf16.mxu0 0
  %1390 = vmatpush1.bf16.msra.mxu0 %v1382
  %1391 = vmatprep.subr.bf16.mxu0 0
  %1392 = vmatpush1.bf16.msra.mxu0 %v1383
  %1393 = vmatprep.subr.bf16.mxu0 0
  %1394 = vmatpush1.bf16.msra.mxu0 0
  %1395 = vmatprep.subr.bf16.mxu0 0
  %1396 = vmatpush1.bf16.msra.mxu0 0
  %1397 = vmatprep.subr.bf16.mxu0 0
  %1398 = vmatpush1.bf16.msra.mxu0 0
  %1399 = vmatprep.subr.bf16.mxu0 0
  %1400 = vmatpush1.bf16.msra.mxu0 0
  %1401 = vmatprep.subr.bf16.mxu0 0
  %1402 = vmatpush1.bf16.msra.mxu0 0
  %1403 = vmatprep.subr.bf16.mxu0 0
  %1404 = vmatpush1.bf16.msra.mxu0 0
  %1405 = vmatprep.subr.bf16.mxu0 0
  %1406 = vmatpush1.bf16.msra.mxu0 0
  %1407 = vmatprep.subr.bf16.mxu0 0
  %1408 = vmatpush1.bf16.msra.mxu0 0
  %1409 = vmatprep.subr.bf16.mxu0 0
  %1410 = vmatpush1.bf16.msra.mxu0 0
  %1411 = vmatprep.subr.bf16.mxu0 0
  %1412 = vmatpush1.bf16.msra.mxu0 0
  %1413 = vmatprep.subr.bf16.mxu0 0
  %1414 = vmatpush1.bf16.msra.mxu0 0
  %1415 = vmatprep.subr.bf16.mxu0 0
  %1416 = vmatpush1.bf16.msra.mxu0 0
  %1417 = vmatprep.subr.bf16.mxu0 0
  %1418 = vmatpush1.bf16.msra.mxu0 0
  %1419 = vmatprep.subr.bf16.mxu0 0
  %1420 = vmatpush1.bf16.msra.mxu0 0
  %1421 = vmatprep.mubr.bf16.mxu0 0
  %1422 = vmatmul.mubr.bf16.gmra.mrb[0].mxu0 %v1387
  %v1423 = vpop.f32.mrb[0].mxu0
  %v1424 = vadd.f32 0.0, %v1423
  %v1425 = vpop.f32.mrb[0].mxu0
  %v1426 = vpop.f32.mrb[0].mxu0
  %v1427 = vpop.f32.mrb[0].mxu0
  %1428 = vdwg.mxu0
  %v1433 = vunpack.c.l.b16 %v1363
  %v1434 = vunpack.c.l.b16 %v1364
  %v1435 = vunpack.c.l.b16 %v1365
  %v1436 = vunpack.c.l.b16 %v1366
  %v1437 = vpack.c.b16 %v1434, %v1433
  %v1438 = vpack.c.b16 %v1436, %v1435
  %v1442 = vsel %vm1358, %v1362, 0
  %1444 = vmatprep.subr.bf16.mxu0 0
  %1445 = vmatpush1.bf16.msra.mxu0 %v1437
  %1446 = vmatprep.subr.bf16.mxu0 0
  %1447 = vmatpush1.bf16.msra.mxu0 %v1438
  %1448 = vmatprep.subr.bf16.mxu0 0
  %1449 = vmatpush1.bf16.msra.mxu0 0
  %1450 = vmatprep.subr.bf16.mxu0 0
  %1451 = vmatpush1.bf16.msra.mxu0 0
  %1452 = vmatprep.subr.bf16.mxu0 0
  %1453 = vmatpush1.bf16.msra.mxu0 0
  %1454 = vmatprep.subr.bf16.mxu0 0
  %1455 = vmatpush1.bf16.msra.mxu0 0
  %1456 = vmatprep.subr.bf16.mxu0 0
  %1457 = vmatpush1.bf16.msra.mxu0 0
  %1458 = vmatprep.subr.bf16.mxu0 0
  %1459 = vmatpush1.bf16.msra.mxu0 0
  %1460 = vmatprep.subr.bf16.mxu0 0
  %1461 = vmatpush1.bf16.msra.mxu0 0
  %1462 = vmatprep.subr.bf16.mxu0 0
  %1463 = vmatpush1.bf16.msra.mxu0 0
  %1464 = vmatprep.subr.bf16.mxu0 0
  %1465 = vmatpush1.bf16.msra.mxu0 0
  %1466 = vmatprep.subr.bf16.mxu0 0
  %1467 = vmatpush1.bf16.msra.mxu0 0
  %1468 = vmatprep.subr.bf16.mxu0 0
  %1469 = vmatpush1.bf16.msra.mxu0 0
  %1470 = vmatprep.subr.bf16.mxu0 0
  %1471 = vmatpush1.bf16.msra.mxu0 0
  %1472 = vmatprep.subr.bf16.mxu0 0
  %1473 = vmatpush1.bf16.msra.mxu0 0
  %1474 = vmatprep.subr.bf16.mxu0 0
  %1475 = vmatpush1.bf16.msra.mxu0 0
  %1476 = vmatprep.mubr.bf16.mxu0 0
  %1477 = vmatmul.mubr.bf16.gmra.mrb[0].mxu0 %v1442
  %v1478 = vpop.f32.mrb[0].mxu0
  %v1479 = vadd.f32 %v1424, %v1478
  %v1480 = vpop.f32.mrb[0].mxu0
  %v1481 = vpop.f32.mrb[0].mxu0
  %v1482 = vpop.f32.mrb[0].mxu0
  %1483 = vdwg.mxu0
  %v1484 = vld [vmem:[#allocation2 + $0x4] sm:$0x3]
  %v1485 = vpack.c.bf16 %v1484, %v1484
  %s1486 = scalar_lea.vmem %s4, 32
  %v1487 = vld [vmem:[%s1486] sm:$0xf]
  %v1488 = vld [vmem:[%s1486 + $0x4] sm:$0xf]
  %v1489 = vld [vmem:[%s1486 + $0x8] sm:$0xf]
  %v1490 = vld [vmem:[%s1486 + $0xc] sm:$0xf]
  %v1495 = vunpack.c.l.b16 %v1487
  %v1496 = vunpack.c.l.b16 %v1488
  %v1497 = vunpack.c.l.b16 %v1489
  %v1498 = vunpack.c.l.b16 %v1490
  %v1499 = vpack.c.b16 %v1496, %v1495
  %v1500 = vpack.c.b16 %v1498, %v1497
  %v1504 = vsel %vm1358, %v1485, 0
  %1506 = vmatprep.subr.bf16.mxu0 0
  %1507 = vmatpush1.bf16.msra.mxu0 %v1499
  %1508 = vmatprep.subr.bf16.mxu0 0
  %1509 = vmatpush1.bf16.msra.mxu0 %v1500
  %1510 = vmatprep.subr.bf16.mxu0 0
  %1511 = vmatpush1.bf16.msra.mxu0 0
  %1512 = vmatprep.subr.bf16.mxu0 0
  %1513 = vmatpush1.bf16.msra.mxu0 0
  %1514 = vmatprep.subr.bf16.mxu0 0
  %1515 = vmatpush1.bf16.msra.mxu0 0
  %1516 = vmatprep.subr.bf16.mxu0 0
  %1517 = vmatpush1.bf16.msra.mxu0 0
  %1518 = vmatprep.subr.bf16.mxu0 0
  %1519 = vmatpush1.bf16.msra.mxu0 0
  %1520 = vmatprep.subr.bf16.mxu0 0
  %1521 = vmatpush1.bf16.msra.mxu0 0
  %1522 = vmatprep.subr.bf16.mxu0 0
  %1523 = vmatpush1.bf16.msra.mxu0 0
  %1524 = vmatprep.subr.bf16.mxu0 0
  %1525 = vmatpush1.bf16.msra.mxu0 0
  %1526 = vmatprep.subr.bf16.mxu0 0
  %1527 = vmatpush1.bf16.msra.mxu0 0
  %1528 = vmatprep.subr.bf16.mxu0 0
  %1529 = vmatpush1.bf16.msra.mxu0 0
  %1530 = vmatprep.subr.bf16.mxu0 0
  %1531 = vmatpush1.bf16.msra.mxu0 0
  %1532 = vmatprep.subr.bf16.mxu0 0
  %1533 = vmatpush1.bf16.msra.mxu0 0
  %1534 = vmatprep.subr.bf16.mxu0 0
  %1535 = vmatpush1.bf16.msra.mxu0 0
  %1536 = vmatprep.subr.bf16.mxu0 0
  %1537 = vmatpush1.bf16.msra.mxu0 0
  %1538 = vmatprep.mubr.bf16.mxu0 0
  %1539 = vmatmul.mubr.bf16.gmra.mrb[0].mxu0 %v1504
  %v1540 = vpop.f32.mrb[0].mxu0
  %v1541 = vadd.f32 0.0, %v1540
  %v1542 = vpop.f32.mrb[0].mxu0
  %v1543 = vpop.f32.mrb[0].mxu0
  %v1544 = vpop.f32.mrb[0].mxu0
  %1545 = vdwg.mxu0
  %v1546 = vadd.f32 %v1479, %v1541
  %v1547 = vld [vmem:[#allocation2 + $0x6] sm:$0x3]
  %v1548 = vpack.c.bf16 %v1547, %v1547
  %s1549 = scalar_lea.vmem %s4, 48
  %v1550 = vld [vmem:[%s1549] sm:$0xf]
  %v1551 = vld [vmem:[%s1549 + $0x4] sm:$0xf]
  %v1552 = vld [vmem:[%s1549 + $0x8] sm:$0xf]
  %v1553 = vld [vmem:[%s1549 + $0xc] sm:$0xf]
  %v1558 = vunpack.c.l.b16 %v1550
  %v1559 = vunpack.c.l.b16 %v1551
  %v1560 = vunpack.c.l.b16 %v1552
  %v1561 = vunpack.c.l.b16 %v1553
  %v1562 = vpack.c.b16 %v1559, %v1558
  %v1563 = vpack.c.b16 %v1561, %v1560
  %v1567 = vsel %vm1358, %v1548, 0
  %1569 = vmatprep.subr.bf16.mxu0 0
  %1570 = vmatpush1.bf16.msra.mxu0 %v1562
  %1571 = vmatprep.subr.bf16.mxu0 0
  %1572 = vmatpush1.bf16.msra.mxu0 %v1563
  %1573 = vmatprep.subr.bf16.mxu0 0
  %1574 = vmatpush1.bf16.msra.mxu0 0
  %1575 = vmatprep.subr.bf16.mxu0 0
  %1576 = vmatpush1.bf16.msra.mxu0 0
  %1577 = vmatprep.subr.bf16.mxu0 0
  %1578 = vmatpush1.bf16.msra.mxu0 0
  %1579 = vmatprep.subr.bf16.mxu0 0
  %1580 = vmatpush1.bf16.msra.mxu0 0
  %1581 = vmatprep.subr.bf16.mxu0 0
  %1582 = vmatpush1.bf16.msra.mxu0 0
  %1583 = vmatprep.subr.bf16.mxu0 0
  %1584 = vmatpush1.bf16.msra.mxu0 0
  %1585 = vmatprep.subr.bf16.mxu0 0
  %1586 = vmatpush1.bf16.msra.mxu0 0
  %1587 = vmatprep.subr.bf16.mxu0 0
  %1588 = vmatpush1.bf16.msra.mxu0 0
  %1589 = vmatprep.subr.bf16.mxu0 0
  %1590 = vmatpush1.bf16.msra.mxu0 0
  %1591 = vmatprep.subr.bf16.mxu0 0
  %1592 = vmatpush1.bf16.msra.mxu0 0
  %1593 = vmatprep.subr.bf16.mxu0 0
  %1594 = vmatpush1.bf16.msra.mxu0 0
  %1595 = vmatprep.subr.bf16.mxu0 0
  %1596 = vmatpush1.bf16.msra.mxu0 0
  %1597 = vmatprep.subr.bf16.mxu0 0
  %1598 = vmatpush1.bf16.msra.mxu0 0
  %1599 = vmatprep.subr.bf16.mxu0 0
  %1600 = vmatpush1.bf16.msra.mxu0 0
  %1601 = vmatprep.mubr.bf16.mxu0 0
  %1602 = vmatmul.mubr.bf16.gmra.mrb[0].mxu0 %v1567
  %v1603 = vpop.f32.mrb[0].mxu0
  %v1604 = vadd.f32 0.0, %v1603
  %v1605 = vpop.f32.mrb[0].mxu0
  %v1606 = vpop.f32.mrb[0].mxu0
  %v1607 = vpop.f32.mrb[0].mxu0
  %1608 = vdwg.mxu0
  %v1609 = vadd.f32 %v1546, %v1604
  %v1610 = vld [vmem:[#allocation2 + $0x8] sm:$0x3]
  %v1611 = vpack.c.bf16 %v1610, %v1610
  %s1612 = scalar_lea.vmem %s4, 64
  %v1613 = vld [vmem:[%s1612] sm:$0xf]
  %v1614 = vld [vmem:[%s1612 + $0x4] sm:$0xf]
  %v1615 = vld [vmem:[%s1612 + $0x8] sm:$0xf]
  %v1616 = vld [vmem:[%s1612 + $0xc] sm:$0xf]
  %v1621 = vunpack.c.l.b16 %v1613
  %v1622 = vunpack.c.l.b16 %v1614
  %v1623 = vunpack.c.l.b16 %v1615
  %v1624 = vunpack.c.l.b16 %v1616
  %v1625 = vpack.c.b16 %v1622, %v1621
  %v1626 = vpack.c.b16 %v1624, %v1623
  %v1630 = vsel %vm1358, %v1611, 0
  %1632 = vmatprep.subr.bf16.mxu0 0
  %1633 = vmatpush1.bf16.msra.mxu0 %v1625
  %1634 = vmatprep.subr.bf16.mxu0 0
  %1635 = vmatpush1.bf16.msra.mxu0 %v1626
  %1636 = vmatprep.subr.bf16.mxu0 0
  %1637 = vmatpush1.bf16.msra.mxu0 0
  %1638 = vmatprep.subr.bf16.mxu0 0
  %1639 = vmatpush1.bf16.msra.mxu0 0
  %1640 = vmatprep.subr.bf16.mxu0 0
  %1641 = vmatpush1.bf16.msra.mxu0 0
  %1642 = vmatprep.subr.bf16.mxu0 0
  %1643 = vmatpush1.bf16.msra.mxu0 0
  %1644 = vmatprep.subr.bf16.mxu0 0
  %1645 = vmatpush1.bf16.msra.mxu0 0
  %1646 = vmatprep.subr.bf16.mxu0 0
  %1647 = vmatpush1.bf16.msra.mxu0 0
  %1648 = vmatprep.subr.bf16.mxu0 0
  %1649 = vmatpush1.bf16.msra.mxu0 0
  %1650 = vmatprep.subr.bf16.mxu0 0
  %1651 = vmatpush1.bf16.msra.mxu0 0
  %1652 = vmatprep.subr.bf16.mxu0 0
  %1653 = vmatpush1.bf16.msra.mxu0 0
  %1654 = vmatprep.subr.bf16.mxu0 0
  %1655 = vmatpush1.bf16.msra.mxu0 0
  %1656 = vmatprep.subr.bf16.mxu0 0
  %1657 = vmatpush1.bf16.msra.mxu0 0
  %1658 = vmatprep.subr.bf16.mxu0 0
  %1659 = vmatpush1.bf16.msra.mxu0 0
  %1660 = vmatprep.subr.bf16.mxu0 0
  %1661 = vmatpush1.bf16.msra.mxu0 0
  %1662 = vmatprep.subr.bf16.mxu0 0
  %1663 = vmatpush1.bf16.msra.mxu0 0
  %1664 = vmatprep.mubr.bf16.mxu0 0
  %1665 = vmatmul.mubr.bf16.gmra.mrb[0].mxu0 %v1630
  %v1666 = vpop.f32.mrb[0].mxu0
  %v1667 = vadd.f32 0.0, %v1666
  %v1668 = vpop.f32.mrb[0].mxu0
  %v1669 = vpop.f32.mrb[0].mxu0
  %v1670 = vpop.f32.mrb[0].mxu0
  %1671 = vdwg.mxu0
  %v1672 = vadd.f32 %v1609, %v1667
  %v1673 = vld [vmem:[#allocation2 + $0xa] sm:$0x3]
  %v1674 = vpack.c.bf16 %v1673, %v1673
  %s1675 = scalar_lea.vmem %s4, 80
  %v1676 = vld [vmem:[%s1675] sm:$0xf]
  %v1677 = vld [vmem:[%s1675 + $0x4] sm:$0xf]
  %v1678 = vld [vmem:[%s1675 + $0x8] sm:$0xf]
  %v1679 = vld [vmem:[%s1675 + $0xc] sm:$0xf]
  %v1684 = vunpack.c.l.b16 %v1676
  %v1685 = vunpack.c.l.b16 %v1677
  %v1686 = vunpack.c.l.b16 %v1678
  %v1687 = vunpack.c.l.b16 %v1679
  %v1688 = vpack.c.b16 %v1685, %v1684
  %v1689 = vpack.c.b16 %v1687, %v1686
  %v1693 = vsel %vm1358, %v1674, 0
  %1695 = vmatprep.subr.bf16.mxu0 0
  %1696 = vmatpush1.bf16.msra.mxu0 %v1688
  %1697 = vmatprep.subr.bf16.mxu0 0
  %1698 = vmatpush1.bf16.msra.mxu0 %v1689
  %1699 = vmatprep.subr.bf16.mxu0 0
  %1700 = vmatpush1.bf16.msra.mxu0 0
  %1701 = vmatprep.subr.bf16.mxu0 0
  %1702 = vmatpush1.bf16.msra.mxu0 0
  %1703 = vmatprep.subr.bf16.mxu0 0
  %1704 = vmatpush1.bf16.msra.mxu0 0
  %1705 = vmatprep.subr.bf16.mxu0 0
  %1706 = vmatpush1.bf16.msra.mxu0 0
  %1707 = vmatprep.subr.bf16.mxu0 0
  %1708 = vmatpush1.bf16.msra.mxu0 0
  %1709 = vmatprep.subr.bf16.mxu0 0
  %1710 = vmatpush1.bf16.msra.mxu0 0
  %1711 = vmatprep.subr.bf16.mxu0 0
  %1712 = vmatpush1.bf16.msra.mxu0 0
  %1713 = vmatprep.subr.bf16.mxu0 0
  %1714 = vmatpush1.bf16.msra.mxu0 0
  %1715 = vmatprep.subr.bf16.mxu0 0
  %1716 = vmatpush1.bf16.msra.mxu0 0
  %1717 = vmatprep.subr.bf16.mxu0 0
  %1718 = vmatpush1.bf16.msra.mxu0 0
  %1719 = vmatprep.subr.bf16.mxu0 0
  %1720 = vmatpush1.bf16.msra.mxu0 0
  %1721 = vmatprep.subr.bf16.mxu0 0
  %1722 = vmatpush1.bf16.msra.mxu0 0
  %1723 = vmatprep.subr.bf16.mxu0 0
  %1724 = vmatpush1.bf16.msra.mxu0 0
  %1725 = vmatprep.subr.bf16.mxu0 0
  %1726 = vmatpush1.bf16.msra.mxu0 0
  %1727 = vmatprep.mubr.bf16.mxu0 0
  %1728 = vmatmul.mubr.bf16.gmra.mrb[0].mxu0 %v1693
  %v1729 = vpop.f32.mrb[0].mxu0
  %v1730 = vadd.f32 0.0, %v1729
  %v1731 = vpop.f32.mrb[0].mxu0
  %v1732 = vpop.f32.mrb[0].mxu0
  %v1733 = vpop.f32.mrb[0].mxu0
  %1734 = vdwg.mxu0
  %v1735 = vadd.f32 %v1672, %v1730
  %v1736 = vld [vmem:[#allocation2 + $0xc] sm:$0x3]
  %v1737 = vpack.c.bf16 %v1736, %v1736
  %s1738 = scalar_lea.vmem %s4, 96
  %v1739 = vld [vmem:[%s1738] sm:$0xf]
  %v1740 = vld [vmem:[%s1738 + $0x4] sm:$0xf]
  %v1741 = vld [vmem:[%s1738 + $0x8] sm:$0xf]
  %v1742 = vld [vmem:[%s1738 + $0xc] sm:$0xf]
  %v1747 = vunpack.c.l.b16 %v1739
  %v1748 = vunpack.c.l.b16 %v1740
  %v1749 = vunpack.c.l.b16 %v1741
  %v1750 = vunpack.c.l.b16 %v1742
  %v1751 = vpack.c.b16 %v1748, %v1747
  %v1752 = vpack.c.b16 %v1750, %v1749
  %v1756 = vsel %vm1358, %v1737, 0
  %1758 = vmatprep.subr.bf16.mxu0 0
  %1759 = vmatpush1.bf16.msra.mxu0 %v1751
  %1760 = vmatprep.subr.bf16.mxu0 0
  %1761 = vmatpush1.bf16.msra.mxu0 %v1752
  %1762 = vmatprep.subr.bf16.mxu0 0
  %1763 = vmatpush1.bf16.msra.mxu0 0
  %1764 = vmatprep.subr.bf16.mxu0 0
  %1765 = vmatpush1.bf16.msra.mxu0 0
  %1766 = vmatprep.subr.bf16.mxu0 0
  %1767 = vmatpush1.bf16.msra.mxu0 0
  %1768 = vmatprep.subr.bf16.mxu0 0
  %1769 = vmatpush1.bf16.msra.mxu0 0
  %1770 = vmatprep.subr.bf16.mxu0 0
  %1771 = vmatpush1.bf16.msra.mxu0 0
  %1772 = vmatprep.subr.bf16.mxu0 0
  %1773 = vmatpush1.bf16.msra.mxu0 0
  %1774 = vmatprep.subr.bf16.mxu0 0
  %1775 = vmatpush1.bf16.msra.mxu0 0
  %1776 = vmatprep.subr.bf16.mxu0 0
  %1777 = vmatpush1.bf16.msra.mxu0 0
  %1778 = vmatprep.subr.bf16.mxu0 0
  %1779 = vmatpush1.bf16.msra.mxu0 0
  %1780 = vmatprep.subr.bf16.mxu0 0
  %1781 = vmatpush1.bf16.msra.mxu0 0
  %1782 = vmatprep.subr.bf16.mxu0 0
  %1783 = vmatpush1.bf16.msra.mxu0 0
  %1784 = vmatprep.subr.bf16.mxu0 0
  %1785 = vmatpush1.bf16.msra.mxu0 0
  %1786 = vmatprep.subr.bf16.mxu0 0
  %1787 = vmatpush1.bf16.msra.mxu0 0
  %1788 = vmatprep.subr.bf16.mxu0 0
  %1789 = vmatpush1.bf16.msra.mxu0 0
  %1790 = vmatprep.mubr.bf16.mxu0 0
  %1791 = vmatmul.mubr.bf16.gmra.mrb[0].mxu0 %v1756
  %v1792 = vpop.f32.mrb[0].mxu0
  %v1793 = vadd.f32 0.0, %v1792
  %v1794 = vpop.f32.mrb[0].mxu0
  %v1795 = vpop.f32.mrb[0].mxu0
  %v1796 = vpop.f32.mrb[0].mxu0
  %1797 = vdwg.mxu0
  %v1798 = vadd.f32 %v1735, %v1793
  %v1799 = vld [vmem:[#allocation2 + $0xe] sm:$0x3]
  %v1800 = vpack.c.bf16 %v1799, %v1799
  %s1801 = scalar_lea.vmem %s4, 112
  %v1802 = vld [vmem:[%s1801] sm:$0xf]
  %v1803 = vld [vmem:[%s1801 + $0x4] sm:$0xf]
  %v1804 = vld [vmem:[%s1801 + $0x8] sm:$0xf]
  %v1805 = vld [vmem:[%s1801 + $0xc] sm:$0xf]
  %v1810 = vunpack.c.l.b16 %v1802
  %v1811 = vunpack.c.l.b16 %v1803
  %v1812 = vunpack.c.l.b16 %v1804
  %v1813 = vunpack.c.l.b16 %v1805
  %v1814 = vpack.c.b16 %v1811, %v1810
  %v1815 = vpack.c.b16 %v1813, %v1812
  %v1819 = vsel %vm1358, %v1800, 0
  %1821 = vmatprep.subr.bf16.mxu0 0
  %1822 = vmatpush1.bf16.msra.mxu0 %v1814
  %1823 = vmatprep.subr.bf16.mxu0 0
  %1824 = vmatpush1.bf16.msra.mxu0 %v1815
  %1825 = vmatprep.subr.bf16.mxu0 0
  %1826 = vmatpush1.bf16.msra.mxu0 0
  %1827 = vmatprep.subr.bf16.mxu0 0
  %1828 = vmatpush1.bf16.msra.mxu0 0
  %1829 = vmatprep.subr.bf16.mxu0 0
  %1830 = vmatpush1.bf16.msra.mxu0 0
  %1831 = vmatprep.subr.bf16.mxu0 0
  %1832 = vmatpush1.bf16.msra.mxu0 0
  %1833 = vmatprep.subr.bf16.mxu0 0
  %1834 = vmatpush1.bf16.msra.mxu0 0
  %1835 = vmatprep.subr.bf16.mxu0 0
  %1836 = vmatpush1.bf16.msra.mxu0 0
  %1837 = vmatprep.subr.bf16.mxu0 0
  %1838 = vmatpush1.bf16.msra.mxu0 0
  %1839 = vmatprep.subr.bf16.mxu0 0
  %1840 = vmatpush1.bf16.msra.mxu0 0
  %1841 = vmatprep.subr.bf16.mxu0 0
  %1842 = vmatpush1.bf16.msra.mxu0 0
  %1843 = vmatprep.subr.bf16.mxu0 0
  %1844 = vmatpush1.bf16.msra.mxu0 0
  %1845 = vmatprep.subr.bf16.mxu0 0
  %1846 = vmatpush1.bf16.msra.mxu0 0
  %1847 = vmatprep.subr.bf16.mxu0 0
  %1848 = vmatpush1.bf16.msra.mxu0 0
  %1849 = vmatprep.subr.bf16.mxu0 0
  %1850 = vmatpush1.bf16.msra.mxu0 0
  %1851 = vmatprep.subr.bf16.mxu0 0
  %1852 = vmatpush1.bf16.msra.mxu0 0
  %1853 = vmatprep.mubr.bf16.mxu0 0
  %1854 = vmatmul.mubr.bf16.gmra.mrb[0].mxu0 %v1819
  %v1855 = vpop.f32.mrb[0].mxu0
  %v1856 = vadd.f32 0.0, %v1855
  %v1857 = vpop.f32.mrb[0].mxu0
  %v1858 = vpop.f32.mrb[0].mxu0
  %v1859 = vpop.f32.mrb[0].mxu0
  %1860 = vdwg.mxu0
  %v1861 = vadd.f32 %v1798, %v1856
  %v1862 = vld [vmem:[%s5] sm:$0x1]
  %v1864 = vlaneseq
  %v1865 = vshrl.u32 %v1864, 7
  %v1866 = vsub.s32 0, %v1865
  %v1867 = vrot.slane %v1862, %v1866
  %v1869 = vadd.f32 %v1861, %v1867
  %v1870 = vmax.f32 %v1869, 0.0
  %v1871 = vpack.c.bf16 %v1870, %v1870
  %v1872 = vld [vmem:[%s6] sm:$0xf]
  %v1873 = vld [vmem:[%s6 + $0x4] sm:$0xf]
  %v1874 = vld [vmem:[%s6 + $0x8] sm:$0xf]
  %v1875 = vld [vmem:[%s6 + $0xc] sm:$0xf]
  %v1876 = vld [vmem:[%s6 + $0x10] sm:$0xf]
  %v1877 = vld [vmem:[%s6 + $0x14] sm:$0xf]
  %v1878 = vld [vmem:[%s6 + $0x18] sm:$0xf]
  %v1879 = vld [vmem:[%s6 + $0x1c] sm:$0xf]
  %v1880 = vld [vmem:[%s6 + $0x20] sm:$0xf]
  %v1881 = vld [vmem:[%s6 + $0x24] sm:$0xf]
  %v1882 = vld [vmem:[%s6 + $0x28] sm:$0xf]
  %v1883 = vld [vmem:[%s6 + $0x2c] sm:$0xf]
  %v1884 = vld [vmem:[%s6 + $0x30] sm:$0xf]
  %v1885 = vld [vmem:[%s6 + $0x34] sm:$0xf]
  %v1886 = vld [vmem:[%s6 + $0x38] sm:$0xf]
  %v1887 = vld [vmem:[%s6 + $0x3c] sm:$0xf]
  %v1888 = vld [vmem:[%s7] sm:$0x1]
  %v1890 = vlaneseq
  %v1891 = vshrl.u32 %v1890, 7
  %v1892 = vsub.s32 0, %v1891
  %v1893 = vrot.slane %v1888, %v1892
  %v1911 = vunpack.c.l.b16 %v1872
  %v1912 = vunpack.c.l.b16 %v1873
  %v1913 = vunpack.c.l.b16 %v1874
  %v1914 = vunpack.c.l.b16 %v1875
  %v1915 = vunpack.c.l.b16 %v1876
  %v1916 = vunpack.c.l.b16 %v1877
  %v1917 = vunpack.c.l.b16 %v1878
  %v1918 = vunpack.c.l.b16 %v1879
  %v1919 = vunpack.c.l.b16 %v1880
  %v1920 = vunpack.c.l.b16 %v1881
  %v1921 = vunpack.c.l.b16 %v1882
  %v1922 = vunpack.c.l.b16 %v1883
  %v1923 = vunpack.c.l.b16 %v1884
  %v1924 = vunpack.c.l.b16 %v1885
  %v1925 = vunpack.c.l.b16 %v1886
  %v1926 = vunpack.c.l.b16 %v1887
  %v1927 = vpack.c.b16 %v1912, %v1911
  %v1928 = vpack.c.b16 %v1914, %v1913
  %v1929 = vpack.c.b16 %v1916, %v1915
  %v1930 = vpack.c.b16 %v1918, %v1917
  %v1931 = vpack.c.b16 %v1920, %v1919
  %v1932 = vpack.c.b16 %v1922, %v1921
  %v1933 = vpack.c.b16 %v1924, %v1923
  %v1934 = vpack.c.b16 %v1926, %v1925
  %1943 = vmatprep.subr.bf16.mxu0 0
  %1944 = vmatpush1.bf16.msra.mxu0 %v1927
  %1945 = vmatprep.subr.bf16.mxu0 0
  %1946 = vmatpush1.bf16.msra.mxu0 %v1928
  %1947 = vmatprep.subr.bf16.mxu0 0
  %1948 = vmatpush1.bf16.msra.mxu0 %v1929
  %1949 = vmatprep.subr.bf16.mxu0 0
  %1950 = vmatpush1.bf16.msra.mxu0 %v1930
  %1951 = vmatprep.subr.bf16.mxu0 0
  %1952 = vmatpush1.bf16.msra.mxu0 %v1931
  %1953 = vmatprep.subr.bf16.mxu0 0
  %1954 = vmatpush1.bf16.msra.mxu0 %v1932
  %1955 = vmatprep.subr.bf16.mxu0 0
  %1956 = vmatpush1.bf16.msra.mxu0 %v1933
  %1957 = vmatprep.subr.bf16.mxu0 0
  %1958 = vmatpush1.bf16.msra.mxu0 %v1934
  %1959 = vmatprep.subr.bf16.mxu0 0
  %1960 = vmatpush1.bf16.msra.mxu0 0
  %1961 = vmatprep.subr.bf16.mxu0 0
  %1962 = vmatpush1.bf16.msra.mxu0 0
  %1963 = vmatprep.subr.bf16.mxu0 0
  %1964 = vmatpush1.bf16.msra.mxu0 0
  %1965 = vmatprep.subr.bf16.mxu0 0
  %1966 = vmatpush1.bf16.msra.mxu0 0
  %1967 = vmatprep.subr.bf16.mxu0 0
  %1968 = vmatpush1.bf16.msra.mxu0 0
  %1969 = vmatprep.subr.bf16.mxu0 0
  %1970 = vmatpush1.bf16.msra.mxu0 0
  %1971 = vmatprep.subr.bf16.mxu0 0
  %1972 = vmatpush1.bf16.msra.mxu0 0
  %1973 = vmatprep.subr.bf16.mxu0 0
  %1974 = vmatpush1.bf16.msra.mxu0 0
  %1975 = vmatprep.mubr.bf16.mxu0 0
  %1976 = vmatmul.mubr.bf16.gmra.mrb[0].mxu0 %v1871
  %v1977 = vpop.f32.mrb[0].mxu0
  %v1978 = vadd.f32 %v1893, %v1977
  %v1979 = vpop.f32.mrb[0].mxu0
  %v1980 = vpop.f32.mrb[0].mxu0
  %v1981 = vpop.f32.mrb[0].mxu0
  %1982 = vdwg.mxu0
  %v1983 = vmax.f32 %v1978, 0.0
  %v1984 = vld [vmem:[%s8] sm:$0x1]
  %v1986 = vlaneseq
  %v1987 = vshrl.u32 %v1986, 7
  %v1988 = vsub.s32 0, %v1987
  %v1989 = vrot.slane %v1984, %v1988
  %v1991 = vmul.f32 %v1983, %v1989
  %vm1992 = vcmask 517120
  %v1993 = vsel %vm1992, %v1991, 0.0
  %1994 = vadd.xlane.f32.xlu0 %v1993
  %v1995 = vpop.xlane.xlu0 %1994
  %v1996 = vld [vmem:[#allocation3] sm:$0x1]
  %v1998 = vlaneseq
  %v1999 = vshrl.u32 %v1998, 7
  %v2000 = vsub.s32 0, %v1999
  %v2001 = vrot.slane %v1996, %v2000
  %v2003 = vadd.f32 %v1995, %v2001
  %vm2004 = vcmask 1024
  %2005 = vst.msk [vmem:[%s10] sm:$0x3] %vm2004, %v2003
  // Predicated region
  $region42: #{_lambda_.3} parent=0 // pred_check
    _
  $region43: #{_lambda_.3} parent=0 // pred_check_branch
    %2007 = sbr.rel (0) target = $region45
  $region44: #{_lambda_.3} parent=0 // pred_region
    _
  $region45: #{_lambda_.3} parent=0 // pred_fallthru
    _
  // Predicated region
  $region46: #{_lambda_.3} parent=0 // pred_check
    _
  $region47: #{_lambda_.3} parent=0 // pred_check_branch
    %2009 = sbr.rel (0) target = $region49
  $region48: #{_lambda_.3} parent=0 // pred_region
    _
  $region49: #{_lambda_.3} parent=0 // pred_fallthru
    _

</llo_original>
